<compile_context>
chip_gen: v7x
topology: tpu7x:2x2x1
jax: 0.10.0
libtpu: 0.0.40
codegen_flags: <defaults>
</compile_context>

<pallas_src>
import functools

import jax
import jax.numpy as jnp
from jax import lax
from jax.experimental import pallas as pl
from jax.experimental.pallas import tpu as pltpu

D_MODEL = 32
N_HEADS = 2
D_HEAD = D_MODEL // N_HEADS
D_FF = 64
EPS = 1e-5
NEG_INF = -1e30


# ------------------------------------------------------------ kernel body ---

def _transformer_kernel(x_ref, z_ref, w_ref, o_ref, *, moff, voff):
    f32 = jnp.float32

    def W(name):                         # matrix block, lane offset 0
        r, n, c = moff[name]
        return w_ref[r:r + n, 0:c]

    def V(name):                         # [1, c] vector row
        r, c = voff[name]
        return w_ref[r:r + 1, 0:c]

    hmasks = [V("hm%d" % h) for h in range(N_HEADS)]   # 0/1 lane masks

    def attention(xq, xkv, prefix, amask):
        # Three separate lane-0-aligned projections (scale folded into wq/bq).
        q = jnp.dot(xq, W(prefix + "wq"),
                    preferred_element_type=f32) + V(prefix + "bq")
        k = jnp.dot(xkv, W(prefix + "wk"),
                    preferred_element_type=f32) + V(prefix + "bk")
        v = jnp.dot(xkv, W(prefix + "wv"),
                    preferred_element_type=f32) + V(prefix + "bv")
        merged = None
        for hm in hmasks:
            # Head selection via lane mask (no lane-offset slice feeding MXU);
            # all batches in one dot, cross-batch blocks masked additively.
            s = lax.dot_general(q * hm, k, (((1,), (1,)), ((), ())),
                                preferred_element_type=f32) + amask
            m = jnp.max(s, axis=-1, keepdims=True)
            e = jnp.exp(s - m)
            p = e / jnp.sum(e, axis=-1, keepdims=True)        # exact softmax
            pv = jnp.dot(p, v, preferred_element_type=f32) * hm
            merged = pv if merged is None else merged + pv
        # Single merged-heads output projection.
        return jnp.dot(merged, W(prefix + "wo"),
                       preferred_element_type=f32) + V(prefix + "bo")

    def layernorm(x, gname, bname):
        mu = jnp.mean(x, axis=-1, keepdims=True)
        var = jnp.mean((x - mu) ** 2, axis=-1, keepdims=True)
        return (x - mu) * lax.rsqrt(var + EPS) * V(gname) + V(bname)

    def ffn(x, prefix):
        h = jnp.dot(x, W(prefix + "w1"),
                    preferred_element_type=f32) + V(prefix + "b1")
        h = jnp.maximum(h, 0.0)
        return jnp.dot(h, W(prefix + "w2"),
                       preferred_element_type=f32) + V(prefix + "b2")

    # ---------------- encoder layer (post-norm) ----------------
    x = x_ref[...]                                           # [B*Ss, D]
    x = layernorm(x + attention(x, x, "e.sa.", W("mask_ss")),
                  "e.ln1_g", "e.ln1_b")
    c = layernorm(x + ffn(x, "e.ff."), "e.ln2_g", "e.ln2_b")

    # ---------------- decoder layer (post-norm) ----------------
    z = z_ref[...]                                           # [B*St, D]
    z = layernorm(z + attention(z, z, "d.sa.", W("mask_tt")),
                  "d.ln1_g", "d.ln1_b")
    z = layernorm(z + attention(z, c, "d.ca.", W("mask_ts")),
                  "d.ln2_g", "d.ln2_b")
    z = layernorm(z + ffn(z, "d.ff."), "d.ln3_g", "d.ln3_b")

    o_ref[...] = z.astype(o_ref.dtype)


# --------------------------------------------------------- param packing ---

def _pack_params(params, B, Ss, St):
    """Pack all weights/biases/masks into one [R, 64] f32 slab + offset maps."""
    scale = 1.0 / (D_HEAD ** 0.5)
    mats, vecs = [], []

    def add_attn(prefix, p):
        mats.extend([(prefix + "wq", p["wq"] * scale), (prefix + "wk", p["wk"]),
                     (prefix + "wv", p["wv"]), (prefix + "wo", p["wo"])])
        vecs.extend([(prefix + "bq", p["bq"] * scale), (prefix + "bk", p["bk"]),
                     (prefix + "bv", p["bv"]), (prefix + "bo", p["bo"])])

    def add_ffn(prefix, p):
        mats.extend([(prefix + "w1", p["w1"]), (prefix + "w2", p["w2"])])
        vecs.extend([(prefix + "b1", p["b1"]), (prefix + "b2", p["b2"])])

    def add_ln(side, p, name):
        vecs.extend([(side + name + "_g", p[name + "_g"]),
                     (side + name + "_b", p[name + "_b"])])

    pe, pd = params["encoder"], params["decoder"]
    add_attn("e.sa.", pe["self_attn"]); add_ffn("e.ff.", pe["ffn"])
    add_ln("e.", pe, "ln1"); add_ln("e.", pe, "ln2")
    add_attn("d.sa.", pd["self_attn"]); add_attn("d.ca.", pd["cross_attn"])
    add_ffn("d.ff.", pd["ffn"])
    add_ln("d.", pd, "ln1"); add_ln("d.", pd, "ln2"); add_ln("d.", pd, "ln3")

    def block_diag_bias(Sq, Sk):     # additive mask killing cross-batch attn
        rb = jnp.arange(B * Sq)[:, None] // Sq
        cb = jnp.arange(B * Sk)[None, :] // Sk
        return jnp.where(rb == cb, 0.0, NEG_INF).astype(jnp.float32)

    mats.extend([("mask_ss", block_diag_bias(Ss, Ss)),
                 ("mask_tt", block_diag_bias(St, St)),
                 ("mask_ts", block_diag_bias(St, Ss))])

    lane = jnp.arange(D_MODEL)
    for h in range(N_HEADS):
        vecs.append(("hm%d" % h, (lane // D_HEAD == h).astype(jnp.float32)))

    width = 1
    for _, a in mats:
        width = max(width, a.shape[1])
    for _, a in vecs:
        width = max(width, a.shape[0])

    blocks, moff, voff, row = [], {}, {}, 0
    for name, a in mats:
        a = jnp.asarray(a, jnp.float32)
        r, c = a.shape
        moff[name] = (row, r, c)
        pad_r = (-r) % 8                       # keep every block 8-row aligned
        blocks.append(jnp.pad(a, ((0, pad_r), (0, width - c))))
        row += r + pad_r
    for name, a in vecs:
        a = jnp.asarray(a, jnp.float32)
        c = a.shape[0]
        voff[name] = (row, c)
        blocks.append(jnp.pad(a.reshape(1, c), ((0, 0), (0, width - c))))
        row += 1
    pad_r = (-row) % 8
    if pad_r:
        blocks.append(jnp.zeros((pad_r, width), jnp.float32))
        row += pad_r
    slab = jnp.concatenate(blocks, axis=0)
    return slab, moff, voff


# ------------------------------------------------------------ JAX wrapper ---

def transformer_forward(x, z, params):
    """Mirrors Transformer.forward: context = encode(x); out = decode(ctx, z)."""
    B, Ss, D = x.shape
    St = z.shape[1]
    assert D == D_MODEL
    slab, moff, voff = _pack_params(params, B, Ss, St)

    kernel = functools.partial(_transformer_kernel, moff=moff, voff=voff)
    out2d = pl.pallas_call(
        kernel,
        out_shape=jax.ShapeDtypeStruct((B * St, D_MODEL), jnp.float32),
        compiler_params=pltpu.CompilerParams(
            vmem_limit_bytes=32 * 1024 * 1024),
    )(x.reshape(B * Ss, D), z.reshape(B * St, D), slab)
    return out2d.reshape(B, St, D_MODEL)


# ------------------------------------------------------------------- init ---
# NOTE: weights are stored in x @ W orientation ([in, out]); parameters
# imported from PyTorch ([out, in]) must be transposed first.

def _attn_params(key):
    ks = jax.random.split(key, 4)
    f = lambda k: 0.02 * jax.random.normal(k, (D_MODEL, D_MODEL), jnp.float32)
    return {"wq": f(ks[0]), "bq": jnp.zeros((D_MODEL,), jnp.float32),
            "wk": f(ks[1]), "bk": jnp.zeros((D_MODEL,), jnp.float32),
            "wv": f(ks[2]), "bv": jnp.zeros((D_MODEL,), jnp.float32),
            "wo": f(ks[3]), "bo": jnp.zeros((D_MODEL,), jnp.float32)}


def _ffn_params(key):
    k1, k2 = jax.random.split(key)
    return {"w1": 0.02 * jax.random.normal(k1, (D_MODEL, D_FF), jnp.float32),
            "b1": jnp.zeros((D_FF,), jnp.float32),
            "w2": 0.02 * jax.random.normal(k2, (D_FF, D_MODEL), jnp.float32),
            "b2": jnp.zeros((D_MODEL,), jnp.float32)}


def _ln_params(prefix):
    return {prefix + "_g": jnp.ones((D_MODEL,), jnp.float32),
            prefix + "_b": jnp.zeros((D_MODEL,), jnp.float32)}


def init_params(key):
    ke, kd = jax.random.split(key)
    ke1, ke2 = jax.random.split(ke)
    kd1, kd2, kd3 = jax.random.split(kd, 3)
    enc = {"self_attn": _attn_params(ke1), "ffn": _ffn_params(ke2)}
    enc.update(_ln_params("ln1")); enc.update(_ln_params("ln2"))
    dec = {"self_attn": _attn_params(kd1), "cross_attn": _attn_params(kd2),
           "ffn": _ffn_params(kd3)}
    dec.update(_ln_params("ln1")); dec.update(_ln_params("ln2"))
    dec.update(_ln_params("ln3"))
    return {"encoder": enc, "decoder": dec}


# ------------------------------------------------------------------- main ---

if __name__ == "__main__":
    key = jax.random.PRNGKey(0)
    kp, kx, kz = jax.random.split(key, 3)
    B, S_SRC, S_TGT = 2, 8, 8
    params = init_params(kp)
    x = jax.random.normal(kx, (B, S_SRC, D_MODEL), jnp.float32)  # encoder input
    z = jax.random.normal(kz, (B, S_TGT, D_MODEL), jnp.float32)  # decoder input

    out = jax.jit(transformer_forward)(x, z, params)
    jax.block_until_ready(out)
    assert out.shape == (B, S_TGT, D_MODEL)
    print("KERNEL_OK")
</pallas_src>

<mosaic_0001>
module attributes {stable_mosaic.version = 11 : i64} {
  func.func @_transformer_kernel(%arg0: memref<16x32xf32, #tpu.memory_space<vmem>>, %arg1: memref<16x32xf32, #tpu.memory_space<vmem>>, %arg2: memref<656x64xf32, #tpu.memory_space<vmem>>, %arg3: memref<16x32xf32, #tpu.memory_space<vmem>>) attributes {dimension_semantics = [], scalar_prefetch = 0 : i64, scratch_operands = 0 : i64, tpu.core_type = #tpu.core_type<tc>} {
    %c650 = arith.constant 650 : index
    %c0 = arith.constant 0 : index
    %0 = vector.load %arg2[%c650, %c0] : memref<656x64xf32, #tpu.memory_space<vmem>>, vector<1x32xf32>
    %c651 = arith.constant 651 : index
    %c0_0 = arith.constant 0 : index
    %1 = vector.load %arg2[%c651, %c0_0] : memref<656x64xf32, #tpu.memory_space<vmem>>, vector<1x32xf32>
    %c0_1 = arith.constant 0 : index
    %c0_2 = arith.constant 0 : index
    %2 = vector.load %arg0[%c0_1, %c0_2] : memref<16x32xf32, #tpu.memory_space<vmem>>, vector<16x32xf32>
    %c576 = arith.constant 576 : index
    %c0_3 = arith.constant 0 : index
    %3 = vector.load %arg2[%c576, %c0_3] : memref<656x64xf32, #tpu.memory_space<vmem>>, vector<16x16xf32>
    %c0_4 = arith.constant 0 : index
    %c0_5 = arith.constant 0 : index
    %4 = vector.load %arg2[%c0_4, %c0_5] : memref<656x64xf32, #tpu.memory_space<vmem>>, vector<32x32xf32>
    %cst = arith.constant dense<0.000000e+00> : vector<16x32xf32>
    %5 = tpu.matmul %2, %4, %cst {dimension_numbers = #tpu.dot_dimension_numbers<[1], [0], [0], [1], [0, 0, 1, 1], [], []>} : vector<16x32xf32>, vector<32x32xf32>, vector<16x32xf32> -> vector<16x32xf32>
    %c624 = arith.constant 624 : index
    %c0_6 = arith.constant 0 : index
    %6 = vector.load %arg2[%c624, %c0_6] : memref<656x64xf32, #tpu.memory_space<vmem>>, vector<1x32xf32>
    %7 = vector.broadcast %6 : vector<1x32xf32> to vector<16x32xf32>
    %8 = arith.addf %5, %7 : vector<16x32xf32>
    %c32 = arith.constant 32 : index
    %c0_7 = arith.constant 0 : index
    %9 = vector.load %arg2[%c32, %c0_7] : memref<656x64xf32, #tpu.memory_space<vmem>>, vector<32x32xf32>
    %cst_8 = arith.constant dense<0.000000e+00> : vector<16x32xf32>
    %10 = tpu.matmul %2, %9, %cst_8 {dimension_numbers = #tpu.dot_dimension_numbers<[1], [0], [0], [1], [0, 0, 1, 1], [], []>} : vector<16x32xf32>, vector<32x32xf32>, vector<16x32xf32> -> vector<16x32xf32>
    %c625 = arith.constant 625 : index
    %c0_9 = arith.constant 0 : index
    %11 = vector.load %arg2[%c625, %c0_9] : memref<656x64xf32, #tpu.memory_space<vmem>>, vector<1x32xf32>
    %12 = vector.broadcast %11 : vector<1x32xf32> to vector<16x32xf32>
    %13 = arith.addf %10, %12 : vector<16x32xf32>
    %c64 = arith.constant 64 : index
    %c0_10 = arith.constant 0 : index
    %14 = vector.load %arg2[%c64, %c0_10] : memref<656x64xf32, #tpu.memory_space<vmem>>, vector<32x32xf32>
    %cst_11 = arith.constant dense<0.000000e+00> : vector<16x32xf32>
    %15 = tpu.matmul %2, %14, %cst_11 {dimension_numbers = #tpu.dot_dimension_numbers<[1], [0], [0], [1], [0, 0, 1, 1], [], []>} : vector<16x32xf32>, vector<32x32xf32>, vector<16x32xf32> -> vector<16x32xf32>
    %c626 = arith.constant 626 : index
    %c0_12 = arith.constant 0 : index
    %16 = vector.load %arg2[%c626, %c0_12] : memref<656x64xf32, #tpu.memory_space<vmem>>, vector<1x32xf32>
    %17 = vector.broadcast %16 : vector<1x32xf32> to vector<16x32xf32>
    %18 = arith.addf %15, %17 : vector<16x32xf32>
    %19 = vector.broadcast %0 : vector<1x32xf32> to vector<16x32xf32>
    %20 = arith.mulf %8, %19 : vector<16x32xf32>
    %cst_13 = arith.constant dense<0.000000e+00> : vector<16x16xf32>
    %21 = tpu.matmul %20, %13, %cst_13 {dimension_numbers = #tpu.dot_dimension_numbers<[1], [1], [0], [0], [0, 0, 1, 0], [], []>} : vector<16x32xf32>, vector<16x32xf32>, vector<16x16xf32> -> vector<16x16xf32>
    %22 = arith.addf %21, %3 : vector<16x16xf32>
    %cst_14 = arith.constant dense<0xFF800000> : vector<16xf32>
    %23 = vector.multi_reduction <maximumf>, %22, %cst_14 [1] : vector<16x16xf32> to vector<16xf32>
    %24 = vector.shape_cast %23 : vector<16xf32> to vector<16x1xf32>
    %25 = vector.broadcast %24 : vector<16x1xf32> to vector<16x16xf32>
    %26 = arith.subf %22, %25 : vector<16x16xf32>
    %27 = math.exp %26 : vector<16x16xf32>
    %cst_15 = arith.constant dense<0.000000e+00> : vector<16xf32>
    %28 = vector.multi_reduction <add>, %27, %cst_15 [1] : vector<16x16xf32> to vector<16xf32>
    %29 = vector.shape_cast %28 : vector<16xf32> to vector<16x1xf32>
    %30 = vector.broadcast %29 : vector<16x1xf32> to vector<16x16xf32>
    %31 = arith.divf %27, %30 : vector<16x16xf32>
    %cst_16 = arith.constant dense<0.000000e+00> : vector<16x32xf32>
    %32 = tpu.matmul %31, %18, %cst_16 {dimension_numbers = #tpu.dot_dimension_numbers<[1], [0], [0], [1], [0, 0, 1, 1], [], []>} : vector<16x16xf32>, vector<16x32xf32>, vector<16x32xf32> -> vector<16x32xf32>
    %33 = vector.broadcast %0 : vector<1x32xf32> to vector<16x32xf32>
    %34 = arith.mulf %32, %33 : vector<16x32xf32>
    %35 = vector.broadcast %1 : vector<1x32xf32> to vector<16x32xf32>
    %36 = arith.mulf %8, %35 : vector<16x32xf32>
    %cst_17 = arith.constant dense<0.000000e+00> : vector<16x16xf32>
    %37 = tpu.matmul %36, %13, %cst_17 {dimension_numbers = #tpu.dot_dimension_numbers<[1], [1], [0], [0], [0, 0, 1, 0], [], []>} : vector<16x32xf32>, vector<16x32xf32>, vector<16x16xf32> -> vector<16x16xf32>
    %38 = arith.addf %37, %3 : vector<16x16xf32>
    %cst_18 = arith.constant dense<0xFF800000> : vector<16xf32>
    %39 = vector.multi_reduction <maximumf>, %38, %cst_18 [1] : vector<16x16xf32> to vector<16xf32>
    %40 = vector.shape_cast %39 : vector<16xf32> to vector<16x1xf32>
    %41 = vector.broadcast %40 : vector<16x1xf32> to vector<16x16xf32>
    %42 = arith.subf %38, %41 : vector<16x16xf32>
    %43 = math.exp %42 : vector<16x16xf32>
    %cst_19 = arith.constant dense<0.000000e+00> : vector<16xf32>
    %44 = vector.multi_reduction <add>, %43, %cst_19 [1] : vector<16x16xf32> to vector<16xf32>
    %45 = vector.shape_cast %44 : vector<16xf32> to vector<16x1xf32>
    %46 = vector.broadcast %45 : vector<16x1xf32> to vector<16x16xf32>
    %47 = arith.divf %43, %46 : vector<16x16xf32>
    %cst_20 = arith.constant dense<0.000000e+00> : vector<16x32xf32>
    %48 = tpu.matmul %47, %18, %cst_20 {dimension_numbers = #tpu.dot_dimension_numbers<[1], [0], [0], [1], [0, 0, 1, 1], [], []>} : vector<16x16xf32>, vector<16x32xf32>, vector<16x32xf32> -> vector<16x32xf32>
    %49 = vector.broadcast %1 : vector<1x32xf32> to vector<16x32xf32>
    %50 = arith.mulf %48, %49 : vector<16x32xf32>
    %51 = arith.addf %34, %50 : vector<16x32xf32>
    %c96 = arith.constant 96 : index
    %c0_21 = arith.constant 0 : index
    %52 = vector.load %arg2[%c96, %c0_21] : memref<656x64xf32, #tpu.memory_space<vmem>>, vector<32x32xf32>
    %cst_22 = arith.constant dense<0.000000e+00> : vector<16x32xf32>
    %53 = tpu.matmul %51, %52, %cst_22 {dimension_numbers = #tpu.dot_dimension_numbers<[1], [0], [0], [1], [0, 0, 1, 1], [], []>} : vector<16x32xf32>, vector<32x32xf32>, vector<16x32xf32> -> vector<16x32xf32>
    %c627 = arith.constant 627 : index
    %c0_23 = arith.constant 0 : index
    %54 = vector.load %arg2[%c627, %c0_23] : memref<656x64xf32, #tpu.memory_space<vmem>>, vector<1x32xf32>
    %55 = vector.broadcast %54 : vector<1x32xf32> to vector<16x32xf32>
    %56 = arith.addf %53, %55 : vector<16x32xf32>
    %57 = arith.addf %2, %56 : vector<16x32xf32>
    %cst_24 = arith.constant dense<0.000000e+00> : vector<16xf32>
    %58 = vector.multi_reduction <add>, %57, %cst_24 [1] : vector<16x32xf32> to vector<16xf32>
    %59 = vector.shape_cast %58 : vector<16xf32> to vector<16x1xf32>
    %cst_25 = arith.constant 3.200000e+01 : f32
    %60 = vector.broadcast %cst_25 : f32 to vector<16x1xf32>
    %61 = arith.divf %59, %60 : vector<16x1xf32>
    %62 = vector.broadcast %61 : vector<16x1xf32> to vector<16x32xf32>
    %63 = arith.subf %57, %62 : vector<16x32xf32>
    %64 = arith.mulf %63, %63 : vector<16x32xf32>
    %cst_26 = arith.constant dense<0.000000e+00> : vector<16xf32>
    %65 = vector.multi_reduction <add>, %64, %cst_26 [1] : vector<16x32xf32> to vector<16xf32>
    %66 = vector.shape_cast %65 : vector<16xf32> to vector<16x1xf32>
    %cst_27 = arith.constant 3.200000e+01 : f32
    %67 = vector.broadcast %cst_27 : f32 to vector<16x1xf32>
    %68 = arith.divf %66, %67 : vector<16x1xf32>
    %69 = vector.broadcast %61 : vector<16x1xf32> to vector<16x32xf32>
    %70 = arith.subf %57, %69 : vector<16x32xf32>
    %cst_28 = arith.constant 9.99999974E-6 : f32
    %71 = vector.broadcast %cst_28 : f32 to vector<16x1xf32>
    %72 = arith.addf %68, %71 : vector<16x1xf32>
    %73 = math.rsqrt %72 : vector<16x1xf32>
    %74 = vector.broadcast %73 : vector<16x1xf32> to vector<16x32xf32>
    %75 = arith.mulf %70, %74 : vector<16x32xf32>
    %c630 = arith.constant 630 : index
    %c0_29 = arith.constant 0 : index
    %76 = vector.load %arg2[%c630, %c0_29] : memref<656x64xf32, #tpu.memory_space<vmem>>, vector<1x32xf32>
    %77 = vector.broadcast %76 : vector<1x32xf32> to vector<16x32xf32>
    %78 = arith.mulf %75, %77 : vector<16x32xf32>
    %c631 = arith.constant 631 : index
    %c0_30 = arith.constant 0 : index
    %79 = vector.load %arg2[%c631, %c0_30] : memref<656x64xf32, #tpu.memory_space<vmem>>, vector<1x32xf32>
    %80 = vector.broadcast %79 : vector<1x32xf32> to vector<16x32xf32>
    %81 = arith.addf %78, %80 : vector<16x32xf32>
    %c128 = arith.constant 128 : index
    %c0_31 = arith.constant 0 : index
    %82 = vector.load %arg2[%c128, %c0_31] : memref<656x64xf32, #tpu.memory_space<vmem>>, vector<32x64xf32>
    %cst_32 = arith.constant dense<0.000000e+00> : vector<16x64xf32>
    %83 = tpu.matmul %81, %82, %cst_32 {dimension_numbers = #tpu.dot_dimension_numbers<[1], [0], [0], [1], [0, 0, 1, 1], [], []>} : vector<16x32xf32>, vector<32x64xf32>, vector<16x64xf32> -> vector<16x64xf32>
    %c628 = arith.constant 628 : index
    %c0_33 = arith.constant 0 : index
    %84 = vector.load %arg2[%c628, %c0_33] : memref<656x64xf32, #tpu.memory_space<vmem>>, vector<1x64xf32>
    %85 = vector.broadcast %84 : vector<1x64xf32> to vector<16x64xf32>
    %86 = arith.addf %83, %85 : vector<16x64xf32>
    %cst_34 = arith.constant 0.000000e+00 : f32
    %87 = vector.broadcast %cst_34 : f32 to vector<16x64xf32>
    %88 = arith.maximumf %86, %87 : vector<16x64xf32>
    %c160 = arith.constant 160 : index
    %c0_35 = arith.constant 0 : index
    %89 = vector.load %arg2[%c160, %c0_35] : memref<656x64xf32, #tpu.memory_space<vmem>>, vector<64x32xf32>
    %cst_36 = arith.constant dense<0.000000e+00> : vector<16x32xf32>
    %90 = tpu.matmul %88, %89, %cst_36 {dimension_numbers = #tpu.dot_dimension_numbers<[1], [0], [0], [1], [0, 0, 1, 1], [], []>} : vector<16x64xf32>, vector<64x32xf32>, vector<16x32xf32> -> vector<16x32xf32>
    %c629 = arith.constant 629 : index
    %c0_37 = arith.constant 0 : index
    %91 = vector.load %arg2[%c629, %c0_37] : memref<656x64xf32, #tpu.memory_space<vmem>>, vector<1x32xf32>
    %92 = vector.broadcast %91 : vector<1x32xf32> to vector<16x32xf32>
    %93 = arith.addf %90, %92 : vector<16x32xf32>
    %94 = arith.addf %81, %93 : vector<16x32xf32>
    %cst_38 = arith.constant dense<0.000000e+00> : vector<16xf32>
    %95 = vector.multi_reduction <add>, %94, %cst_38 [1] : vector<16x32xf32> to vector<16xf32>
    %96 = vector.shape_cast %95 : vector<16xf32> to vector<16x1xf32>
    %cst_39 = arith.constant 3.200000e+01 : f32
    %97 = vector.broadcast %cst_39 : f32 to vector<16x1xf32>
    %98 = arith.divf %96, %97 : vector<16x1xf32>
    %99 = vector.broadcast %98 : vector<16x1xf32> to vector<16x32xf32>
    %100 = arith.subf %94, %99 : vector<16x32xf32>
    %101 = arith.mulf %100, %100 : vector<16x32xf32>
    %cst_40 = arith.constant dense<0.000000e+00> : vector<16xf32>
    %102 = vector.multi_reduction <add>, %101, %cst_40 [1] : vector<16x32xf32> to vector<16xf32>
    %103 = vector.shape_cast %102 : vector<16xf32> to vector<16x1xf32>
    %cst_41 = arith.constant 3.200000e+01 : f32
    %104 = vector.broadcast %cst_41 : f32 to vector<16x1xf32>
    %105 = arith.divf %103, %104 : vector<16x1xf32>
    %106 = vector.broadcast %98 : vector<16x1xf32> to vector<16x32xf32>
    %107 = arith.subf %94, %106 : vector<16x32xf32>
    %cst_42 = arith.constant 9.99999974E-6 : f32
    %108 = vector.broadcast %cst_42 : f32 to vector<16x1xf32>
    %109 = arith.addf %105, %108 : vector<16x1xf32>
    %110 = math.rsqrt %109 : vector<16x1xf32>
    %111 = vector.broadcast %110 : vector<16x1xf32> to vector<16x32xf32>
    %112 = arith.mulf %107, %111 : vector<16x32xf32>
    %c632 = arith.constant 632 : index
    %c0_43 = arith.constant 0 : index
    %113 = vector.load %arg2[%c632, %c0_43] : memref<656x64xf32, #tpu.memory_space<vmem>>, vector<1x32xf32>
    %114 = vector.broadcast %113 : vector<1x32xf32> to vector<16x32xf32>
    %115 = arith.mulf %112, %114 : vector<16x32xf32>
    %c633 = arith.constant 633 : index
    %c0_44 = arith.constant 0 : index
    %116 = vector.load %arg2[%c633, %c0_44] : memref<656x64xf32, #tpu.memory_space<vmem>>, vector<1x32xf32>
    %117 = vector.broadcast %116 : vector<1x32xf32> to vector<16x32xf32>
    %118 = arith.addf %115, %117 : vector<16x32xf32>
    %c0_45 = arith.constant 0 : index
    %c0_46 = arith.constant 0 : index
    %119 = vector.load %arg1[%c0_45, %c0_46] : memref<16x32xf32, #tpu.memory_space<vmem>>, vector<16x32xf32>
    %c592 = arith.constant 592 : index
    %c0_47 = arith.constant 0 : index
    %120 = vector.load %arg2[%c592, %c0_47] : memref<656x64xf32, #tpu.memory_space<vmem>>, vector<16x16xf32>
    %c224 = arith.constant 224 : index
    %c0_48 = arith.constant 0 : index
    %121 = vector.load %arg2[%c224, %c0_48] : memref<656x64xf32, #tpu.memory_space<vmem>>, vector<32x32xf32>
    %cst_49 = arith.constant dense<0.000000e+00> : vector<16x32xf32>
    %122 = tpu.matmul %119, %121, %cst_49 {dimension_numbers = #tpu.dot_dimension_numbers<[1], [0], [0], [1], [0, 0, 1, 1], [], []>} : vector<16x32xf32>, vector<32x32xf32>, vector<16x32xf32> -> vector<16x32xf32>
    %c634 = arith.constant 634 : index
    %c0_50 = arith.constant 0 : index
    %123 = vector.load %arg2[%c634, %c0_50] : memref<656x64xf32, #tpu.memory_space<vmem>>, vector<1x32xf32>
    %124 = vector.broadcast %123 : vector<1x32xf32> to vector<16x32xf32>
    %125 = arith.addf %122, %124 : vector<16x32xf32>
    %c256 = arith.constant 256 : index
    %c0_51 = arith.constant 0 : index
    %126 = vector.load %arg2[%c256, %c0_51] : memref<656x64xf32, #tpu.memory_space<vmem>>, vector<32x32xf32>
    %cst_52 = arith.constant dense<0.000000e+00> : vector<16x32xf32>
    %127 = tpu.matmul %119, %126, %cst_52 {dimension_numbers = #tpu.dot_dimension_numbers<[1], [0], [0], [1], [0, 0, 1, 1], [], []>} : vector<16x32xf32>, vector<32x32xf32>, vector<16x32xf32> -> vector<16x32xf32>
    %c635 = arith.constant 635 : index
    %c0_53 = arith.constant 0 : index
    %128 = vector.load %arg2[%c635, %c0_53] : memref<656x64xf32, #tpu.memory_space<vmem>>, vector<1x32xf32>
    %129 = vector.broadcast %128 : vector<1x32xf32> to vector<16x32xf32>
    %130 = arith.addf %127, %129 : vector<16x32xf32>
    %c288 = arith.constant 288 : index
    %c0_54 = arith.constant 0 : index
    %131 = vector.load %arg2[%c288, %c0_54] : memref<656x64xf32, #tpu.memory_space<vmem>>, vector<32x32xf32>
    %cst_55 = arith.constant dense<0.000000e+00> : vector<16x32xf32>
    %132 = tpu.matmul %119, %131, %cst_55 {dimension_numbers = #tpu.dot_dimension_numbers<[1], [0], [0], [1], [0, 0, 1, 1], [], []>} : vector<16x32xf32>, vector<32x32xf32>, vector<16x32xf32> -> vector<16x32xf32>
    %c636 = arith.constant 636 : index
    %c0_56 = arith.constant 0 : index
    %133 = vector.load %arg2[%c636, %c0_56] : memref<656x64xf32, #tpu.memory_space<vmem>>, vector<1x32xf32>
    %134 = vector.broadcast %133 : vector<1x32xf32> to vector<16x32xf32>
    %135 = arith.addf %132, %134 : vector<16x32xf32>
    %136 = vector.broadcast %0 : vector<1x32xf32> to vector<16x32xf32>
    %137 = arith.mulf %125, %136 : vector<16x32xf32>
    %cst_57 = arith.constant dense<0.000000e+00> : vector<16x16xf32>
    %138 = tpu.matmul %137, %130, %cst_57 {dimension_numbers = #tpu.dot_dimension_numbers<[1], [1], [0], [0], [0, 0, 1, 0], [], []>} : vector<16x32xf32>, vector<16x32xf32>, vector<16x16xf32> -> vector<16x16xf32>
    %139 = arith.addf %138, %120 : vector<16x16xf32>
    %cst_58 = arith.constant dense<0xFF800000> : vector<16xf32>
    %140 = vector.multi_reduction <maximumf>, %139, %cst_58 [1] : vector<16x16xf32> to vector<16xf32>
    %141 = vector.shape_cast %140 : vector<16xf32> to vector<16x1xf32>
    %142 = vector.broadcast %141 : vector<16x1xf32> to vector<16x16xf32>
    %143 = arith.subf %139, %142 : vector<16x16xf32>
    %144 = math.exp %143 : vector<16x16xf32>
    %cst_59 = arith.constant dense<0.000000e+00> : vector<16xf32>
    %145 = vector.multi_reduction <add>, %144, %cst_59 [1] : vector<16x16xf32> to vector<16xf32>
    %146 = vector.shape_cast %145 : vector<16xf32> to vector<16x1xf32>
    %147 = vector.broadcast %146 : vector<16x1xf32> to vector<16x16xf32>
    %148 = arith.divf %144, %147 : vector<16x16xf32>
    %cst_60 = arith.constant dense<0.000000e+00> : vector<16x32xf32>
    %149 = tpu.matmul %148, %135, %cst_60 {dimension_numbers = #tpu.dot_dimension_numbers<[1], [0], [0], [1], [0, 0, 1, 1], [], []>} : vector<16x16xf32>, vector<16x32xf32>, vector<16x32xf32> -> vector<16x32xf32>
    %150 = vector.broadcast %0 : vector<1x32xf32> to vector<16x32xf32>
    %151 = arith.mulf %149, %150 : vector<16x32xf32>
    %152 = vector.broadcast %1 : vector<1x32xf32> to vector<16x32xf32>
    %153 = arith.mulf %125, %152 : vector<16x32xf32>
    %cst_61 = arith.constant dense<0.000000e+00> : vector<16x16xf32>
    %154 = tpu.matmul %153, %130, %cst_61 {dimension_numbers = #tpu.dot_dimension_numbers<[1], [1], [0], [0], [0, 0, 1, 0], [], []>} : vector<16x32xf32>, vector<16x32xf32>, vector<16x16xf32> -> vector<16x16xf32>
    %155 = arith.addf %154, %120 : vector<16x16xf32>
    %cst_62 = arith.constant dense<0xFF800000> : vector<16xf32>
    %156 = vector.multi_reduction <maximumf>, %155, %cst_62 [1] : vector<16x16xf32> to vector<16xf32>
    %157 = vector.shape_cast %156 : vector<16xf32> to vector<16x1xf32>
    %158 = vector.broadcast %157 : vector<16x1xf32> to vector<16x16xf32>
    %159 = arith.subf %155, %158 : vector<16x16xf32>
    %160 = math.exp %159 : vector<16x16xf32>
    %cst_63 = arith.constant dense<0.000000e+00> : vector<16xf32>
    %161 = vector.multi_reduction <add>, %160, %cst_63 [1] : vector<16x16xf32> to vector<16xf32>
    %162 = vector.shape_cast %161 : vector<16xf32> to vector<16x1xf32>
    %163 = vector.broadcast %162 : vector<16x1xf32> to vector<16x16xf32>
    %164 = arith.divf %160, %163 : vector<16x16xf32>
    %cst_64 = arith.constant dense<0.000000e+00> : vector<16x32xf32>
    %165 = tpu.matmul %164, %135, %cst_64 {dimension_numbers = #tpu.dot_dimension_numbers<[1], [0], [0], [1], [0, 0, 1, 1], [], []>} : vector<16x16xf32>, vector<16x32xf32>, vector<16x32xf32> -> vector<16x32xf32>
    %166 = vector.broadcast %1 : vector<1x32xf32> to vector<16x32xf32>
    %167 = arith.mulf %165, %166 : vector<16x32xf32>
    %168 = arith.addf %151, %167 : vector<16x32xf32>
    %c320 = arith.constant 320 : index
    %c0_65 = arith.constant 0 : index
    %169 = vector.load %arg2[%c320, %c0_65] : memref<656x64xf32, #tpu.memory_space<vmem>>, vector<32x32xf32>
    %cst_66 = arith.constant dense<0.000000e+00> : vector<16x32xf32>
    %170 = tpu.matmul %168, %169, %cst_66 {dimension_numbers = #tpu.dot_dimension_numbers<[1], [0], [0], [1], [0, 0, 1, 1], [], []>} : vector<16x32xf32>, vector<32x32xf32>, vector<16x32xf32> -> vector<16x32xf32>
    %c637 = arith.constant 637 : index
    %c0_67 = arith.constant 0 : index
    %171 = vector.load %arg2[%c637, %c0_67] : memref<656x64xf32, #tpu.memory_space<vmem>>, vector<1x32xf32>
    %172 = vector.broadcast %171 : vector<1x32xf32> to vector<16x32xf32>
    %173 = arith.addf %170, %172 : vector<16x32xf32>
    %174 = arith.addf %119, %173 : vector<16x32xf32>
    %cst_68 = arith.constant dense<0.000000e+00> : vector<16xf32>
    %175 = vector.multi_reduction <add>, %174, %cst_68 [1] : vector<16x32xf32> to vector<16xf32>
    %176 = vector.shape_cast %175 : vector<16xf32> to vector<16x1xf32>
    %cst_69 = arith.constant 3.200000e+01 : f32
    %177 = vector.broadcast %cst_69 : f32 to vector<16x1xf32>
    %178 = arith.divf %176, %177 : vector<16x1xf32>
    %179 = vector.broadcast %178 : vector<16x1xf32> to vector<16x32xf32>
    %180 = arith.subf %174, %179 : vector<16x32xf32>
    %181 = arith.mulf %180, %180 : vector<16x32xf32>
    %cst_70 = arith.constant dense<0.000000e+00> : vector<16xf32>
    %182 = vector.multi_reduction <add>, %181, %cst_70 [1] : vector<16x32xf32> to vector<16xf32>
    %183 = vector.shape_cast %182 : vector<16xf32> to vector<16x1xf32>
    %cst_71 = arith.constant 3.200000e+01 : f32
    %184 = vector.broadcast %cst_71 : f32 to vector<16x1xf32>
    %185 = arith.divf %183, %184 : vector<16x1xf32>
    %186 = vector.broadcast %178 : vector<16x1xf32> to vector<16x32xf32>
    %187 = arith.subf %174, %186 : vector<16x32xf32>
    %cst_72 = arith.constant 9.99999974E-6 : f32
    %188 = vector.broadcast %cst_72 : f32 to vector<16x1xf32>
    %189 = arith.addf %185, %188 : vector<16x1xf32>
    %190 = math.rsqrt %189 : vector<16x1xf32>
    %191 = vector.broadcast %190 : vector<16x1xf32> to vector<16x32xf32>
    %192 = arith.mulf %187, %191 : vector<16x32xf32>
    %c644 = arith.constant 644 : index
    %c0_73 = arith.constant 0 : index
    %193 = vector.load %arg2[%c644, %c0_73] : memref<656x64xf32, #tpu.memory_space<vmem>>, vector<1x32xf32>
    %194 = vector.broadcast %193 : vector<1x32xf32> to vector<16x32xf32>
    %195 = arith.mulf %192, %194 : vector<16x32xf32>
    %c645 = arith.constant 645 : index
    %c0_74 = arith.constant 0 : index
    %196 = vector.load %arg2[%c645, %c0_74] : memref<656x64xf32, #tpu.memory_space<vmem>>, vector<1x32xf32>
    %197 = vector.broadcast %196 : vector<1x32xf32> to vector<16x32xf32>
    %198 = arith.addf %195, %197 : vector<16x32xf32>
    %c608 = arith.constant 608 : index
    %c0_75 = arith.constant 0 : index
    %199 = vector.load %arg2[%c608, %c0_75] : memref<656x64xf32, #tpu.memory_space<vmem>>, vector<16x16xf32>
    %c352 = arith.constant 352 : index
    %c0_76 = arith.constant 0 : index
    %200 = vector.load %arg2[%c352, %c0_76] : memref<656x64xf32, #tpu.memory_space<vmem>>, vector<32x32xf32>
    %cst_77 = arith.constant dense<0.000000e+00> : vector<16x32xf32>
    %201 = tpu.matmul %198, %200, %cst_77 {dimension_numbers = #tpu.dot_dimension_numbers<[1], [0], [0], [1], [0, 0, 1, 1], [], []>} : vector<16x32xf32>, vector<32x32xf32>, vector<16x32xf32> -> vector<16x32xf32>
    %c638 = arith.constant 638 : index
    %c0_78 = arith.constant 0 : index
    %202 = vector.load %arg2[%c638, %c0_78] : memref<656x64xf32, #tpu.memory_space<vmem>>, vector<1x32xf32>
    %203 = vector.broadcast %202 : vector<1x32xf32> to vector<16x32xf32>
    %204 = arith.addf %201, %203 : vector<16x32xf32>
    %c384 = arith.constant 384 : index
    %c0_79 = arith.constant 0 : index
    %205 = vector.load %arg2[%c384, %c0_79] : memref<656x64xf32, #tpu.memory_space<vmem>>, vector<32x32xf32>
    %cst_80 = arith.constant dense<0.000000e+00> : vector<16x32xf32>
    %206 = tpu.matmul %118, %205, %cst_80 {dimension_numbers = #tpu.dot_dimension_numbers<[1], [0], [0], [1], [0, 0, 1, 1], [], []>} : vector<16x32xf32>, vector<32x32xf32>, vector<16x32xf32> -> vector<16x32xf32>
    %c639 = arith.constant 639 : index
    %c0_81 = arith.constant 0 : index
    %207 = vector.load %arg2[%c639, %c0_81] : memref<656x64xf32, #tpu.memory_space<vmem>>, vector<1x32xf32>
    %208 = vector.broadcast %207 : vector<1x32xf32> to vector<16x32xf32>
    %209 = arith.addf %206, %208 : vector<16x32xf32>
    %c416 = arith.constant 416 : index
    %c0_82 = arith.constant 0 : index
    %210 = vector.load %arg2[%c416, %c0_82] : memref<656x64xf32, #tpu.memory_space<vmem>>, vector<32x32xf32>
    %cst_83 = arith.constant dense<0.000000e+00> : vector<16x32xf32>
    %211 = tpu.matmul %118, %210, %cst_83 {dimension_numbers = #tpu.dot_dimension_numbers<[1], [0], [0], [1], [0, 0, 1, 1], [], []>} : vector<16x32xf32>, vector<32x32xf32>, vector<16x32xf32> -> vector<16x32xf32>
    %c640 = arith.constant 640 : index
    %c0_84 = arith.constant 0 : index
    %212 = vector.load %arg2[%c640, %c0_84] : memref<656x64xf32, #tpu.memory_space<vmem>>, vector<1x32xf32>
    %213 = vector.broadcast %212 : vector<1x32xf32> to vector<16x32xf32>
    %214 = arith.addf %211, %213 : vector<16x32xf32>
    %215 = vector.broadcast %0 : vector<1x32xf32> to vector<16x32xf32>
    %216 = arith.mulf %204, %215 : vector<16x32xf32>
    %cst_85 = arith.constant dense<0.000000e+00> : vector<16x16xf32>
    %217 = tpu.matmul %216, %209, %cst_85 {dimension_numbers = #tpu.dot_dimension_numbers<[1], [1], [0], [0], [0, 0, 1, 0], [], []>} : vector<16x32xf32>, vector<16x32xf32>, vector<16x16xf32> -> vector<16x16xf32>
    %218 = arith.addf %217, %199 : vector<16x16xf32>
    %cst_86 = arith.constant dense<0xFF800000> : vector<16xf32>
    %219 = vector.multi_reduction <maximumf>, %218, %cst_86 [1] : vector<16x16xf32> to vector<16xf32>
    %220 = vector.shape_cast %219 : vector<16xf32> to vector<16x1xf32>
    %221 = vector.broadcast %220 : vector<16x1xf32> to vector<16x16xf32>
    %222 = arith.subf %218, %221 : vector<16x16xf32>
    %223 = math.exp %222 : vector<16x16xf32>
    %cst_87 = arith.constant dense<0.000000e+00> : vector<16xf32>
    %224 = vector.multi_reduction <add>, %223, %cst_87 [1] : vector<16x16xf32> to vector<16xf32>
    %225 = vector.shape_cast %224 : vector<16xf32> to vector<16x1xf32>
    %226 = vector.broadcast %225 : vector<16x1xf32> to vector<16x16xf32>
    %227 = arith.divf %223, %226 : vector<16x16xf32>
    %cst_88 = arith.constant dense<0.000000e+00> : vector<16x32xf32>
    %228 = tpu.matmul %227, %214, %cst_88 {dimension_numbers = #tpu.dot_dimension_numbers<[1], [0], [0], [1], [0, 0, 1, 1], [], []>} : vector<16x16xf32>, vector<16x32xf32>, vector<16x32xf32> -> vector<16x32xf32>
    %229 = vector.broadcast %0 : vector<1x32xf32> to vector<16x32xf32>
    %230 = arith.mulf %228, %229 : vector<16x32xf32>
    %231 = vector.broadcast %1 : vector<1x32xf32> to vector<16x32xf32>
    %232 = arith.mulf %204, %231 : vector<16x32xf32>
    %cst_89 = arith.constant dense<0.000000e+00> : vector<16x16xf32>
    %233 = tpu.matmul %232, %209, %cst_89 {dimension_numbers = #tpu.dot_dimension_numbers<[1], [1], [0], [0], [0, 0, 1, 0], [], []>} : vector<16x32xf32>, vector<16x32xf32>, vector<16x16xf32> -> vector<16x16xf32>
    %234 = arith.addf %233, %199 : vector<16x16xf32>
    %cst_90 = arith.constant dense<0xFF800000> : vector<16xf32>
    %235 = vector.multi_reduction <maximumf>, %234, %cst_90 [1] : vector<16x16xf32> to vector<16xf32>
    %236 = vector.shape_cast %235 : vector<16xf32> to vector<16x1xf32>
    %237 = vector.broadcast %236 : vector<16x1xf32> to vector<16x16xf32>
    %238 = arith.subf %234, %237 : vector<16x16xf32>
    %239 = math.exp %238 : vector<16x16xf32>
    %cst_91 = arith.constant dense<0.000000e+00> : vector<16xf32>
    %240 = vector.multi_reduction <add>, %239, %cst_91 [1] : vector<16x16xf32> to vector<16xf32>
    %241 = vector.shape_cast %240 : vector<16xf32> to vector<16x1xf32>
    %242 = vector.broadcast %241 : vector<16x1xf32> to vector<16x16xf32>
    %243 = arith.divf %239, %242 : vector<16x16xf32>
    %cst_92 = arith.constant dense<0.000000e+00> : vector<16x32xf32>
    %244 = tpu.matmul %243, %214, %cst_92 {dimension_numbers = #tpu.dot_dimension_numbers<[1], [0], [0], [1], [0, 0, 1, 1], [], []>} : vector<16x16xf32>, vector<16x32xf32>, vector<16x32xf32> -> vector<16x32xf32>
    %245 = vector.broadcast %1 : vector<1x32xf32> to vector<16x32xf32>
    %246 = arith.mulf %244, %245 : vector<16x32xf32>
    %247 = arith.addf %230, %246 : vector<16x32xf32>
    %c448 = arith.constant 448 : index
    %c0_93 = arith.constant 0 : index
    %248 = vector.load %arg2[%c448, %c0_93] : memref<656x64xf32, #tpu.memory_space<vmem>>, vector<32x32xf32>
    %cst_94 = arith.constant dense<0.000000e+00> : vector<16x32xf32>
    %249 = tpu.matmul %247, %248, %cst_94 {dimension_numbers = #tpu.dot_dimension_numbers<[1], [0], [0], [1], [0, 0, 1, 1], [], []>} : vector<16x32xf32>, vector<32x32xf32>, vector<16x32xf32> -> vector<16x32xf32>
    %c641 = arith.constant 641 : index
    %c0_95 = arith.constant 0 : index
    %250 = vector.load %arg2[%c641, %c0_95] : memref<656x64xf32, #tpu.memory_space<vmem>>, vector<1x32xf32>
    %251 = vector.broadcast %250 : vector<1x32xf32> to vector<16x32xf32>
    %252 = arith.addf %249, %251 : vector<16x32xf32>
    %253 = arith.addf %198, %252 : vector<16x32xf32>
    %cst_96 = arith.constant dense<0.000000e+00> : vector<16xf32>
    %254 = vector.multi_reduction <add>, %253, %cst_96 [1] : vector<16x32xf32> to vector<16xf32>
    %255 = vector.shape_cast %254 : vector<16xf32> to vector<16x1xf32>
    %cst_97 = arith.constant 3.200000e+01 : f32
    %256 = vector.broadcast %cst_97 : f32 to vector<16x1xf32>
    %257 = arith.divf %255, %256 : vector<16x1xf32>
    %258 = vector.broadcast %257 : vector<16x1xf32> to vector<16x32xf32>
    %259 = arith.subf %253, %258 : vector<16x32xf32>
    %260 = arith.mulf %259, %259 : vector<16x32xf32>
    %cst_98 = arith.constant dense<0.000000e+00> : vector<16xf32>
    %261 = vector.multi_reduction <add>, %260, %cst_98 [1] : vector<16x32xf32> to vector<16xf32>
    %262 = vector.shape_cast %261 : vector<16xf32> to vector<16x1xf32>
    %cst_99 = arith.constant 3.200000e+01 : f32
    %263 = vector.broadcast %cst_99 : f32 to vector<16x1xf32>
    %264 = arith.divf %262, %263 : vector<16x1xf32>
    %265 = vector.broadcast %257 : vector<16x1xf32> to vector<16x32xf32>
    %266 = arith.subf %253, %265 : vector<16x32xf32>
    %cst_100 = arith.constant 9.99999974E-6 : f32
    %267 = vector.broadcast %cst_100 : f32 to vector<16x1xf32>
    %268 = arith.addf %264, %267 : vector<16x1xf32>
    %269 = math.rsqrt %268 : vector<16x1xf32>
    %270 = vector.broadcast %269 : vector<16x1xf32> to vector<16x32xf32>
    %271 = arith.mulf %266, %270 : vector<16x32xf32>
    %c646 = arith.constant 646 : index
    %c0_101 = arith.constant 0 : index
    %272 = vector.load %arg2[%c646, %c0_101] : memref<656x64xf32, #tpu.memory_space<vmem>>, vector<1x32xf32>
    %273 = vector.broadcast %272 : vector<1x32xf32> to vector<16x32xf32>
    %274 = arith.mulf %271, %273 : vector<16x32xf32>
    %c647 = arith.constant 647 : index
    %c0_102 = arith.constant 0 : index
    %275 = vector.load %arg2[%c647, %c0_102] : memref<656x64xf32, #tpu.memory_space<vmem>>, vector<1x32xf32>
    %276 = vector.broadcast %275 : vector<1x32xf32> to vector<16x32xf32>
    %277 = arith.addf %274, %276 : vector<16x32xf32>
    %c480 = arith.constant 480 : index
    %c0_103 = arith.constant 0 : index
    %278 = vector.load %arg2[%c480, %c0_103] : memref<656x64xf32, #tpu.memory_space<vmem>>, vector<32x64xf32>
    %cst_104 = arith.constant dense<0.000000e+00> : vector<16x64xf32>
    %279 = tpu.matmul %277, %278, %cst_104 {dimension_numbers = #tpu.dot_dimension_numbers<[1], [0], [0], [1], [0, 0, 1, 1], [], []>} : vector<16x32xf32>, vector<32x64xf32>, vector<16x64xf32> -> vector<16x64xf32>
    %c642 = arith.constant 642 : index
    %c0_105 = arith.constant 0 : index
    %280 = vector.load %arg2[%c642, %c0_105] : memref<656x64xf32, #tpu.memory_space<vmem>>, vector<1x64xf32>
    %281 = vector.broadcast %280 : vector<1x64xf32> to vector<16x64xf32>
    %282 = arith.addf %279, %281 : vector<16x64xf32>
    %cst_106 = arith.constant 0.000000e+00 : f32
    %283 = vector.broadcast %cst_106 : f32 to vector<16x64xf32>
    %284 = arith.maximumf %282, %283 : vector<16x64xf32>
    %c512 = arith.constant 512 : index
    %c0_107 = arith.constant 0 : index
    %285 = vector.load %arg2[%c512, %c0_107] : memref<656x64xf32, #tpu.memory_space<vmem>>, vector<64x32xf32>
    %cst_108 = arith.constant dense<0.000000e+00> : vector<16x32xf32>
    %286 = tpu.matmul %284, %285, %cst_108 {dimension_numbers = #tpu.dot_dimension_numbers<[1], [0], [0], [1], [0, 0, 1, 1], [], []>} : vector<16x64xf32>, vector<64x32xf32>, vector<16x32xf32> -> vector<16x32xf32>
    %c643 = arith.constant 643 : index
    %c0_109 = arith.constant 0 : index
    %287 = vector.load %arg2[%c643, %c0_109] : memref<656x64xf32, #tpu.memory_space<vmem>>, vector<1x32xf32>
    %288 = vector.broadcast %287 : vector<1x32xf32> to vector<16x32xf32>
    %289 = arith.addf %286, %288 : vector<16x32xf32>
    %290 = arith.addf %277, %289 : vector<16x32xf32>
    %cst_110 = arith.constant dense<0.000000e+00> : vector<16xf32>
    %291 = vector.multi_reduction <add>, %290, %cst_110 [1] : vector<16x32xf32> to vector<16xf32>
    %292 = vector.shape_cast %291 : vector<16xf32> to vector<16x1xf32>
    %cst_111 = arith.constant 3.200000e+01 : f32
    %293 = vector.broadcast %cst_111 : f32 to vector<16x1xf32>
    %294 = arith.divf %292, %293 : vector<16x1xf32>
    %295 = vector.broadcast %294 : vector<16x1xf32> to vector<16x32xf32>
    %296 = arith.subf %290, %295 : vector<16x32xf32>
    %297 = arith.mulf %296, %296 : vector<16x32xf32>
    %cst_112 = arith.constant dense<0.000000e+00> : vector<16xf32>
    %298 = vector.multi_reduction <add>, %297, %cst_112 [1] : vector<16x32xf32> to vector<16xf32>
    %299 = vector.shape_cast %298 : vector<16xf32> to vector<16x1xf32>
    %cst_113 = arith.constant 3.200000e+01 : f32
    %300 = vector.broadcast %cst_113 : f32 to vector<16x1xf32>
    %301 = arith.divf %299, %300 : vector<16x1xf32>
    %302 = vector.broadcast %294 : vector<16x1xf32> to vector<16x32xf32>
    %303 = arith.subf %290, %302 : vector<16x32xf32>
    %cst_114 = arith.constant 9.99999974E-6 : f32
    %304 = vector.broadcast %cst_114 : f32 to vector<16x1xf32>
    %305 = arith.addf %301, %304 : vector<16x1xf32>
    %306 = math.rsqrt %305 : vector<16x1xf32>
    %307 = vector.broadcast %306 : vector<16x1xf32> to vector<16x32xf32>
    %308 = arith.mulf %303, %307 : vector<16x32xf32>
    %c648 = arith.constant 648 : index
    %c0_115 = arith.constant 0 : index
    %309 = vector.load %arg2[%c648, %c0_115] : memref<656x64xf32, #tpu.memory_space<vmem>>, vector<1x32xf32>
    %310 = vector.broadcast %309 : vector<1x32xf32> to vector<16x32xf32>
    %311 = arith.mulf %308, %310 : vector<16x32xf32>
    %c649 = arith.constant 649 : index
    %c0_116 = arith.constant 0 : index
    %312 = vector.load %arg2[%c649, %c0_116] : memref<656x64xf32, #tpu.memory_space<vmem>>, vector<1x32xf32>
    %313 = vector.broadcast %312 : vector<1x32xf32> to vector<16x32xf32>
    %314 = arith.addf %311, %313 : vector<16x32xf32>
    %c0_117 = arith.constant 0 : index
    %c0_118 = arith.constant 0 : index
    %315 = vector.load %arg3[%c0_117, %c0_118] : memref<16x32xf32, #tpu.memory_space<vmem>>, vector<16x32xf32>
    tpu.vector_store %arg3[%c0_117, %c0_118], %314 {strides = array<i32>} : memref<16x32xf32, #tpu.memory_space<vmem>>, vector<16x32xf32>,
    return
  }
}

</mosaic_0001>

<llo_original>
// kernel: transformer_forward.1
$region0: #{transformer_forward.1}
  #allocation0 [shape = 'u32[]', space=smem, size = 0x4, offset = 0x4, fixed_abs, tag = 'smem constant byte address 0x4 - core index']
  #allocation1 [shape = 'u32[144,128]{1,0:T(1,128)}', space=vmem, size = 0x12000, scoped, tag = 'internal scratch']
  %s0 = inlined_call_operand.vmem [shape: f32[16,32], index: 0, kind: input, shape index: {}]
  %s1 = inlined_call_operand.vmem [shape: f32[16,32], index: 1, kind: input, shape index: {}]
  %s2 = inlined_call_operand.vmem [shape: f32[656,64], index: 2, kind: input, shape index: {}]
  %s3 = inlined_call_operand.hbm [shape: f32[16,32], index: 3, kind: output, shape index: {}]
  %s4 = sld [smem:[#allocation0]]
  $region22: #{transformer_forward.1} parent=0
    _
  %s6 = ssub.s32 1, %s4
  %s7 = scalar_select 0, %s6, %s4
  $region1: #{transformer_forward.1} parent=0
    #allocation2 [shape = 'u8[8192]{0}', space=vmem, size = 0x2000, scoped, tag = 'output window, operand 0, single buffered']
    #allocation3 [shape = 's32[1]{0}', space=sflag, size = 0x4, scoped, tag = 'scoped memory for transformer_forward.1']
    %8 = vsyncpa [#allocation3], 0
    // Predicated region
    $region2: #{transformer_forward.1} parent=1 // pred_check
      _
    $region3: #{transformer_forward.1} parent=1 // pred_check_branch
      %10 = sbr.rel (0) target = $region5
    $region4: #{transformer_forward.1} parent=1 // pred_region
      _
    $region5: #{transformer_forward.1} parent=1 // pred_fallthru
      _
    // Predicated region
    $region6: #{transformer_forward.1} parent=1 // pred_check
      _
    $region7: #{transformer_forward.1} parent=1 // pred_check_branch
      %12 = sbr.rel (0) target = $region9
    $region8: #{transformer_forward.1} parent=1 // pred_region
      _
    $region9: #{transformer_forward.1} parent=1 // pred_fallthru
      _
    // Predicated region
    $region10: #{transformer_forward.1} parent=1 // pred_check
      _
    $region11: #{transformer_forward.1} parent=1 // pred_check_branch
      %14 = sbr.rel (0) target = $region13
    $region12: #{transformer_forward.1} parent=1 // pred_region
      _
    $region13: #{transformer_forward.1} parent=1 // pred_fallthru
      _
    %v15 = vld [vmem:[%s2 + $0x28a] sm:$0x1]
    %v16 = vld [vmem:[%s2 + $0x28b] sm:$0x1]
    %v17 = vld [vmem:[%s0] sm:$0xff]
    %v18 = vld [vmem:[%s0 + $0x8] sm:$0xff]
    %v19 = vld [vmem:[%s2 + $0x240] sm:$0xff]
    %v20 = vld [vmem:[%s2 + $0x248] sm:$0xff]
    %v21 = vld [vmem:[%s2] sm:$0xff]
    %v22 = vld [vmem:[%s2 + $0x8] sm:$0xff]
    %v23 = vld [vmem:[%s2 + $0x10] sm:$0xff]
    %v24 = vld [vmem:[%s2 + $0x18] sm:$0xff]
    %v25 = vld [vmem:[%s2 + $0x270] sm:$0x1]
    %v26 = vlaneseq
    %v27 = vshrl.u32 %v26, 7
    %v28 = vsub.s32 0, %v27
    %v29 = vrot.slane %v25, %v28
    %vm30 = vcmask 261120
    %v32 = vsel %vm30, %v17, 0
    %v35 = vsel %vm30, %v18, 0
    %37 = vmatprep.subr.mxu0 0.0
    %38 = vmatpush1.msra.mxu0 %v21
    %39 = vmatprep.subr.mxu0 0.0
    %40 = vmatpush1.msra.mxu0 %v22
    %41 = vmatprep.subr.mxu0 0.0
    %42 = vmatpush1.msra.mxu0 %v23
    %43 = vmatprep.subr.mxu0 0.0
    %44 = vmatpush1.msra.mxu0 %v24
    %45 = vmatprep.subr.mxu0 0.0
    %46 = vmatpush1.msra.mxu0 0.0
    %47 = vmatprep.subr.mxu0 0.0
    %48 = vmatpush1.msra.mxu0 0.0
    %49 = vmatprep.subr.mxu0 0.0
    %50 = vmatpush1.msra.mxu0 0.0
    %51 = vmatprep.subr.mxu0 0.0
    %52 = vmatpush1.msra.mxu0 0.0
    %53 = vmatprep.subr.mxu0 0.0
    %54 = vmatpush1.msra.mxu0 0.0
    %55 = vmatprep.subr.mxu0 0.0
    %56 = vmatpush1.msra.mxu0 0.0
    %57 = vmatprep.subr.mxu0 0.0
    %58 = vmatpush1.msra.mxu0 0.0
    %59 = vmatprep.subr.mxu0 0.0
    %60 = vmatpush1.msra.mxu0 0.0
    %61 = vmatprep.subr.mxu0 0.0
    %62 = vmatpush1.msra.mxu0 0.0
    %63 = vmatprep.subr.mxu0 0.0
    %64 = vmatpush1.msra.mxu0 0.0
    %65 = vmatprep.subr.mxu0 0.0
    %66 = vmatpush1.msra.mxu0 0.0
    %67 = vmatprep.subr.mxu0 0.0
    %68 = vmatpush1.msra.mxu0 0.0
    %69 = vmatprep.subr.mxu0 0.0
    %70 = vmatpush1.msra.mxu0 0.0
    %71 = vmatprep.subr.mxu0 0.0
    %72 = vmatpush1.msra.mxu0 0.0
    %73 = vmatprep.subr.mxu0 0.0
    %74 = vmatpush1.msra.mxu0 0.0
    %75 = vmatprep.subr.mxu0 0.0
    %76 = vmatpush1.msra.mxu0 0.0
    %77 = vmatprep.subr.mxu0 0.0
    %78 = vmatpush1.msra.mxu0 0.0
    %79 = vmatprep.subr.mxu0 0.0
    %80 = vmatpush1.msra.mxu0 0.0
    %81 = vmatprep.subr.mxu0 0.0
    %82 = vmatpush1.msra.mxu0 0.0
    %83 = vmatprep.subr.mxu0 0.0
    %84 = vmatpush1.msra.mxu0 0.0
    %85 = vmatprep.subr.mxu0 0.0
    %86 = vmatpush1.msra.mxu0 0.0
    %87 = vmatprep.subr.mxu0 0.0
    %88 = vmatpush1.msra.mxu0 0.0
    %89 = vmatprep.subr.mxu0 0.0
    %90 = vmatpush1.msra.mxu0 0.0
    %91 = vmatprep.subr.mxu0 0.0
    %92 = vmatpush1.msra.mxu0 0.0
    %93 = vmatprep.subr.mxu0 0.0
    %94 = vmatpush1.msra.mxu0 0.0
    %95 = vmatprep.subr.mxu0 0.0
    %96 = vmatpush1.msra.mxu0 0.0
    %97 = vmatprep.subr.mxu0 0.0
    %98 = vmatpush1.msra.mxu0 0.0
    %99 = vmatprep.subr.mxu0 0.0
    %100 = vmatpush1.msra.mxu0 0.0
    %101 = vmatprep.mubr.f32.mxu0 0.0
    %102 = vmatmul.mubr.f32.gmra.mrb[0].mxu0 %v32
    %v103 = vpop.f32.mrb[0].mxu0
    %v104 = vadd.f32 %v29, %v103
    %v105 = vpop.f32.mrb[0].mxu0
    %106 = vmatprep.mubr.f32.mxu0 0.0
    %107 = vmatmul.mubr.f32.gmra.mrb[0].mxu0 %v35
    %v108 = vpop.f32.mrb[0].mxu0
    %v109 = vadd.f32 %v29, %v108
    %v110 = vpop.f32.mrb[0].mxu0
    %111 = vdwg.mxu0
    %v112 = vld [vmem:[%s2 + $0x20] sm:$0xff]
    %v113 = vld [vmem:[%s2 + $0x28] sm:$0xff]
    %v114 = vld [vmem:[%s2 + $0x30] sm:$0xff]
    %v115 = vld [vmem:[%s2 + $0x38] sm:$0xff]
    %v116 = vld [vmem:[%s2 + $0x271] sm:$0x1]
    %v117 = vlaneseq
    %v118 = vshrl.u32 %v117, 7
    %v119 = vsub.s32 0, %v118
    %v120 = vrot.slane %v116, %v119
    %121 = vmatprep.subr.mxu0 0.0
    %122 = vmatpush1.msra.mxu0 %v112
    %123 = vmatprep.subr.mxu0 0.0
    %124 = vmatpush1.msra.mxu0 %v113
    %125 = vmatprep.subr.mxu0 0.0
    %126 = vmatpush1.msra.mxu0 %v114
    %127 = vmatprep.subr.mxu0 0.0
    %128 = vmatpush1.msra.mxu0 %v115
    %129 = vmatprep.subr.mxu0 0.0
    %130 = vmatpush1.msra.mxu0 0.0
    %131 = vmatprep.subr.mxu0 0.0
    %132 = vmatpush1.msra.mxu0 0.0
    %133 = vmatprep.subr.mxu0 0.0
    %134 = vmatpush1.msra.mxu0 0.0
    %135 = vmatprep.subr.mxu0 0.0
    %136 = vmatpush1.msra.mxu0 0.0
    %137 = vmatprep.subr.mxu0 0.0
    %138 = vmatpush1.msra.mxu0 0.0
    %139 = vmatprep.subr.mxu0 0.0
    %140 = vmatpush1.msra.mxu0 0.0
    %141 = vmatprep.subr.mxu0 0.0
    %142 = vmatpush1.msra.mxu0 0.0
    %143 = vmatprep.subr.mxu0 0.0
    %144 = vmatpush1.msra.mxu0 0.0
    %145 = vmatprep.subr.mxu0 0.0
    %146 = vmatpush1.msra.mxu0 0.0
    %147 = vmatprep.subr.mxu0 0.0
    %148 = vmatpush1.msra.mxu0 0.0
    %149 = vmatprep.subr.mxu0 0.0
    %150 = vmatpush1.msra.mxu0 0.0
    %151 = vmatprep.subr.mxu0 0.0
    %152 = vmatpush1.msra.mxu0 0.0
    %153 = vmatprep.subr.mxu0 0.0
    %154 = vmatpush1.msra.mxu0 0.0
    %155 = vmatprep.subr.mxu0 0.0
    %156 = vmatpush1.msra.mxu0 0.0
    %157 = vmatprep.subr.mxu0 0.0
    %158 = vmatpush1.msra.mxu0 0.0
    %159 = vmatprep.subr.mxu0 0.0
    %160 = vmatpush1.msra.mxu0 0.0
    %161 = vmatprep.subr.mxu0 0.0
    %162 = vmatpush1.msra.mxu0 0.0
    %163 = vmatprep.subr.mxu0 0.0
    %164 = vmatpush1.msra.mxu0 0.0
    %165 = vmatprep.subr.mxu0 0.0
    %166 = vmatpush1.msra.mxu0 0.0
    %167 = vmatprep.subr.mxu0 0.0
    %168 = vmatpush1.msra.mxu0 0.0
    %169 = vmatprep.subr.mxu0 0.0
    %170 = vmatpush1.msra.mxu0 0.0
    %171 = vmatprep.subr.mxu0 0.0
    %172 = vmatpush1.msra.mxu0 0.0
    %173 = vmatprep.subr.mxu0 0.0
    %174 = vmatpush1.msra.mxu0 0.0
    %175 = vmatprep.subr.mxu0 0.0
    %176 = vmatpush1.msra.mxu0 0.0
    %177 = vmatprep.subr.mxu0 0.0
    %178 = vmatpush1.msra.mxu0 0.0
    %179 = vmatprep.subr.mxu0 0.0
    %180 = vmatpush1.msra.mxu0 0.0
    %181 = vmatprep.subr.mxu0 0.0
    %182 = vmatpush1.msra.mxu0 0.0
    %183 = vmatprep.subr.mxu0 0.0
    %184 = vmatpush1.msra.mxu0 0.0
    %185 = vmatprep.mubr.f32.mxu0 0.0
    %186 = vmatmul.mubr.f32.gmra.mrb[0].mxu0 %v32
    %v187 = vpop.f32.mrb[0].mxu0
    %v188 = vadd.f32 %v120, %v187
    %v189 = vpop.f32.mrb[0].mxu0
    %190 = vmatprep.mubr.f32.mxu0 0.0
    %191 = vmatmul.mubr.f32.gmra.mrb[0].mxu0 %v35
    %v192 = vpop.f32.mrb[0].mxu0
    %v193 = vadd.f32 %v120, %v192
    %v194 = vpop.f32.mrb[0].mxu0
    %195 = vdwg.mxu0
    %v196 = vld [vmem:[%s2 + $0x40] sm:$0xff]
    %v197 = vld [vmem:[%s2 + $0x48] sm:$0xff]
    %v198 = vld [vmem:[%s2 + $0x50] sm:$0xff]
    %v199 = vld [vmem:[%s2 + $0x58] sm:$0xff]
    %v200 = vld [vmem:[%s2 + $0x272] sm:$0x1]
    %v201 = vlaneseq
    %v202 = vshrl.u32 %v201, 7
    %v203 = vsub.s32 0, %v202
    %v204 = vrot.slane %v200, %v203
    %205 = vmatprep.subr.mxu0 0.0
    %206 = vmatpush1.msra.mxu0 %v196
    %207 = vmatprep.subr.mxu0 0.0
    %208 = vmatpush1.msra.mxu0 %v197
    %209 = vmatprep.subr.mxu0 0.0
    %210 = vmatpush1.msra.mxu0 %v198
    %211 = vmatprep.subr.mxu0 0.0
    %212 = vmatpush1.msra.mxu0 %v199
    %213 = vmatprep.subr.mxu0 0.0
    %214 = vmatpush1.msra.mxu0 0.0
    %215 = vmatprep.subr.mxu0 0.0
    %216 = vmatpush1.msra.mxu0 0.0
    %217 = vmatprep.subr.mxu0 0.0
    %218 = vmatpush1.msra.mxu0 0.0
    %219 = vmatprep.subr.mxu0 0.0
    %220 = vmatpush1.msra.mxu0 0.0
    %221 = vmatprep.subr.mxu0 0.0
    %222 = vmatpush1.msra.mxu0 0.0
    %223 = vmatprep.subr.mxu0 0.0
    %224 = vmatpush1.msra.mxu0 0.0
    %225 = vmatprep.subr.mxu0 0.0
    %226 = vmatpush1.msra.mxu0 0.0
    %227 = vmatprep.subr.mxu0 0.0
    %228 = vmatpush1.msra.mxu0 0.0
    %229 = vmatprep.subr.mxu0 0.0
    %230 = vmatpush1.msra.mxu0 0.0
    %231 = vmatprep.subr.mxu0 0.0
    %232 = vmatpush1.msra.mxu0 0.0
    %233 = vmatprep.subr.mxu0 0.0
    %234 = vmatpush1.msra.mxu0 0.0
    %235 = vmatprep.subr.mxu0 0.0
    %236 = vmatpush1.msra.mxu0 0.0
    %237 = vmatprep.subr.mxu0 0.0
    %238 = vmatpush1.msra.mxu0 0.0
    %239 = vmatprep.subr.mxu0 0.0
    %240 = vmatpush1.msra.mxu0 0.0
    %241 = vmatprep.subr.mxu0 0.0
    %242 = vmatpush1.msra.mxu0 0.0
    %243 = vmatprep.subr.mxu0 0.0
    %244 = vmatpush1.msra.mxu0 0.0
    %245 = vmatprep.subr.mxu0 0.0
    %246 = vmatpush1.msra.mxu0 0.0
    %247 = vmatprep.subr.mxu0 0.0
    %248 = vmatpush1.msra.mxu0 0.0
    %249 = vmatprep.subr.mxu0 0.0
    %250 = vmatpush1.msra.mxu0 0.0
    %251 = vmatprep.subr.mxu0 0.0
    %252 = vmatpush1.msra.mxu0 0.0
    %253 = vmatprep.subr.mxu0 0.0
    %254 = vmatpush1.msra.mxu0 0.0
    %255 = vmatprep.subr.mxu0 0.0
    %256 = vmatpush1.msra.mxu0 0.0
    %257 = vmatprep.subr.mxu0 0.0
    %258 = vmatpush1.msra.mxu0 0.0
    %259 = vmatprep.subr.mxu0 0.0
    %260 = vmatpush1.msra.mxu0 0.0
    %261 = vmatprep.subr.mxu0 0.0
    %262 = vmatpush1.msra.mxu0 0.0
    %263 = vmatprep.subr.mxu0 0.0
    %264 = vmatpush1.msra.mxu0 0.0
    %265 = vmatprep.subr.mxu0 0.0
    %266 = vmatpush1.msra.mxu0 0.0
    %267 = vmatprep.subr.mxu0 0.0
    %268 = vmatpush1.msra.mxu0 0.0
    %269 = vmatprep.mubr.f32.mxu0 0.0
    %270 = vmatmul.mubr.f32.gmra.mrb[0].mxu0 %v32
    %v271 = vpop.f32.mrb[0].mxu0
    %v272 = vadd.f32 %v204, %v271
    %v273 = vpop.f32.mrb[0].mxu0
    %274 = vmatprep.mubr.f32.mxu0 0.0
    %275 = vmatmul.mubr.f32.gmra.mrb[0].mxu0 %v35
    %v276 = vpop.f32.mrb[0].mxu0
    %v277 = vadd.f32 %v204, %v276
    %v278 = vpop.f32.mrb[0].mxu0
    %279 = vdwg.mxu0
    %v280 = vlaneseq
    %v281 = vshrl.u32 %v280, 7
    %v282 = vsub.s32 0, %v281
    %v283 = vrot.slane %v15, %v282
    %v284 = vmul.f32 %v104, %v283
    %v285 = vmul.f32 %v109, %v283
    %v287 = vsel %vm30, %v284, 0
    %v290 = vsel %vm30, %v285, 0
    %v293 = vsel %vm30, %v188, 0
    %v296 = vsel %vm30, %v193, 0
    %298 = vmatprep.subr.mxu0 0.0
    %299 = vmatpush1.xpose.msra.mxu0 %v293
    %300 = vmatprep.subr.mxu0 0.0
    %301 = vmatpush1.xpose.msra.mxu0 %v296
    %302 = vmatprep.subr.mxu0 0.0
    %303 = vmatpush1.xpose.msra.mxu0 0.0
    %304 = vmatprep.subr.mxu0 0.0
    %305 = vmatpush1.xpose.msra.mxu0 0.0
    %306 = vmatprep.subr.mxu0 0.0
    %307 = vmatpush1.xpose.msra.mxu0 0.0
    %308 = vmatprep.subr.mxu0 0.0
    %309 = vmatpush1.xpose.msra.mxu0 0.0
    %310 = vmatprep.subr.mxu0 0.0
    %311 = vmatpush1.xpose.msra.mxu0 0.0
    %312 = vmatprep.subr.mxu0 0.0
    %313 = vmatpush1.xpose.msra.mxu0 0.0
    %314 = vmatprep.subr.mxu0 0.0
    %315 = vmatpush1.xpose.msra.mxu0 0.0
    %316 = vmatprep.subr.mxu0 0.0
    %317 = vmatpush1.xpose.msra.mxu0 0.0
    %318 = vmatprep.subr.mxu0 0.0
    %319 = vmatpush1.xpose.msra.mxu0 0.0
    %320 = vmatprep.subr.mxu0 0.0
    %321 = vmatpush1.xpose.msra.mxu0 0.0
    %322 = vmatprep.subr.mxu0 0.0
    %323 = vmatpush1.xpose.msra.mxu0 0.0
    %324 = vmatprep.subr.mxu0 0.0
    %325 = vmatpush1.xpose.msra.mxu0 0.0
    %326 = vmatprep.subr.mxu0 0.0
    %327 = vmatpush1.xpose.msra.mxu0 0.0
    %328 = vmatprep.subr.mxu0 0.0
    %329 = vmatpush1.xpose.msra.mxu0 0.0
    %330 = vmatprep.subr.mxu0 0.0
    %331 = vmatpush1.xpose.msra.mxu0 0.0
    %332 = vmatprep.subr.mxu0 0.0
    %333 = vmatpush1.xpose.msra.mxu0 0.0
    %334 = vmatprep.subr.mxu0 0.0
    %335 = vmatpush1.xpose.msra.mxu0 0.0
    %336 = vmatprep.subr.mxu0 0.0
    %337 = vmatpush1.xpose.msra.mxu0 0.0
    %338 = vmatprep.subr.mxu0 0.0
    %339 = vmatpush1.xpose.msra.mxu0 0.0
    %340 = vmatprep.subr.mxu0 0.0
    %341 = vmatpush1.xpose.msra.mxu0 0.0
    %342 = vmatprep.subr.mxu0 0.0
    %343 = vmatpush1.xpose.msra.mxu0 0.0
    %344 = vmatprep.subr.mxu0 0.0
    %345 = vmatpush1.xpose.msra.mxu0 0.0
    %346 = vmatprep.subr.mxu0 0.0
    %347 = vmatpush1.xpose.msra.mxu0 0.0
    %348 = vmatprep.subr.mxu0 0.0
    %349 = vmatpush1.xpose.msra.mxu0 0.0
    %350 = vmatprep.subr.mxu0 0.0
    %351 = vmatpush1.xpose.msra.mxu0 0.0
    %352 = vmatprep.subr.mxu0 0.0
    %353 = vmatpush1.xpose.msra.mxu0 0.0
    %354 = vmatprep.subr.mxu0 0.0
    %355 = vmatpush1.xpose.msra.mxu0 0.0
    %356 = vmatprep.subr.mxu0 0.0
    %357 = vmatpush1.xpose.msra.mxu0 0.0
    %358 = vmatprep.subr.mxu0 0.0
    %359 = vmatpush1.xpose.msra.mxu0 0.0
    %360 = vmatprep.subr.mxu0 0.0
    %361 = vmatpush1.xpose.msra.mxu0 0.0
    %362 = vmatprep.mubr.f32.mxu0 0.0
    %363 = vmatmul.mubr.f32.gmra.mrb[0].mxu0 %v287
    %v364 = vpop.f32.mrb[0].mxu0
    %v365 = vadd.f32 %v19, %v364
    %v366 = vpop.f32.mrb[0].mxu0
    %367 = vmatprep.mubr.f32.mxu0 0.0
    %368 = vmatmul.mubr.f32.gmra.mrb[0].mxu0 %v290
    %v369 = vpop.f32.mrb[0].mxu0
    %v370 = vadd.f32 %v20, %v369
    %v371 = vpop.f32.mrb[0].mxu0
    %372 = vdwg.mxu0
    %vm373 = vcmask 130048
    %v374 = vsel %vm373, %v365, -inf
    %375 = vmax.xlane.f32.xlu0 %v374
    %v376 = vpop.xlane.xlu0 %375
    %v377 = vsel %vm373, %v370, -inf
    %378 = vmax.xlane.f32.xlu0 %v377
    %v379 = vpop.xlane.xlu0 %378
    %v380 = vsub.f32 %v365, %v376
    %v381 = vsub.f32 %v370, %v379
    %v382 = vmul.f32 %v380, 1.442695
    %v383 = vpow.pop %v382
    %v384 = vmul.f32 %v381, 1.442695
    %v385 = vpow.pop %v384
    %v386 = vsel %vm373, %v383, 0.0
    %387 = vadd.xlane.f32.xlu0 %v386
    %v388 = vpop.xlane.xlu0 %387
    %v389 = vsel %vm373, %v385, 0.0
    %390 = vadd.xlane.f32.xlu0 %v389
    %v391 = vpop.xlane.xlu0 %390
    %v392 = vrcp.pop %v388
    %v393 = vmul.f32 %v383, %v392
    %v394 = vrcp.pop %v391
    %v395 = vmul.f32 %v385, %v394
    %v397 = vsel %vm373, %v393, 0
    %v400 = vsel %vm373, %v395, 0
    %402 = vmatprep.subr.mxu0 0.0
    %403 = vmatpush1.msra.mxu0 %v272
    %404 = vmatprep.subr.mxu0 0.0
    %405 = vmatpush1.msra.mxu0 %v277
    %406 = vmatprep.subr.mxu0 0.0
    %407 = vmatpush1.msra.mxu0 0.0
    %408 = vmatprep.subr.mxu0 0.0
    %409 = vmatpush1.msra.mxu0 0.0
    %410 = vmatprep.subr.mxu0 0.0
    %411 = vmatpush1.msra.mxu0 0.0
    %412 = vmatprep.subr.mxu0 0.0
    %413 = vmatpush1.msra.mxu0 0.0
    %414 = vmatprep.subr.mxu0 0.0
    %415 = vmatpush1.msra.mxu0 0.0
    %416 = vmatprep.subr.mxu0 0.0
    %417 = vmatpush1.msra.mxu0 0.0
    %418 = vmatprep.subr.mxu0 0.0
    %419 = vmatpush1.msra.mxu0 0.0
    %420 = vmatprep.subr.mxu0 0.0
    %421 = vmatpush1.msra.mxu0 0.0
    %422 = vmatprep.subr.mxu0 0.0
    %423 = vmatpush1.msra.mxu0 0.0
    %424 = vmatprep.subr.mxu0 0.0
    %425 = vmatpush1.msra.mxu0 0.0
    %426 = vmatprep.subr.mxu0 0.0
    %427 = vmatpush1.msra.mxu0 0.0
    %428 = vmatprep.subr.mxu0 0.0
    %429 = vmatpush1.msra.mxu0 0.0
    %430 = vmatprep.subr.mxu0 0.0
    %431 = vmatpush1.msra.mxu0 0.0
    %432 = vmatprep.subr.mxu0 0.0
    %433 = vmatpush1.msra.mxu0 0.0
    %434 = vmatprep.subr.mxu0 0.0
    %435 = vmatpush1.msra.mxu0 0.0
    %436 = vmatprep.subr.mxu0 0.0
    %437 = vmatpush1.msra.mxu0 0.0
    %438 = vmatprep.subr.mxu0 0.0
    %439 = vmatpush1.msra.mxu0 0.0
    %440 = vmatprep.subr.mxu0 0.0
    %441 = vmatpush1.msra.mxu0 0.0
    %442 = vmatprep.subr.mxu0 0.0
    %443 = vmatpush1.msra.mxu0 0.0
    %444 = vmatprep.subr.mxu0 0.0
    %445 = vmatpush1.msra.mxu0 0.0
    %446 = vmatprep.subr.mxu0 0.0
    %447 = vmatpush1.msra.mxu0 0.0
    %448 = vmatprep.subr.mxu0 0.0
    %449 = vmatpush1.msra.mxu0 0.0
    %450 = vmatprep.subr.mxu0 0.0
    %451 = vmatpush1.msra.mxu0 0.0
    %452 = vmatprep.subr.mxu0 0.0
    %453 = vmatpush1.msra.mxu0 0.0
    %454 = vmatprep.subr.mxu0 0.0
    %455 = vmatpush1.msra.mxu0 0.0
    %456 = vmatprep.subr.mxu0 0.0
    %457 = vmatpush1.msra.mxu0 0.0
    %458 = vmatprep.subr.mxu0 0.0
    %459 = vmatpush1.msra.mxu0 0.0
    %460 = vmatprep.subr.mxu0 0.0
    %461 = vmatpush1.msra.mxu0 0.0
    %462 = vmatprep.subr.mxu0 0.0
    %463 = vmatpush1.msra.mxu0 0.0
    %464 = vmatprep.subr.mxu0 0.0
    %465 = vmatpush1.msra.mxu0 0.0
    %466 = vmatprep.mubr.f32.mxu0 0.0
    %467 = vmatmul.mubr.f32.gmra.mrb[0].mxu0 %v397
    %v468 = vpop.f32.mrb[0].mxu0
    %v469 = vadd.f32 0.0, %v468
    %v470 = vpop.f32.mrb[0].mxu0
    %471 = vmatprep.mubr.f32.mxu0 0.0
    %472 = vmatmul.mubr.f32.gmra.mrb[0].mxu0 %v400
    %v473 = vpop.f32.mrb[0].mxu0
    %v474 = vadd.f32 0.0, %v473
    %v475 = vpop.f32.mrb[0].mxu0
    %476 = vdwg.mxu0
    %v477 = vmul.f32 %v469, %v283
    %v478 = vmul.f32 %v474, %v283
    %v479 = vlaneseq
    %v480 = vshrl.u32 %v479, 7
    %v481 = vsub.s32 0, %v480
    %v482 = vrot.slane %v16, %v481
    %v483 = vmul.f32 %v104, %v482
    %v484 = vmul.f32 %v109, %v482
    %v486 = vsel %vm30, %v483, 0
    %v489 = vsel %vm30, %v484, 0
    %491 = vmatprep.subr.mxu0 0.0
    %492 = vmatpush1.xpose.msra.mxu0 %v293
    %493 = vmatprep.subr.mxu0 0.0
    %494 = vmatpush1.xpose.msra.mxu0 %v296
    %495 = vmatprep.subr.mxu0 0.0
    %496 = vmatpush1.xpose.msra.mxu0 0.0
    %497 = vmatprep.subr.mxu0 0.0
    %498 = vmatpush1.xpose.msra.mxu0 0.0
    %499 = vmatprep.subr.mxu0 0.0
    %500 = vmatpush1.xpose.msra.mxu0 0.0
    %501 = vmatprep.subr.mxu0 0.0
    %502 = vmatpush1.xpose.msra.mxu0 0.0
    %503 = vmatprep.subr.mxu0 0.0
    %504 = vmatpush1.xpose.msra.mxu0 0.0
    %505 = vmatprep.subr.mxu0 0.0
    %506 = vmatpush1.xpose.msra.mxu0 0.0
    %507 = vmatprep.subr.mxu0 0.0
    %508 = vmatpush1.xpose.msra.mxu0 0.0
    %509 = vmatprep.subr.mxu0 0.0
    %510 = vmatpush1.xpose.msra.mxu0 0.0
    %511 = vmatprep.subr.mxu0 0.0
    %512 = vmatpush1.xpose.msra.mxu0 0.0
    %513 = vmatprep.subr.mxu0 0.0
    %514 = vmatpush1.xpose.msra.mxu0 0.0
    %515 = vmatprep.subr.mxu0 0.0
    %516 = vmatpush1.xpose.msra.mxu0 0.0
    %517 = vmatprep.subr.mxu0 0.0
    %518 = vmatpush1.xpose.msra.mxu0 0.0
    %519 = vmatprep.subr.mxu0 0.0
    %520 = vmatpush1.xpose.msra.mxu0 0.0
    %521 = vmatprep.subr.mxu0 0.0
    %522 = vmatpush1.xpose.msra.mxu0 0.0
    %523 = vmatprep.subr.mxu0 0.0
    %524 = vmatpush1.xpose.msra.mxu0 0.0
    %525 = vmatprep.subr.mxu0 0.0
    %526 = vmatpush1.xpose.msra.mxu0 0.0
    %527 = vmatprep.subr.mxu0 0.0
    %528 = vmatpush1.xpose.msra.mxu0 0.0
    %529 = vmatprep.subr.mxu0 0.0
    %530 = vmatpush1.xpose.msra.mxu0 0.0
    %531 = vmatprep.subr.mxu0 0.0
    %532 = vmatpush1.xpose.msra.mxu0 0.0
    %533 = vmatprep.subr.mxu0 0.0
    %534 = vmatpush1.xpose.msra.mxu0 0.0
    %535 = vmatprep.subr.mxu0 0.0
    %536 = vmatpush1.xpose.msra.mxu0 0.0
    %537 = vmatprep.subr.mxu0 0.0
    %538 = vmatpush1.xpose.msra.mxu0 0.0
    %539 = vmatprep.subr.mxu0 0.0
    %540 = vmatpush1.xpose.msra.mxu0 0.0
    %541 = vmatprep.subr.mxu0 0.0
    %542 = vmatpush1.xpose.msra.mxu0 0.0
    %543 = vmatprep.subr.mxu0 0.0
    %544 = vmatpush1.xpose.msra.mxu0 0.0
    %545 = vmatprep.subr.mxu0 0.0
    %546 = vmatpush1.xpose.msra.mxu0 0.0
    %547 = vmatprep.subr.mxu0 0.0
    %548 = vmatpush1.xpose.msra.mxu0 0.0
    %549 = vmatprep.subr.mxu0 0.0
    %550 = vmatpush1.xpose.msra.mxu0 0.0
    %551 = vmatprep.subr.mxu0 0.0
    %552 = vmatpush1.xpose.msra.mxu0 0.0
    %553 = vmatprep.subr.mxu0 0.0
    %554 = vmatpush1.xpose.msra.mxu0 0.0
    %555 = vmatprep.mubr.f32.mxu0 0.0
    %556 = vmatmul.mubr.f32.gmra.mrb[0].mxu0 %v486
    %v557 = vpop.f32.mrb[0].mxu0
    %v558 = vadd.f32 %v19, %v557
    %v559 = vpop.f32.mrb[0].mxu0
    %560 = vmatprep.mubr.f32.mxu0 0.0
    %561 = vmatmul.mubr.f32.gmra.mrb[0].mxu0 %v489
    %v562 = vpop.f32.mrb[0].mxu0
    %v563 = vadd.f32 %v20, %v562
    %v564 = vpop.f32.mrb[0].mxu0
    %565 = vdwg.mxu0
    %v566 = vsel %vm373, %v558, -inf
    %567 = vmax.xlane.f32.xlu0 %v566
    %v568 = vpop.xlane.xlu0 %567
    %v569 = vsel %vm373, %v563, -inf
    %570 = vmax.xlane.f32.xlu0 %v569
    %v571 = vpop.xlane.xlu0 %570
    %v572 = vsub.f32 %v558, %v568
    %v573 = vsub.f32 %v563, %v571
    %v574 = vmul.f32 %v572, 1.442695
    %v575 = vpow.pop %v574
    %v576 = vmul.f32 %v573, 1.442695
    %v577 = vpow.pop %v576
    %v578 = vsel %vm373, %v575, 0.0
    %579 = vadd.xlane.f32.xlu0 %v578
    %v580 = vpop.xlane.xlu0 %579
    %v581 = vsel %vm373, %v577, 0.0
    %582 = vadd.xlane.f32.xlu0 %v581
    %v583 = vpop.xlane.xlu0 %582
    %v584 = vrcp.pop %v580
    %v585 = vmul.f32 %v575, %v584
    %v586 = vrcp.pop %v583
    %v587 = vmul.f32 %v577, %v586
    %v589 = vsel %vm373, %v585, 0
    %v592 = vsel %vm373, %v587, 0
    %594 = vmatprep.subr.mxu0 0.0
    %595 = vmatpush1.msra.mxu0 %v272
    %596 = vmatprep.subr.mxu0 0.0
    %597 = vmatpush1.msra.mxu0 %v277
    %598 = vmatprep.subr.mxu0 0.0
    %599 = vmatpush1.msra.mxu0 0.0
    %600 = vmatprep.subr.mxu0 0.0
    %601 = vmatpush1.msra.mxu0 0.0
    %602 = vmatprep.subr.mxu0 0.0
    %603 = vmatpush1.msra.mxu0 0.0
    %604 = vmatprep.subr.mxu0 0.0
    %605 = vmatpush1.msra.mxu0 0.0
    %606 = vmatprep.subr.mxu0 0.0
    %607 = vmatpush1.msra.mxu0 0.0
    %608 = vmatprep.subr.mxu0 0.0
    %609 = vmatpush1.msra.mxu0 0.0
    %610 = vmatprep.subr.mxu0 0.0
    %611 = vmatpush1.msra.mxu0 0.0
    %612 = vmatprep.subr.mxu0 0.0
    %613 = vmatpush1.msra.mxu0 0.0
    %614 = vmatprep.subr.mxu0 0.0
    %615 = vmatpush1.msra.mxu0 0.0
    %616 = vmatprep.subr.mxu0 0.0
    %617 = vmatpush1.msra.mxu0 0.0
    %618 = vmatprep.subr.mxu0 0.0
    %619 = vmatpush1.msra.mxu0 0.0
    %620 = vmatprep.subr.mxu0 0.0
    %621 = vmatpush1.msra.mxu0 0.0
    %622 = vmatprep.subr.mxu0 0.0
    %623 = vmatpush1.msra.mxu0 0.0
    %624 = vmatprep.subr.mxu0 0.0
    %625 = vmatpush1.msra.mxu0 0.0
    %626 = vmatprep.subr.mxu0 0.0
    %627 = vmatpush1.msra.mxu0 0.0
    %628 = vmatprep.subr.mxu0 0.0
    %629 = vmatpush1.msra.mxu0 0.0
    %630 = vmatprep.subr.mxu0 0.0
    %631 = vmatpush1.msra.mxu0 0.0
    %632 = vmatprep.subr.mxu0 0.0
    %633 = vmatpush1.msra.mxu0 0.0
    %634 = vmatprep.subr.mxu0 0.0
    %635 = vmatpush1.msra.mxu0 0.0
    %636 = vmatprep.subr.mxu0 0.0
    %637 = vmatpush1.msra.mxu0 0.0
    %638 = vmatprep.subr.mxu0 0.0
    %639 = vmatpush1.msra.mxu0 0.0
    %640 = vmatprep.subr.mxu0 0.0
    %641 = vmatpush1.msra.mxu0 0.0
    %642 = vmatprep.subr.mxu0 0.0
    %643 = vmatpush1.msra.mxu0 0.0
    %644 = vmatprep.subr.mxu0 0.0
    %645 = vmatpush1.msra.mxu0 0.0
    %646 = vmatprep.subr.mxu0 0.0
    %647 = vmatpush1.msra.mxu0 0.0
    %648 = vmatprep.subr.mxu0 0.0
    %649 = vmatpush1.msra.mxu0 0.0
    %650 = vmatprep.subr.mxu0 0.0
    %651 = vmatpush1.msra.mxu0 0.0
    %652 = vmatprep.subr.mxu0 0.0
    %653 = vmatpush1.msra.mxu0 0.0
    %654 = vmatprep.subr.mxu0 0.0
    %655 = vmatpush1.msra.mxu0 0.0
    %656 = vmatprep.subr.mxu0 0.0
    %657 = vmatpush1.msra.mxu0 0.0
    %658 = vmatprep.mubr.f32.mxu0 0.0
    %659 = vmatmul.mubr.f32.gmra.mrb[0].mxu0 %v589
    %v660 = vpop.f32.mrb[0].mxu0
    %v661 = vadd.f32 0.0, %v660
    %v662 = vpop.f32.mrb[0].mxu0
    %663 = vmatprep.mubr.f32.mxu0 0.0
    %664 = vmatmul.mubr.f32.gmra.mrb[0].mxu0 %v592
    %v665 = vpop.f32.mrb[0].mxu0
    %v666 = vadd.f32 0.0, %v665
    %v667 = vpop.f32.mrb[0].mxu0
    %668 = vdwg.mxu0
    %v669 = vmul.f32 %v661, %v482
    %v670 = vmul.f32 %v666, %v482
    %v671 = vadd.f32 %v477, %v669
    %v672 = vadd.f32 %v478, %v670
    %v673 = vld [vmem:[%s2 + $0x60] sm:$0xff]
    %v674 = vld [vmem:[%s2 + $0x68] sm:$0xff]
    %v675 = vld [vmem:[%s2 + $0x70] sm:$0xff]
    %v676 = vld [vmem:[%s2 + $0x78] sm:$0xff]
    %v677 = vld [vmem:[%s2 + $0x273] sm:$0x1]
    %v678 = vlaneseq
    %v679 = vshrl.u32 %v678, 7
    %v680 = vsub.s32 0, %v679
    %v681 = vrot.slane %v677, %v680
    %v683 = vsel %vm30, %v671, 0
    %v686 = vsel %vm30, %v672, 0
    %688 = vmatprep.subr.mxu0 0.0
    %689 = vmatpush1.msra.mxu0 %v673
    %690 = vmatprep.subr.mxu0 0.0
    %691 = vmatpush1.msra.mxu0 %v674
    %692 = vmatprep.subr.mxu0 0.0
    %693 = vmatpush1.msra.mxu0 %v675
    %694 = vmatprep.subr.mxu0 0.0
    %695 = vmatpush1.msra.mxu0 %v676
    %696 = vmatprep.subr.mxu0 0.0
    %697 = vmatpush1.msra.mxu0 0.0
    %698 = vmatprep.subr.mxu0 0.0
    %699 = vmatpush1.msra.mxu0 0.0
    %700 = vmatprep.subr.mxu0 0.0
    %701 = vmatpush1.msra.mxu0 0.0
    %702 = vmatprep.subr.mxu0 0.0
    %703 = vmatpush1.msra.mxu0 0.0
    %704 = vmatprep.subr.mxu0 0.0
    %705 = vmatpush1.msra.mxu0 0.0
    %706 = vmatprep.subr.mxu0 0.0
    %707 = vmatpush1.msra.mxu0 0.0
    %708 = vmatprep.subr.mxu0 0.0
    %709 = vmatpush1.msra.mxu0 0.0
    %710 = vmatprep.subr.mxu0 0.0
    %711 = vmatpush1.msra.mxu0 0.0
    %712 = vmatprep.subr.mxu0 0.0
    %713 = vmatpush1.msra.mxu0 0.0
    %714 = vmatprep.subr.mxu0 0.0
    %715 = vmatpush1.msra.mxu0 0.0
    %716 = vmatprep.subr.mxu0 0.0
    %717 = vmatpush1.msra.mxu0 0.0
    %718 = vmatprep.subr.mxu0 0.0
    %719 = vmatpush1.msra.mxu0 0.0
    %720 = vmatprep.subr.mxu0 0.0
    %721 = vmatpush1.msra.mxu0 0.0
    %722 = vmatprep.subr.mxu0 0.0
    %723 = vmatpush1.msra.mxu0 0.0
    %724 = vmatprep.subr.mxu0 0.0
    %725 = vmatpush1.msra.mxu0 0.0
    %726 = vmatprep.subr.mxu0 0.0
    %727 = vmatpush1.msra.mxu0 0.0
    %728 = vmatprep.subr.mxu0 0.0
    %729 = vmatpush1.msra.mxu0 0.0
    %730 = vmatprep.subr.mxu0 0.0
    %731 = vmatpush1.msra.mxu0 0.0
    %732 = vmatprep.subr.mxu0 0.0
    %733 = vmatpush1.msra.mxu0 0.0
    %734 = vmatprep.subr.mxu0 0.0
    %735 = vmatpush1.msra.mxu0 0.0
    %736 = vmatprep.subr.mxu0 0.0
    %737 = vmatpush1.msra.mxu0 0.0
    %738 = vmatprep.subr.mxu0 0.0
    %739 = vmatpush1.msra.mxu0 0.0
    %740 = vmatprep.subr.mxu0 0.0
    %741 = vmatpush1.msra.mxu0 0.0
    %742 = vmatprep.subr.mxu0 0.0
    %743 = vmatpush1.msra.mxu0 0.0
    %744 = vmatprep.subr.mxu0 0.0
    %745 = vmatpush1.msra.mxu0 0.0
    %746 = vmatprep.subr.mxu0 0.0
    %747 = vmatpush1.msra.mxu0 0.0
    %748 = vmatprep.subr.mxu0 0.0
    %749 = vmatpush1.msra.mxu0 0.0
    %750 = vmatprep.subr.mxu0 0.0
    %751 = vmatpush1.msra.mxu0 0.0
    %752 = vmatprep.mubr.f32.mxu0 0.0
    %753 = vmatmul.mubr.f32.gmra.mrb[0].mxu0 %v683
    %v754 = vpop.f32.mrb[0].mxu0
    %v755 = vadd.f32 %v681, %v754
    %v756 = vpop.f32.mrb[0].mxu0
    %757 = vmatprep.mubr.f32.mxu0 0.0
    %758 = vmatmul.mubr.f32.gmra.mrb[0].mxu0 %v686
    %v759 = vpop.f32.mrb[0].mxu0
    %v760 = vadd.f32 %v681, %v759
    %v761 = vpop.f32.mrb[0].mxu0
    %762 = vdwg.mxu0
    %v763 = vadd.f32 %v17, %v755
    %v764 = vadd.f32 %v18, %v760
    %v765 = vsel %vm30, %v763, 0.0
    %766 = vadd.xlane.f32.xlu0 %v765
    %v767 = vpop.xlane.xlu0 %766
    %v768 = vsel %vm30, %v764, 0.0
    %769 = vadd.xlane.f32.xlu0 %v768
    %v770 = vpop.xlane.xlu0 %769
    %v771 = vrcp.pop 32.0
    %v772 = vmul.f32 %v767, %v771
    %v773 = vmul.f32 %v770, %v771
    %v774 = vsub.f32 %v763, %v772
    %v775 = vsub.f32 %v764, %v773
    %v776 = vmul.f32 %v774, %v774
    %v777 = vmul.f32 %v775, %v775
    %v778 = vsel %vm30, %v776, 0.0
    %779 = vadd.xlane.f32.xlu0 %v778
    %v780 = vpop.xlane.xlu0 %779
    %v781 = vsel %vm30, %v777, 0.0
    %782 = vadd.xlane.f32.xlu0 %v781
    %v783 = vpop.xlane.xlu0 %782
    %v784 = vmul.f32 %v780, %v771
    %v785 = vmul.f32 %v783, %v771
    %v786 = vadd.f32 %v784, 1e-05
    %v787 = vadd.f32 %v785, 1e-05
    %v788 = vrsqrt.pop %v786
    %v789 = vrsqrt.pop %v787
    %v790 = vmul.f32 %v774, %v788
    %v791 = vmul.f32 %v775, %v789
    %v792 = vld [vmem:[%s2 + $0x276] sm:$0x1]
    %v793 = vlaneseq
    %v794 = vshrl.u32 %v793, 7
    %v795 = vsub.s32 0, %v794
    %v796 = vrot.slane %v792, %v795
    %v797 = vmul.f32 %v790, %v796
    %v798 = vmul.f32 %v791, %v796
    %v799 = vld [vmem:[%s2 + $0x277] sm:$0x1]
    %v800 = vlaneseq
    %v801 = vshrl.u32 %v800, 7
    %v802 = vsub.s32 0, %v801
    %v803 = vrot.slane %v799, %v802
    %v804 = vadd.f32 %v797, %v803
    %v805 = vadd.f32 %v798, %v803
    %v806 = vld [vmem:[%s2 + $0x80] sm:$0xff]
    %v807 = vld [vmem:[%s2 + $0x88] sm:$0xff]
    %v808 = vld [vmem:[%s2 + $0x90] sm:$0xff]
    %v809 = vld [vmem:[%s2 + $0x98] sm:$0xff]
    %v810 = vld [vmem:[%s2 + $0x274] sm:$0x1]
    %v811 = vlaneseq
    %v812 = vshrl.u32 %v811, 7
    %v813 = vsub.s32 0, %v812
    %v814 = vrot.slane %v810, %v813
    %v816 = vsel %vm30, %v804, 0
    %v819 = vsel %vm30, %v805, 0
    %821 = vmatprep.subr.mxu0 0.0
    %822 = vmatpush1.msra.mxu0 %v806
    %823 = vmatprep.subr.mxu0 0.0
    %824 = vmatpush1.msra.mxu0 %v807
    %825 = vmatprep.subr.mxu0 0.0
    %826 = vmatpush1.msra.mxu0 %v808
    %827 = vmatprep.subr.mxu0 0.0
    %828 = vmatpush1.msra.mxu0 %v809
    %829 = vmatprep.subr.mxu0 0.0
    %830 = vmatpush1.msra.mxu0 0.0
    %831 = vmatprep.subr.mxu0 0.0
    %832 = vmatpush1.msra.mxu0 0.0
    %833 = vmatprep.subr.mxu0 0.0
    %834 = vmatpush1.msra.mxu0 0.0
    %835 = vmatprep.subr.mxu0 0.0
    %836 = vmatpush1.msra.mxu0 0.0
    %837 = vmatprep.subr.mxu0 0.0
    %838 = vmatpush1.msra.mxu0 0.0
    %839 = vmatprep.subr.mxu0 0.0
    %840 = vmatpush1.msra.mxu0 0.0
    %841 = vmatprep.subr.mxu0 0.0
    %842 = vmatpush1.msra.mxu0 0.0
    %843 = vmatprep.subr.mxu0 0.0
    %844 = vmatpush1.msra.mxu0 0.0
    %845 = vmatprep.subr.mxu0 0.0
    %846 = vmatpush1.msra.mxu0 0.0
    %847 = vmatprep.subr.mxu0 0.0
    %848 = vmatpush1.msra.mxu0 0.0
    %849 = vmatprep.subr.mxu0 0.0
    %850 = vmatpush1.msra.mxu0 0.0
    %851 = vmatprep.subr.mxu0 0.0
    %852 = vmatpush1.msra.mxu0 0.0
    %853 = vmatprep.subr.mxu0 0.0
    %854 = vmatpush1.msra.mxu0 0.0
    %855 = vmatprep.subr.mxu0 0.0
    %856 = vmatpush1.msra.mxu0 0.0
    %857 = vmatprep.subr.mxu0 0.0
    %858 = vmatpush1.msra.mxu0 0.0
    %859 = vmatprep.subr.mxu0 0.0
    %860 = vmatpush1.msra.mxu0 0.0
    %861 = vmatprep.subr.mxu0 0.0
    %862 = vmatpush1.msra.mxu0 0.0
    %863 = vmatprep.subr.mxu0 0.0
    %864 = vmatpush1.msra.mxu0 0.0
    %865 = vmatprep.subr.mxu0 0.0
    %866 = vmatpush1.msra.mxu0 0.0
    %867 = vmatprep.subr.mxu0 0.0
    %868 = vmatpush1.msra.mxu0 0.0
    %869 = vmatprep.subr.mxu0 0.0
    %870 = vmatpush1.msra.mxu0 0.0
    %871 = vmatprep.subr.mxu0 0.0
    %872 = vmatpush1.msra.mxu0 0.0
    %873 = vmatprep.subr.mxu0 0.0
    %874 = vmatpush1.msra.mxu0 0.0
    %875 = vmatprep.subr.mxu0 0.0
    %876 = vmatpush1.msra.mxu0 0.0
    %877 = vmatprep.subr.mxu0 0.0
    %878 = vmatpush1.msra.mxu0 0.0
    %879 = vmatprep.subr.mxu0 0.0
    %880 = vmatpush1.msra.mxu0 0.0
    %881 = vmatprep.subr.mxu0 0.0
    %882 = vmatpush1.msra.mxu0 0.0
    %883 = vmatprep.subr.mxu0 0.0
    %884 = vmatpush1.msra.mxu0 0.0
    %885 = vmatprep.mubr.f32.mxu0 0.0
    %886 = vmatmul.mubr.f32.gmra.mrb[0].mxu0 %v816
    %v887 = vpop.f32.mrb[0].mxu0
    %v888 = vadd.f32 %v814, %v887
    %v889 = vpop.f32.mrb[0].mxu0
    %890 = vmatprep.mubr.f32.mxu0 0.0
    %891 = vmatmul.mubr.f32.gmra.mrb[0].mxu0 %v819
    %v892 = vpop.f32.mrb[0].mxu0
    %v893 = vadd.f32 %v814, %v892
    %v894 = vpop.f32.mrb[0].mxu0
    %895 = vdwg.mxu0
    %v896 = vmax.f32 %v888, 0.0
    %v897 = vmax.f32 %v893, 0.0
    %v898 = vld [vmem:[%s2 + $0xa0] sm:$0xff]
    %v899 = vld [vmem:[%s2 + $0xa8] sm:$0xff]
    %v900 = vld [vmem:[%s2 + $0xb0] sm:$0xff]
    %v901 = vld [vmem:[%s2 + $0xb8] sm:$0xff]
    %v902 = vld [vmem:[%s2 + $0xc0] sm:$0xff]
    %v903 = vld [vmem:[%s2 + $0xc8] sm:$0xff]
    %v904 = vld [vmem:[%s2 + $0xd0] sm:$0xff]
    %v905 = vld [vmem:[%s2 + $0xd8] sm:$0xff]
    %v906 = vld [vmem:[%s2 + $0x275] sm:$0x1]
    %v907 = vlaneseq
    %v908 = vshrl.u32 %v907, 7
    %v909 = vsub.s32 0, %v908
    %v910 = vrot.slane %v906, %v909
    %vm911 = vcmask 523264
    %v913 = vsel %vm911, %v896, 0
    %v916 = vsel %vm911, %v897, 0
    %918 = vmatprep.subr.mxu0 0.0
    %919 = vmatpush1.msra.mxu0 %v898
    %920 = vmatprep.subr.mxu0 0.0
    %921 = vmatpush1.msra.mxu0 %v899
    %922 = vmatprep.subr.mxu0 0.0
    %923 = vmatpush1.msra.mxu0 %v900
    %924 = vmatprep.subr.mxu0 0.0
    %925 = vmatpush1.msra.mxu0 %v901
    %926 = vmatprep.subr.mxu0 0.0
    %927 = vmatpush1.msra.mxu0 %v902
    %928 = vmatprep.subr.mxu0 0.0
    %929 = vmatpush1.msra.mxu0 %v903
    %930 = vmatprep.subr.mxu0 0.0
    %931 = vmatpush1.msra.mxu0 %v904
    %932 = vmatprep.subr.mxu0 0.0
    %933 = vmatpush1.msra.mxu0 %v905
    %934 = vmatprep.subr.mxu0 0.0
    %935 = vmatpush1.msra.mxu0 0.0
    %936 = vmatprep.subr.mxu0 0.0
    %937 = vmatpush1.msra.mxu0 0.0
    %938 = vmatprep.subr.mxu0 0.0
    %939 = vmatpush1.msra.mxu0 0.0
    %940 = vmatprep.subr.mxu0 0.0
    %941 = vmatpush1.msra.mxu0 0.0
    %942 = vmatprep.subr.mxu0 0.0
    %943 = vmatpush1.msra.mxu0 0.0
    %944 = vmatprep.subr.mxu0 0.0
    %945 = vmatpush1.msra.mxu0 0.0
    %946 = vmatprep.subr.mxu0 0.0
    %947 = vmatpush1.msra.mxu0 0.0
    %948 = vmatprep.subr.mxu0 0.0
    %949 = vmatpush1.msra.mxu0 0.0
    %950 = vmatprep.subr.mxu0 0.0
    %951 = vmatpush1.msra.mxu0 0.0
    %952 = vmatprep.subr.mxu0 0.0
    %953 = vmatpush1.msra.mxu0 0.0
    %954 = vmatprep.subr.mxu0 0.0
    %955 = vmatpush1.msra.mxu0 0.0
    %956 = vmatprep.subr.mxu0 0.0
    %957 = vmatpush1.msra.mxu0 0.0
    %958 = vmatprep.subr.mxu0 0.0
    %959 = vmatpush1.msra.mxu0 0.0
    %960 = vmatprep.subr.mxu0 0.0
    %961 = vmatpush1.msra.mxu0 0.0
    %962 = vmatprep.subr.mxu0 0.0
    %963 = vmatpush1.msra.mxu0 0.0
    %964 = vmatprep.subr.mxu0 0.0
    %965 = vmatpush1.msra.mxu0 0.0
    %966 = vmatprep.subr.mxu0 0.0
    %967 = vmatpush1.msra.mxu0 0.0
    %968 = vmatprep.subr.mxu0 0.0
    %969 = vmatpush1.msra.mxu0 0.0
    %970 = vmatprep.subr.mxu0 0.0
    %971 = vmatpush1.msra.mxu0 0.0
    %972 = vmatprep.subr.mxu0 0.0
    %973 = vmatpush1.msra.mxu0 0.0
    %974 = vmatprep.subr.mxu0 0.0
    %975 = vmatpush1.msra.mxu0 0.0
    %976 = vmatprep.subr.mxu0 0.0
    %977 = vmatpush1.msra.mxu0 0.0
    %978 = vmatprep.subr.mxu0 0.0
    %979 = vmatpush1.msra.mxu0 0.0
    %980 = vmatprep.subr.mxu0 0.0
    %981 = vmatpush1.msra.mxu0 0.0
    %982 = vmatprep.mubr.f32.mxu0 0.0
    %983 = vmatmul.mubr.f32.gmra.mrb[0].mxu0 %v913
    %v984 = vpop.f32.mrb[0].mxu0
    %v985 = vadd.f32 %v910, %v984
    %v986 = vpop.f32.mrb[0].mxu0
    %987 = vmatprep.mubr.f32.mxu0 0.0
    %988 = vmatmul.mubr.f32.gmra.mrb[0].mxu0 %v916
    %v989 = vpop.f32.mrb[0].mxu0
    %v990 = vadd.f32 %v910, %v989
    %v991 = vpop.f32.mrb[0].mxu0
    %992 = vdwg.mxu0
    %v993 = vadd.f32 %v804, %v985
    %v994 = vadd.f32 %v805, %v990
    %v995 = vsel %vm30, %v993, 0.0
    %996 = vadd.xlane.f32.xlu0 %v995
    %v997 = vpop.xlane.xlu0 %996
    %v998 = vsel %vm30, %v994, 0.0
    %999 = vadd.xlane.f32.xlu0 %v998
    %v1000 = vpop.xlane.xlu0 %999
    %v1001 = vmul.f32 %v997, %v771
    %v1002 = vmul.f32 %v1000, %v771
    %v1003 = vsub.f32 %v993, %v1001
    %v1004 = vsub.f32 %v994, %v1002
    %v1005 = vmul.f32 %v1003, %v1003
    %v1006 = vmul.f32 %v1004, %v1004
    %v1007 = vsel %vm30, %v1005, 0.0
    %1008 = vadd.xlane.f32.xlu0 %v1007
    %v1009 = vpop.xlane.xlu0 %1008
    %v1010 = vsel %vm30, %v1006, 0.0
    %1011 = vadd.xlane.f32.xlu0 %v1010
    %v1012 = vpop.xlane.xlu0 %1011
    %v1013 = vmul.f32 %v1009, %v771
    %v1014 = vmul.f32 %v1012, %v771
    %v1015 = vadd.f32 %v1013, 1e-05
    %v1016 = vadd.f32 %v1014, 1e-05
    %v1017 = vrsqrt.pop %v1015
    %v1018 = vrsqrt.pop %v1016
    %v1019 = vmul.f32 %v1003, %v1017
    %v1020 = vmul.f32 %v1004, %v1018
    %v1021 = vld [vmem:[%s2 + $0x278] sm:$0x1]
    %v1022 = vlaneseq
    %v1023 = vshrl.u32 %v1022, 7
    %v1024 = vsub.s32 0, %v1023
    %v1025 = vrot.slane %v1021, %v1024
    %v1026 = vmul.f32 %v1019, %v1025
    %v1027 = vmul.f32 %v1020, %v1025
    %v1028 = vld [vmem:[%s2 + $0x279] sm:$0x1]
    %v1029 = vlaneseq
    %v1030 = vshrl.u32 %v1029, 7
    %v1031 = vsub.s32 0, %v1030
    %v1032 = vrot.slane %v1028, %v1031
    %v1033 = vadd.f32 %v1026, %v1032
    %v1034 = vadd.f32 %v1027, %v1032
    %v1035 = vld [vmem:[%s1] sm:$0xff]
    %v1036 = vld [vmem:[%s1 + $0x8] sm:$0xff]
    %v1037 = vld [vmem:[%s2 + $0x250] sm:$0xff]
    %v1038 = vld [vmem:[%s2 + $0x258] sm:$0xff]
    %v1039 = vld [vmem:[%s2 + $0xe0] sm:$0xff]
    %v1040 = vld [vmem:[%s2 + $0xe8] sm:$0xff]
    %v1041 = vld [vmem:[%s2 + $0xf0] sm:$0xff]
    %v1042 = vld [vmem:[%s2 + $0xf8] sm:$0xff]
    %v1043 = vld [vmem:[%s2 + $0x27a] sm:$0x1]
    %v1044 = vlaneseq
    %v1045 = vshrl.u32 %v1044, 7
    %v1046 = vsub.s32 0, %v1045
    %v1047 = vrot.slane %v1043, %v1046
    %v1049 = vsel %vm30, %v1035, 0
    %v1052 = vsel %vm30, %v1036, 0
    %1054 = vmatprep.subr.mxu0 0.0
    %1055 = vmatpush1.msra.mxu0 %v1039
    %1056 = vmatprep.subr.mxu0 0.0
    %1057 = vmatpush1.msra.mxu0 %v1040
    %1058 = vmatprep.subr.mxu0 0.0
    %1059 = vmatpush1.msra.mxu0 %v1041
    %1060 = vmatprep.subr.mxu0 0.0
    %1061 = vmatpush1.msra.mxu0 %v1042
    %1062 = vmatprep.subr.mxu0 0.0
    %1063 = vmatpush1.msra.mxu0 0.0
    %1064 = vmatprep.subr.mxu0 0.0
    %1065 = vmatpush1.msra.mxu0 0.0
    %1066 = vmatprep.subr.mxu0 0.0
    %1067 = vmatpush1.msra.mxu0 0.0
    %1068 = vmatprep.subr.mxu0 0.0
    %1069 = vmatpush1.msra.mxu0 0.0
    %1070 = vmatprep.subr.mxu0 0.0
    %1071 = vmatpush1.msra.mxu0 0.0
    %1072 = vmatprep.subr.mxu0 0.0
    %1073 = vmatpush1.msra.mxu0 0.0
    %1074 = vmatprep.subr.mxu0 0.0
    %1075 = vmatpush1.msra.mxu0 0.0
    %1076 = vmatprep.subr.mxu0 0.0
    %1077 = vmatpush1.msra.mxu0 0.0
    %1078 = vmatprep.subr.mxu0 0.0
    %1079 = vmatpush1.msra.mxu0 0.0
    %1080 = vmatprep.subr.mxu0 0.0
    %1081 = vmatpush1.msra.mxu0 0.0
    %1082 = vmatprep.subr.mxu0 0.0
    %1083 = vmatpush1.msra.mxu0 0.0
    %1084 = vmatprep.subr.mxu0 0.0
    %1085 = vmatpush1.msra.mxu0 0.0
    %1086 = vmatprep.subr.mxu0 0.0
    %1087 = vmatpush1.msra.mxu0 0.0
    %1088 = vmatprep.subr.mxu0 0.0
    %1089 = vmatpush1.msra.mxu0 0.0
    %1090 = vmatprep.subr.mxu0 0.0
    %1091 = vmatpush1.msra.mxu0 0.0
    %1092 = vmatprep.subr.mxu0 0.0
    %1093 = vmatpush1.msra.mxu0 0.0
    %1094 = vmatprep.subr.mxu0 0.0
    %1095 = vmatpush1.msra.mxu0 0.0
    %1096 = vmatprep.subr.mxu0 0.0
    %1097 = vmatpush1.msra.mxu0 0.0
    %1098 = vmatprep.subr.mxu0 0.0
    %1099 = vmatpush1.msra.mxu0 0.0
    %1100 = vmatprep.subr.mxu0 0.0
    %1101 = vmatpush1.msra.mxu0 0.0
    %1102 = vmatprep.subr.mxu0 0.0
    %1103 = vmatpush1.msra.mxu0 0.0
    %1104 = vmatprep.subr.mxu0 0.0
    %1105 = vmatpush1.msra.mxu0 0.0
    %1106 = vmatprep.subr.mxu0 0.0
    %1107 = vmatpush1.msra.mxu0 0.0
    %1108 = vmatprep.subr.mxu0 0.0
    %1109 = vmatpush1.msra.mxu0 0.0
    %1110 = vmatprep.subr.mxu0 0.0
    %1111 = vmatpush1.msra.mxu0 0.0
    %1112 = vmatprep.subr.mxu0 0.0
    %1113 = vmatpush1.msra.mxu0 0.0
    %1114 = vmatprep.subr.mxu0 0.0
    %1115 = vmatpush1.msra.mxu0 0.0
    %1116 = vmatprep.subr.mxu0 0.0
    %1117 = vmatpush1.msra.mxu0 0.0
    %1118 = vmatprep.mubr.f32.mxu0 0.0
    %1119 = vmatmul.mubr.f32.gmra.mrb[0].mxu0 %v1049
    %v1120 = vpop.f32.mrb[0].mxu0
    %v1121 = vadd.f32 %v1047, %v1120
    %v1122 = vpop.f32.mrb[0].mxu0
    %1123 = vmatprep.mubr.f32.mxu0 0.0
    %1124 = vmatmul.mubr.f32.gmra.mrb[0].mxu0 %v1052
    %v1125 = vpop.f32.mrb[0].mxu0
    %v1126 = vadd.f32 %v1047, %v1125
    %v1127 = vpop.f32.mrb[0].mxu0
    %1128 = vdwg.mxu0
    %v1129 = vld [vmem:[%s2 + $0x100] sm:$0xff]
    %v1130 = vld [vmem:[%s2 + $0x108] sm:$0xff]
    %v1131 = vld [vmem:[%s2 + $0x110] sm:$0xff]
    %v1132 = vld [vmem:[%s2 + $0x118] sm:$0xff]
    %v1133 = vld [vmem:[%s2 + $0x27b] sm:$0x1]
    %v1134 = vlaneseq
    %v1135 = vshrl.u32 %v1134, 7
    %v1136 = vsub.s32 0, %v1135
    %v1137 = vrot.slane %v1133, %v1136
    %1138 = vmatprep.subr.mxu0 0.0
    %1139 = vmatpush1.msra.mxu0 %v1129
    %1140 = vmatprep.subr.mxu0 0.0
    %1141 = vmatpush1.msra.mxu0 %v1130
    %1142 = vmatprep.subr.mxu0 0.0
    %1143 = vmatpush1.msra.mxu0 %v1131
    %1144 = vmatprep.subr.mxu0 0.0
    %1145 = vmatpush1.msra.mxu0 %v1132
    %1146 = vmatprep.subr.mxu0 0.0
    %1147 = vmatpush1.msra.mxu0 0.0
    %1148 = vmatprep.subr.mxu0 0.0
    %1149 = vmatpush1.msra.mxu0 0.0
    %1150 = vmatprep.subr.mxu0 0.0
    %1151 = vmatpush1.msra.mxu0 0.0
    %1152 = vmatprep.subr.mxu0 0.0
    %1153 = vmatpush1.msra.mxu0 0.0
    %1154 = vmatprep.subr.mxu0 0.0
    %1155 = vmatpush1.msra.mxu0 0.0
    %1156 = vmatprep.subr.mxu0 0.0
    %1157 = vmatpush1.msra.mxu0 0.0
    %1158 = vmatprep.subr.mxu0 0.0
    %1159 = vmatpush1.msra.mxu0 0.0
    %1160 = vmatprep.subr.mxu0 0.0
    %1161 = vmatpush1.msra.mxu0 0.0
    %1162 = vmatprep.subr.mxu0 0.0
    %1163 = vmatpush1.msra.mxu0 0.0
    %1164 = vmatprep.subr.mxu0 0.0
    %1165 = vmatpush1.msra.mxu0 0.0
    %1166 = vmatprep.subr.mxu0 0.0
    %1167 = vmatpush1.msra.mxu0 0.0
    %1168 = vmatprep.subr.mxu0 0.0
    %1169 = vmatpush1.msra.mxu0 0.0
    %1170 = vmatprep.subr.mxu0 0.0
    %1171 = vmatpush1.msra.mxu0 0.0
    %1172 = vmatprep.subr.mxu0 0.0
    %1173 = vmatpush1.msra.mxu0 0.0
    %1174 = vmatprep.subr.mxu0 0.0
    %1175 = vmatpush1.msra.mxu0 0.0
    %1176 = vmatprep.subr.mxu0 0.0
    %1177 = vmatpush1.msra.mxu0 0.0
    %1178 = vmatprep.subr.mxu0 0.0
    %1179 = vmatpush1.msra.mxu0 0.0
    %1180 = vmatprep.subr.mxu0 0.0
    %1181 = vmatpush1.msra.mxu0 0.0
    %1182 = vmatprep.subr.mxu0 0.0
    %1183 = vmatpush1.msra.mxu0 0.0
    %1184 = vmatprep.subr.mxu0 0.0
    %1185 = vmatpush1.msra.mxu0 0.0
    %1186 = vmatprep.subr.mxu0 0.0
    %1187 = vmatpush1.msra.mxu0 0.0
    %1188 = vmatprep.subr.mxu0 0.0
    %1189 = vmatpush1.msra.mxu0 0.0
    %1190 = vmatprep.subr.mxu0 0.0
    %1191 = vmatpush1.msra.mxu0 0.0
    %1192 = vmatprep.subr.mxu0 0.0
    %1193 = vmatpush1.msra.mxu0 0.0
    %1194 = vmatprep.subr.mxu0 0.0
    %1195 = vmatpush1.msra.mxu0 0.0
    %1196 = vmatprep.subr.mxu0 0.0
    %1197 = vmatpush1.msra.mxu0 0.0
    %1198 = vmatprep.subr.mxu0 0.0
    %1199 = vmatpush1.msra.mxu0 0.0
    %1200 = vmatprep.subr.mxu0 0.0
    %1201 = vmatpush1.msra.mxu0 0.0
    %1202 = vmatprep.mubr.f32.mxu0 0.0
    %1203 = vmatmul.mubr.f32.gmra.mrb[0].mxu0 %v1049
    %v1204 = vpop.f32.mrb[0].mxu0
    %v1205 = vadd.f32 %v1137, %v1204
    %v1206 = vpop.f32.mrb[0].mxu0
    %1207 = vmatprep.mubr.f32.mxu0 0.0
    %1208 = vmatmul.mubr.f32.gmra.mrb[0].mxu0 %v1052
    %v1209 = vpop.f32.mrb[0].mxu0
    %v1210 = vadd.f32 %v1137, %v1209
    %v1211 = vpop.f32.mrb[0].mxu0
    %1212 = vdwg.mxu0
    %v1213 = vld [vmem:[%s2 + $0x120] sm:$0xff]
    %v1214 = vld [vmem:[%s2 + $0x128] sm:$0xff]
    %v1215 = vld [vmem:[%s2 + $0x130] sm:$0xff]
    %v1216 = vld [vmem:[%s2 + $0x138] sm:$0xff]
    %v1217 = vld [vmem:[%s2 + $0x27c] sm:$0x1]
    %v1218 = vlaneseq
    %v1219 = vshrl.u32 %v1218, 7
    %v1220 = vsub.s32 0, %v1219
    %v1221 = vrot.slane %v1217, %v1220
    %1222 = vmatprep.subr.mxu0 0.0
    %1223 = vmatpush1.msra.mxu0 %v1213
    %1224 = vmatprep.subr.mxu0 0.0
    %1225 = vmatpush1.msra.mxu0 %v1214
    %1226 = vmatprep.subr.mxu0 0.0
    %1227 = vmatpush1.msra.mxu0 %v1215
    %1228 = vmatprep.subr.mxu0 0.0
    %1229 = vmatpush1.msra.mxu0 %v1216
    %1230 = vmatprep.subr.mxu0 0.0
    %1231 = vmatpush1.msra.mxu0 0.0
    %1232 = vmatprep.subr.mxu0 0.0
    %1233 = vmatpush1.msra.mxu0 0.0
    %1234 = vmatprep.subr.mxu0 0.0
    %1235 = vmatpush1.msra.mxu0 0.0
    %1236 = vmatprep.subr.mxu0 0.0
    %1237 = vmatpush1.msra.mxu0 0.0
    %1238 = vmatprep.subr.mxu0 0.0
    %1239 = vmatpush1.msra.mxu0 0.0
    %1240 = vmatprep.subr.mxu0 0.0
    %1241 = vmatpush1.msra.mxu0 0.0
    %1242 = vmatprep.subr.mxu0 0.0
    %1243 = vmatpush1.msra.mxu0 0.0
    %1244 = vmatprep.subr.mxu0 0.0
    %1245 = vmatpush1.msra.mxu0 0.0
    %1246 = vmatprep.subr.mxu0 0.0
    %1247 = vmatpush1.msra.mxu0 0.0
    %1248 = vmatprep.subr.mxu0 0.0
    %1249 = vmatpush1.msra.mxu0 0.0
    %1250 = vmatprep.subr.mxu0 0.0
    %1251 = vmatpush1.msra.mxu0 0.0
    %1252 = vmatprep.subr.mxu0 0.0
    %1253 = vmatpush1.msra.mxu0 0.0
    %1254 = vmatprep.subr.mxu0 0.0
    %1255 = vmatpush1.msra.mxu0 0.0
    %1256 = vmatprep.subr.mxu0 0.0
    %1257 = vmatpush1.msra.mxu0 0.0
    %1258 = vmatprep.subr.mxu0 0.0
    %1259 = vmatpush1.msra.mxu0 0.0
    %1260 = vmatprep.subr.mxu0 0.0
    %1261 = vmatpush1.msra.mxu0 0.0
    %1262 = vmatprep.subr.mxu0 0.0
    %1263 = vmatpush1.msra.mxu0 0.0
    %1264 = vmatprep.subr.mxu0 0.0
    %1265 = vmatpush1.msra.mxu0 0.0
    %1266 = vmatprep.subr.mxu0 0.0
    %1267 = vmatpush1.msra.mxu0 0.0
    %1268 = vmatprep.subr.mxu0 0.0
    %1269 = vmatpush1.msra.mxu0 0.0
    %1270 = vmatprep.subr.mxu0 0.0
    %1271 = vmatpush1.msra.mxu0 0.0
    %1272 = vmatprep.subr.mxu0 0.0
    %1273 = vmatpush1.msra.mxu0 0.0
    %1274 = vmatprep.subr.mxu0 0.0
    %1275 = vmatpush1.msra.mxu0 0.0
    %1276 = vmatprep.subr.mxu0 0.0
    %1277 = vmatpush1.msra.mxu0 0.0
    %1278 = vmatprep.subr.mxu0 0.0
    %1279 = vmatpush1.msra.mxu0 0.0
    %1280 = vmatprep.subr.mxu0 0.0
    %1281 = vmatpush1.msra.mxu0 0.0
    %1282 = vmatprep.subr.mxu0 0.0
    %1283 = vmatpush1.msra.mxu0 0.0
    %1284 = vmatprep.subr.mxu0 0.0
    %1285 = vmatpush1.msra.mxu0 0.0
    %1286 = vmatprep.mubr.f32.mxu0 0.0
    %1287 = vmatmul.mubr.f32.gmra.mrb[0].mxu0 %v1049
    %v1288 = vpop.f32.mrb[0].mxu0
    %v1289 = vadd.f32 %v1221, %v1288
    %v1290 = vpop.f32.mrb[0].mxu0
    %1291 = vmatprep.mubr.f32.mxu0 0.0
    %1292 = vmatmul.mubr.f32.gmra.mrb[0].mxu0 %v1052
    %v1293 = vpop.f32.mrb[0].mxu0
    %v1294 = vadd.f32 %v1221, %v1293
    %v1295 = vpop.f32.mrb[0].mxu0
    %1296 = vdwg.mxu0
    %v1297 = vmul.f32 %v1121, %v283
    %v1298 = vmul.f32 %v1126, %v283
    %v1300 = vsel %vm30, %v1297, 0
    %v1303 = vsel %vm30, %v1298, 0
    %v1306 = vsel %vm30, %v1205, 0
    %v1309 = vsel %vm30, %v1210, 0
    %1311 = vmatprep.subr.mxu0 0.0
    %1312 = vmatpush1.xpose.msra.mxu0 %v1306
    %1313 = vmatprep.subr.mxu0 0.0
    %1314 = vmatpush1.xpose.msra.mxu0 %v1309
    %1315 = vmatprep.subr.mxu0 0.0
    %1316 = vmatpush1.xpose.msra.mxu0 0.0
    %1317 = vmatprep.subr.mxu0 0.0
    %1318 = vmatpush1.xpose.msra.mxu0 0.0
    %1319 = vmatprep.subr.mxu0 0.0
    %1320 = vmatpush1.xpose.msra.mxu0 0.0
    %1321 = vmatprep.subr.mxu0 0.0
    %1322 = vmatpush1.xpose.msra.mxu0 0.0
    %1323 = vmatprep.subr.mxu0 0.0
    %1324 = vmatpush1.xpose.msra.mxu0 0.0
    %1325 = vmatprep.subr.mxu0 0.0
    %1326 = vmatpush1.xpose.msra.mxu0 0.0
    %1327 = vmatprep.subr.mxu0 0.0
    %1328 = vmatpush1.xpose.msra.mxu0 0.0
    %1329 = vmatprep.subr.mxu0 0.0
    %1330 = vmatpush1.xpose.msra.mxu0 0.0
    %1331 = vmatprep.subr.mxu0 0.0
    %1332 = vmatpush1.xpose.msra.mxu0 0.0
    %1333 = vmatprep.subr.mxu0 0.0
    %1334 = vmatpush1.xpose.msra.mxu0 0.0
    %1335 = vmatprep.subr.mxu0 0.0
    %1336 = vmatpush1.xpose.msra.mxu0 0.0
    %1337 = vmatprep.subr.mxu0 0.0
    %1338 = vmatpush1.xpose.msra.mxu0 0.0
    %1339 = vmatprep.subr.mxu0 0.0
    %1340 = vmatpush1.xpose.msra.mxu0 0.0
    %1341 = vmatprep.subr.mxu0 0.0
    %1342 = vmatpush1.xpose.msra.mxu0 0.0
    %1343 = vmatprep.subr.mxu0 0.0
    %1344 = vmatpush1.xpose.msra.mxu0 0.0
    %1345 = vmatprep.subr.mxu0 0.0
    %1346 = vmatpush1.xpose.msra.mxu0 0.0
    %1347 = vmatprep.subr.mxu0 0.0
    %1348 = vmatpush1.xpose.msra.mxu0 0.0
    %1349 = vmatprep.subr.mxu0 0.0
    %1350 = vmatpush1.xpose.msra.mxu0 0.0
    %1351 = vmatprep.subr.mxu0 0.0
    %1352 = vmatpush1.xpose.msra.mxu0 0.0
    %1353 = vmatprep.subr.mxu0 0.0
    %1354 = vmatpush1.xpose.msra.mxu0 0.0
    %1355 = vmatprep.subr.mxu0 0.0
    %1356 = vmatpush1.xpose.msra.mxu0 0.0
    %1357 = vmatprep.subr.mxu0 0.0
    %1358 = vmatpush1.xpose.msra.mxu0 0.0
    %1359 = vmatprep.subr.mxu0 0.0
    %1360 = vmatpush1.xpose.msra.mxu0 0.0
    %1361 = vmatprep.subr.mxu0 0.0
    %1362 = vmatpush1.xpose.msra.mxu0 0.0
    %1363 = vmatprep.subr.mxu0 0.0
    %1364 = vmatpush1.xpose.msra.mxu0 0.0
    %1365 = vmatprep.subr.mxu0 0.0
    %1366 = vmatpush1.xpose.msra.mxu0 0.0
    %1367 = vmatprep.subr.mxu0 0.0
    %1368 = vmatpush1.xpose.msra.mxu0 0.0
    %1369 = vmatprep.subr.mxu0 0.0
    %1370 = vmatpush1.xpose.msra.mxu0 0.0
    %1371 = vmatprep.subr.mxu0 0.0
    %1372 = vmatpush1.xpose.msra.mxu0 0.0
    %1373 = vmatprep.subr.mxu0 0.0
    %1374 = vmatpush1.xpose.msra.mxu0 0.0
    %1375 = vmatprep.mubr.f32.mxu0 0.0
    %1376 = vmatmul.mubr.f32.gmra.mrb[0].mxu0 %v1300
    %v1377 = vpop.f32.mrb[0].mxu0
    %v1378 = vadd.f32 %v1037, %v1377
    %v1379 = vpop.f32.mrb[0].mxu0
    %1380 = vmatprep.mubr.f32.mxu0 0.0
    %1381 = vmatmul.mubr.f32.gmra.mrb[0].mxu0 %v1303
    %v1382 = vpop.f32.mrb[0].mxu0
    %v1383 = vadd.f32 %v1038, %v1382
    %v1384 = vpop.f32.mrb[0].mxu0
    %1385 = vdwg.mxu0
    %v1386 = vsel %vm373, %v1378, -inf
    %1387 = vmax.xlane.f32.xlu0 %v1386
    %v1388 = vpop.xlane.xlu0 %1387
    %v1389 = vsel %vm373, %v1383, -inf
    %1390 = vmax.xlane.f32.xlu0 %v1389
    %v1391 = vpop.xlane.xlu0 %1390
    %v1392 = vsub.f32 %v1378, %v1388
    %v1393 = vsub.f32 %v1383, %v1391
    %v1394 = vmul.f32 %v1392, 1.442695
    %v1395 = vpow.pop %v1394
    %v1396 = vmul.f32 %v1393, 1.442695
    %v1397 = vpow.pop %v1396
    %v1398 = vsel %vm373, %v1395, 0.0
    %1399 = vadd.xlane.f32.xlu0 %v1398
    %v1400 = vpop.xlane.xlu0 %1399
    %v1401 = vsel %vm373, %v1397, 0.0
    %1402 = vadd.xlane.f32.xlu0 %v1401
    %v1403 = vpop.xlane.xlu0 %1402
    %v1404 = vrcp.pop %v1400
    %v1405 = vmul.f32 %v1395, %v1404
    %v1406 = vrcp.pop %v1403
    %v1407 = vmul.f32 %v1397, %v1406
    %v1409 = vsel %vm373, %v1405, 0
    %v1412 = vsel %vm373, %v1407, 0
    %1414 = vmatprep.subr.mxu0 0.0
    %1415 = vmatpush1.msra.mxu0 %v1289
    %1416 = vmatprep.subr.mxu0 0.0
    %1417 = vmatpush1.msra.mxu0 %v1294
    %1418 = vmatprep.subr.mxu0 0.0
    %1419 = vmatpush1.msra.mxu0 0.0
    %1420 = vmatprep.subr.mxu0 0.0
    %1421 = vmatpush1.msra.mxu0 0.0
    %1422 = vmatprep.subr.mxu0 0.0
    %1423 = vmatpush1.msra.mxu0 0.0
    %1424 = vmatprep.subr.mxu0 0.0
    %1425 = vmatpush1.msra.mxu0 0.0
    %1426 = vmatprep.subr.mxu0 0.0
    %1427 = vmatpush1.msra.mxu0 0.0
    %1428 = vmatprep.subr.mxu0 0.0
    %1429 = vmatpush1.msra.mxu0 0.0
    %1430 = vmatprep.subr.mxu0 0.0
    %1431 = vmatpush1.msra.mxu0 0.0
    %1432 = vmatprep.subr.mxu0 0.0
    %1433 = vmatpush1.msra.mxu0 0.0
    %1434 = vmatprep.subr.mxu0 0.0
    %1435 = vmatpush1.msra.mxu0 0.0
    %1436 = vmatprep.subr.mxu0 0.0
    %1437 = vmatpush1.msra.mxu0 0.0
    %1438 = vmatprep.subr.mxu0 0.0
    %1439 = vmatpush1.msra.mxu0 0.0
    %1440 = vmatprep.subr.mxu0 0.0
    %1441 = vmatpush1.msra.mxu0 0.0
    %1442 = vmatprep.subr.mxu0 0.0
    %1443 = vmatpush1.msra.mxu0 0.0
    %1444 = vmatprep.subr.mxu0 0.0
    %1445 = vmatpush1.msra.mxu0 0.0
    %1446 = vmatprep.subr.mxu0 0.0
    %1447 = vmatpush1.msra.mxu0 0.0
    %1448 = vmatprep.subr.mxu0 0.0
    %1449 = vmatpush1.msra.mxu0 0.0
    %1450 = vmatprep.subr.mxu0 0.0
    %1451 = vmatpush1.msra.mxu0 0.0
    %1452 = vmatprep.subr.mxu0 0.0
    %1453 = vmatpush1.msra.mxu0 0.0
    %1454 = vmatprep.subr.mxu0 0.0
    %1455 = vmatpush1.msra.mxu0 0.0
    %1456 = vmatprep.subr.mxu0 0.0
    %1457 = vmatpush1.msra.mxu0 0.0
    %1458 = vmatprep.subr.mxu0 0.0
    %1459 = vmatpush1.msra.mxu0 0.0
    %1460 = vmatprep.subr.mxu0 0.0
    %1461 = vmatpush1.msra.mxu0 0.0
    %1462 = vmatprep.subr.mxu0 0.0
    %1463 = vmatpush1.msra.mxu0 0.0
    %1464 = vmatprep.subr.mxu0 0.0
    %1465 = vmatpush1.msra.mxu0 0.0
    %1466 = vmatprep.subr.mxu0 0.0
    %1467 = vmatpush1.msra.mxu0 0.0
    %1468 = vmatprep.subr.mxu0 0.0
    %1469 = vmatpush1.msra.mxu0 0.0
    %1470 = vmatprep.subr.mxu0 0.0
    %1471 = vmatpush1.msra.mxu0 0.0
    %1472 = vmatprep.subr.mxu0 0.0
    %1473 = vmatpush1.msra.mxu0 0.0
    %1474 = vmatprep.subr.mxu0 0.0
    %1475 = vmatpush1.msra.mxu0 0.0
    %1476 = vmatprep.subr.mxu0 0.0
    %1477 = vmatpush1.msra.mxu0 0.0
    %1478 = vmatprep.mubr.f32.mxu0 0.0
    %1479 = vmatmul.mubr.f32.gmra.mrb[0].mxu0 %v1409
    %v1480 = vpop.f32.mrb[0].mxu0
    %v1481 = vadd.f32 0.0, %v1480
    %v1482 = vpop.f32.mrb[0].mxu0
    %1483 = vmatprep.mubr.f32.mxu0 0.0
    %1484 = vmatmul.mubr.f32.gmra.mrb[0].mxu0 %v1412
    %v1485 = vpop.f32.mrb[0].mxu0
    %v1486 = vadd.f32 0.0, %v1485
    %v1487 = vpop.f32.mrb[0].mxu0
    %1488 = vdwg.mxu0
    %v1489 = vmul.f32 %v1481, %v283
    %v1490 = vmul.f32 %v1486, %v283
    %v1491 = vmul.f32 %v1121, %v482
    %v1492 = vmul.f32 %v1126, %v482
    %v1494 = vsel %vm30, %v1491, 0
    %v1497 = vsel %vm30, %v1492, 0
    %1499 = vmatprep.subr.mxu0 0.0
    %1500 = vmatpush1.xpose.msra.mxu0 %v1306
    %1501 = vmatprep.subr.mxu0 0.0
    %1502 = vmatpush1.xpose.msra.mxu0 %v1309
    %1503 = vmatprep.subr.mxu0 0.0
    %1504 = vmatpush1.xpose.msra.mxu0 0.0
    %1505 = vmatprep.subr.mxu0 0.0
    %1506 = vmatpush1.xpose.msra.mxu0 0.0
    %1507 = vmatprep.subr.mxu0 0.0
    %1508 = vmatpush1.xpose.msra.mxu0 0.0
    %1509 = vmatprep.subr.mxu0 0.0
    %1510 = vmatpush1.xpose.msra.mxu0 0.0
    %1511 = vmatprep.subr.mxu0 0.0
    %1512 = vmatpush1.xpose.msra.mxu0 0.0
    %1513 = vmatprep.subr.mxu0 0.0
    %1514 = vmatpush1.xpose.msra.mxu0 0.0
    %1515 = vmatprep.subr.mxu0 0.0
    %1516 = vmatpush1.xpose.msra.mxu0 0.0
    %1517 = vmatprep.subr.mxu0 0.0
    %1518 = vmatpush1.xpose.msra.mxu0 0.0
    %1519 = vmatprep.subr.mxu0 0.0
    %1520 = vmatpush1.xpose.msra.mxu0 0.0
    %1521 = vmatprep.subr.mxu0 0.0
    %1522 = vmatpush1.xpose.msra.mxu0 0.0
    %1523 = vmatprep.subr.mxu0 0.0
    %1524 = vmatpush1.xpose.msra.mxu0 0.0
    %1525 = vmatprep.subr.mxu0 0.0
    %1526 = vmatpush1.xpose.msra.mxu0 0.0
    %1527 = vmatprep.subr.mxu0 0.0
    %1528 = vmatpush1.xpose.msra.mxu0 0.0
    %1529 = vmatprep.subr.mxu0 0.0
    %1530 = vmatpush1.xpose.msra.mxu0 0.0
    %1531 = vmatprep.subr.mxu0 0.0
    %1532 = vmatpush1.xpose.msra.mxu0 0.0
    %1533 = vmatprep.subr.mxu0 0.0
    %1534 = vmatpush1.xpose.msra.mxu0 0.0
    %1535 = vmatprep.subr.mxu0 0.0
    %1536 = vmatpush1.xpose.msra.mxu0 0.0
    %1537 = vmatprep.subr.mxu0 0.0
    %1538 = vmatpush1.xpose.msra.mxu0 0.0
    %1539 = vmatprep.subr.mxu0 0.0
    %1540 = vmatpush1.xpose.msra.mxu0 0.0
    %1541 = vmatprep.subr.mxu0 0.0
    %1542 = vmatpush1.xpose.msra.mxu0 0.0
    %1543 = vmatprep.subr.mxu0 0.0
    %1544 = vmatpush1.xpose.msra.mxu0 0.0
    %1545 = vmatprep.subr.mxu0 0.0
    %1546 = vmatpush1.xpose.msra.mxu0 0.0
    %1547 = vmatprep.subr.mxu0 0.0
    %1548 = vmatpush1.xpose.msra.mxu0 0.0
    %1549 = vmatprep.subr.mxu0 0.0
    %1550 = vmatpush1.xpose.msra.mxu0 0.0
    %1551 = vmatprep.subr.mxu0 0.0
    %1552 = vmatpush1.xpose.msra.mxu0 0.0
    %1553 = vmatprep.subr.mxu0 0.0
    %1554 = vmatpush1.xpose.msra.mxu0 0.0
    %1555 = vmatprep.subr.mxu0 0.0
    %1556 = vmatpush1.xpose.msra.mxu0 0.0
    %1557 = vmatprep.subr.mxu0 0.0
    %1558 = vmatpush1.xpose.msra.mxu0 0.0
    %1559 = vmatprep.subr.mxu0 0.0
    %1560 = vmatpush1.xpose.msra.mxu0 0.0
    %1561 = vmatprep.subr.mxu0 0.0
    %1562 = vmatpush1.xpose.msra.mxu0 0.0
    %1563 = vmatprep.mubr.f32.mxu0 0.0
    %1564 = vmatmul.mubr.f32.gmra.mrb[0].mxu0 %v1494
    %v1565 = vpop.f32.mrb[0].mxu0
    %v1566 = vadd.f32 %v1037, %v1565
    %v1567 = vpop.f32.mrb[0].mxu0
    %1568 = vmatprep.mubr.f32.mxu0 0.0
    %1569 = vmatmul.mubr.f32.gmra.mrb[0].mxu0 %v1497
    %v1570 = vpop.f32.mrb[0].mxu0
    %v1571 = vadd.f32 %v1038, %v1570
    %v1572 = vpop.f32.mrb[0].mxu0
    %1573 = vdwg.mxu0
    %v1574 = vsel %vm373, %v1566, -inf
    %1575 = vmax.xlane.f32.xlu0 %v1574
    %v1576 = vpop.xlane.xlu0 %1575
    %v1577 = vsel %vm373, %v1571, -inf
    %1578 = vmax.xlane.f32.xlu0 %v1577
    %v1579 = vpop.xlane.xlu0 %1578
    %v1580 = vsub.f32 %v1566, %v1576
    %v1581 = vsub.f32 %v1571, %v1579
    %v1582 = vmul.f32 %v1580, 1.442695
    %v1583 = vpow.pop %v1582
    %v1584 = vmul.f32 %v1581, 1.442695
    %v1585 = vpow.pop %v1584
    %v1586 = vsel %vm373, %v1583, 0.0
    %1587 = vadd.xlane.f32.xlu0 %v1586
    %v1588 = vpop.xlane.xlu0 %1587
    %v1589 = vsel %vm373, %v1585, 0.0
    %1590 = vadd.xlane.f32.xlu0 %v1589
    %v1591 = vpop.xlane.xlu0 %1590
    %v1592 = vrcp.pop %v1588
    %v1593 = vmul.f32 %v1583, %v1592
    %v1594 = vrcp.pop %v1591
    %v1595 = vmul.f32 %v1585, %v1594
    %v1597 = vsel %vm373, %v1593, 0
    %v1600 = vsel %vm373, %v1595, 0
    %1602 = vmatprep.subr.mxu0 0.0
    %1603 = vmatpush1.msra.mxu0 %v1289
    %1604 = vmatprep.subr.mxu0 0.0
    %1605 = vmatpush1.msra.mxu0 %v1294
    %1606 = vmatprep.subr.mxu0 0.0
    %1607 = vmatpush1.msra.mxu0 0.0
    %1608 = vmatprep.subr.mxu0 0.0
    %1609 = vmatpush1.msra.mxu0 0.0
    %1610 = vmatprep.subr.mxu0 0.0
    %1611 = vmatpush1.msra.mxu0 0.0
    %1612 = vmatprep.subr.mxu0 0.0
    %1613 = vmatpush1.msra.mxu0 0.0
    %1614 = vmatprep.subr.mxu0 0.0
    %1615 = vmatpush1.msra.mxu0 0.0
    %1616 = vmatprep.subr.mxu0 0.0
    %1617 = vmatpush1.msra.mxu0 0.0
    %1618 = vmatprep.subr.mxu0 0.0
    %1619 = vmatpush1.msra.mxu0 0.0
    %1620 = vmatprep.subr.mxu0 0.0
    %1621 = vmatpush1.msra.mxu0 0.0
    %1622 = vmatprep.subr.mxu0 0.0
    %1623 = vmatpush1.msra.mxu0 0.0
    %1624 = vmatprep.subr.mxu0 0.0
    %1625 = vmatpush1.msra.mxu0 0.0
    %1626 = vmatprep.subr.mxu0 0.0
    %1627 = vmatpush1.msra.mxu0 0.0
    %1628 = vmatprep.subr.mxu0 0.0
    %1629 = vmatpush1.msra.mxu0 0.0
    %1630 = vmatprep.subr.mxu0 0.0
    %1631 = vmatpush1.msra.mxu0 0.0
    %1632 = vmatprep.subr.mxu0 0.0
    %1633 = vmatpush1.msra.mxu0 0.0
    %1634 = vmatprep.subr.mxu0 0.0
    %1635 = vmatpush1.msra.mxu0 0.0
    %1636 = vmatprep.subr.mxu0 0.0
    %1637 = vmatpush1.msra.mxu0 0.0
    %1638 = vmatprep.subr.mxu0 0.0
    %1639 = vmatpush1.msra.mxu0 0.0
    %1640 = vmatprep.subr.mxu0 0.0
    %1641 = vmatpush1.msra.mxu0 0.0
    %1642 = vmatprep.subr.mxu0 0.0
    %1643 = vmatpush1.msra.mxu0 0.0
    %1644 = vmatprep.subr.mxu0 0.0
    %1645 = vmatpush1.msra.mxu0 0.0
    %1646 = vmatprep.subr.mxu0 0.0
    %1647 = vmatpush1.msra.mxu0 0.0
    %1648 = vmatprep.subr.mxu0 0.0
    %1649 = vmatpush1.msra.mxu0 0.0
    %1650 = vmatprep.subr.mxu0 0.0
    %1651 = vmatpush1.msra.mxu0 0.0
    %1652 = vmatprep.subr.mxu0 0.0
    %1653 = vmatpush1.msra.mxu0 0.0
    %1654 = vmatprep.subr.mxu0 0.0
    %1655 = vmatpush1.msra.mxu0 0.0
    %1656 = vmatprep.subr.mxu0 0.0
    %1657 = vmatpush1.msra.mxu0 0.0
    %1658 = vmatprep.subr.mxu0 0.0
    %1659 = vmatpush1.msra.mxu0 0.0
    %1660 = vmatprep.subr.mxu0 0.0
    %1661 = vmatpush1.msra.mxu0 0.0
    %1662 = vmatprep.subr.mxu0 0.0
    %1663 = vmatpush1.msra.mxu0 0.0
    %1664 = vmatprep.subr.mxu0 0.0
    %1665 = vmatpush1.msra.mxu0 0.0
    %1666 = vmatprep.mubr.f32.mxu0 0.0
    %1667 = vmatmul.mubr.f32.gmra.mrb[0].mxu0 %v1597
    %v1668 = vpop.f32.mrb[0].mxu0
    %v1669 = vadd.f32 0.0, %v1668
    %v1670 = vpop.f32.mrb[0].mxu0
    %1671 = vmatprep.mubr.f32.mxu0 0.0
    %1672 = vmatmul.mubr.f32.gmra.mrb[0].mxu0 %v1600
    %v1673 = vpop.f32.mrb[0].mxu0
    %v1674 = vadd.f32 0.0, %v1673
    %v1675 = vpop.f32.mrb[0].mxu0
    %1676 = vdwg.mxu0
    %v1677 = vmul.f32 %v1669, %v482
    %v1678 = vmul.f32 %v1674, %v482
    %v1679 = vadd.f32 %v1489, %v1677
    %v1680 = vadd.f32 %v1490, %v1678
    %v1681 = vld [vmem:[%s2 + $0x140] sm:$0xff]
    %v1682 = vld [vmem:[%s2 + $0x148] sm:$0xff]
    %v1683 = vld [vmem:[%s2 + $0x150] sm:$0xff]
    %v1684 = vld [vmem:[%s2 + $0x158] sm:$0xff]
    %v1685 = vld [vmem:[%s2 + $0x27d] sm:$0x1]
    %v1686 = vlaneseq
    %v1687 = vshrl.u32 %v1686, 7
    %v1688 = vsub.s32 0, %v1687
    %v1689 = vrot.slane %v1685, %v1688
    %v1691 = vsel %vm30, %v1679, 0
    %v1694 = vsel %vm30, %v1680, 0
    %1696 = vmatprep.subr.mxu0 0.0
    %1697 = vmatpush1.msra.mxu0 %v1681
    %1698 = vmatprep.subr.mxu0 0.0
    %1699 = vmatpush1.msra.mxu0 %v1682
    %1700 = vmatprep.subr.mxu0 0.0
    %1701 = vmatpush1.msra.mxu0 %v1683
    %1702 = vmatprep.subr.mxu0 0.0
    %1703 = vmatpush1.msra.mxu0 %v1684
    %1704 = vmatprep.subr.mxu0 0.0
    %1705 = vmatpush1.msra.mxu0 0.0
    %1706 = vmatprep.subr.mxu0 0.0
    %1707 = vmatpush1.msra.mxu0 0.0
    %1708 = vmatprep.subr.mxu0 0.0
    %1709 = vmatpush1.msra.mxu0 0.0
    %1710 = vmatprep.subr.mxu0 0.0
    %1711 = vmatpush1.msra.mxu0 0.0
    %1712 = vmatprep.subr.mxu0 0.0
    %1713 = vmatpush1.msra.mxu0 0.0
    %1714 = vmatprep.subr.mxu0 0.0
    %1715 = vmatpush1.msra.mxu0 0.0
    %1716 = vmatprep.subr.mxu0 0.0
    %1717 = vmatpush1.msra.mxu0 0.0
    %1718 = vmatprep.subr.mxu0 0.0
    %1719 = vmatpush1.msra.mxu0 0.0
    %1720 = vmatprep.subr.mxu0 0.0
    %1721 = vmatpush1.msra.mxu0 0.0
    %1722 = vmatprep.subr.mxu0 0.0
    %1723 = vmatpush1.msra.mxu0 0.0
    %1724 = vmatprep.subr.mxu0 0.0
    %1725 = vmatpush1.msra.mxu0 0.0
    %1726 = vmatprep.subr.mxu0 0.0
    %1727 = vmatpush1.msra.mxu0 0.0
    %1728 = vmatprep.subr.mxu0 0.0
    %1729 = vmatpush1.msra.mxu0 0.0
    %1730 = vmatprep.subr.mxu0 0.0
    %1731 = vmatpush1.msra.mxu0 0.0
    %1732 = vmatprep.subr.mxu0 0.0
    %1733 = vmatpush1.msra.mxu0 0.0
    %1734 = vmatprep.subr.mxu0 0.0
    %1735 = vmatpush1.msra.mxu0 0.0
    %1736 = vmatprep.subr.mxu0 0.0
    %1737 = vmatpush1.msra.mxu0 0.0
    %1738 = vmatprep.subr.mxu0 0.0
    %1739 = vmatpush1.msra.mxu0 0.0
    %1740 = vmatprep.subr.mxu0 0.0
    %1741 = vmatpush1.msra.mxu0 0.0
    %1742 = vmatprep.subr.mxu0 0.0
    %1743 = vmatpush1.msra.mxu0 0.0
    %1744 = vmatprep.subr.mxu0 0.0
    %1745 = vmatpush1.msra.mxu0 0.0
    %1746 = vmatprep.subr.mxu0 0.0
    %1747 = vmatpush1.msra.mxu0 0.0
    %1748 = vmatprep.subr.mxu0 0.0
    %1749 = vmatpush1.msra.mxu0 0.0
    %1750 = vmatprep.subr.mxu0 0.0
    %1751 = vmatpush1.msra.mxu0 0.0
    %1752 = vmatprep.subr.mxu0 0.0
    %1753 = vmatpush1.msra.mxu0 0.0
    %1754 = vmatprep.subr.mxu0 0.0
    %1755 = vmatpush1.msra.mxu0 0.0
    %1756 = vmatprep.subr.mxu0 0.0
    %1757 = vmatpush1.msra.mxu0 0.0
    %1758 = vmatprep.subr.mxu0 0.0
    %1759 = vmatpush1.msra.mxu0 0.0
    %1760 = vmatprep.mubr.f32.mxu0 0.0
    %1761 = vmatmul.mubr.f32.gmra.mrb[0].mxu0 %v1691
    %v1762 = vpop.f32.mrb[0].mxu0
    %v1763 = vadd.f32 %v1689, %v1762
    %v1764 = vpop.f32.mrb[0].mxu0
    %1765 = vmatprep.mubr.f32.mxu0 0.0
    %1766 = vmatmul.mubr.f32.gmra.mrb[0].mxu0 %v1694
    %v1767 = vpop.f32.mrb[0].mxu0
    %v1768 = vadd.f32 %v1689, %v1767
    %v1769 = vpop.f32.mrb[0].mxu0
    %1770 = vdwg.mxu0
    %v1771 = vadd.f32 %v1035, %v1763
    %v1772 = vadd.f32 %v1036, %v1768
    %v1773 = vsel %vm30, %v1771, 0.0
    %1774 = vadd.xlane.f32.xlu0 %v1773
    %v1775 = vpop.xlane.xlu0 %1774
    %v1776 = vsel %vm30, %v1772, 0.0
    %1777 = vadd.xlane.f32.xlu0 %v1776
    %v1778 = vpop.xlane.xlu0 %1777
    %v1779 = vmul.f32 %v1775, %v771
    %v1780 = vmul.f32 %v1778, %v771
    %v1781 = vsub.f32 %v1771, %v1779
    %v1782 = vsub.f32 %v1772, %v1780
    %v1783 = vmul.f32 %v1781, %v1781
    %v1784 = vmul.f32 %v1782, %v1782
    %v1785 = vsel %vm30, %v1783, 0.0
    %1786 = vadd.xlane.f32.xlu0 %v1785
    %v1787 = vpop.xlane.xlu0 %1786
    %v1788 = vsel %vm30, %v1784, 0.0
    %1789 = vadd.xlane.f32.xlu0 %v1788
    %v1790 = vpop.xlane.xlu0 %1789
    %v1791 = vmul.f32 %v1787, %v771
    %v1792 = vmul.f32 %v1790, %v771
    %v1793 = vadd.f32 %v1791, 1e-05
    %v1794 = vadd.f32 %v1792, 1e-05
    %v1795 = vrsqrt.pop %v1793
    %v1796 = vrsqrt.pop %v1794
    %v1797 = vmul.f32 %v1781, %v1795
    %v1798 = vmul.f32 %v1782, %v1796
    %v1799 = vld [vmem:[%s2 + $0x284] sm:$0x1]
    %v1800 = vlaneseq
    %v1801 = vshrl.u32 %v1800, 7
    %v1802 = vsub.s32 0, %v1801
    %v1803 = vrot.slane %v1799, %v1802
    %v1804 = vmul.f32 %v1797, %v1803
    %v1805 = vmul.f32 %v1798, %v1803
    %v1806 = vld [vmem:[%s2 + $0x285] sm:$0x1]
    %v1807 = vlaneseq
    %v1808 = vshrl.u32 %v1807, 7
    %v1809 = vsub.s32 0, %v1808
    %v1810 = vrot.slane %v1806, %v1809
    %v1811 = vadd.f32 %v1804, %v1810
    %v1812 = vadd.f32 %v1805, %v1810
    %v1813 = vld [vmem:[%s2 + $0x260] sm:$0xff]
    %v1814 = vld [vmem:[%s2 + $0x268] sm:$0xff]
    %v1815 = vld [vmem:[%s2 + $0x160] sm:$0xff]
    %v1816 = vld [vmem:[%s2 + $0x168] sm:$0xff]
    %v1817 = vld [vmem:[%s2 + $0x170] sm:$0xff]
    %v1818 = vld [vmem:[%s2 + $0x178] sm:$0xff]
    %v1819 = vld [vmem:[%s2 + $0x27e] sm:$0x1]
    %v1820 = vlaneseq
    %v1821 = vshrl.u32 %v1820, 7
    %v1822 = vsub.s32 0, %v1821
    %v1823 = vrot.slane %v1819, %v1822
    %v1825 = vsel %vm30, %v1811, 0
    %v1828 = vsel %vm30, %v1812, 0
    %1830 = vmatprep.subr.mxu0 0.0
    %1831 = vmatpush1.msra.mxu0 %v1815
    %1832 = vmatprep.subr.mxu0 0.0
    %1833 = vmatpush1.msra.mxu0 %v1816
    %1834 = vmatprep.subr.mxu0 0.0
    %1835 = vmatpush1.msra.mxu0 %v1817
    %1836 = vmatprep.subr.mxu0 0.0
    %1837 = vmatpush1.msra.mxu0 %v1818
    %1838 = vmatprep.subr.mxu0 0.0
    %1839 = vmatpush1.msra.mxu0 0.0
    %1840 = vmatprep.subr.mxu0 0.0
    %1841 = vmatpush1.msra.mxu0 0.0
    %1842 = vmatprep.subr.mxu0 0.0
    %1843 = vmatpush1.msra.mxu0 0.0
    %1844 = vmatprep.subr.mxu0 0.0
    %1845 = vmatpush1.msra.mxu0 0.0
    %1846 = vmatprep.subr.mxu0 0.0
    %1847 = vmatpush1.msra.mxu0 0.0
    %1848 = vmatprep.subr.mxu0 0.0
    %1849 = vmatpush1.msra.mxu0 0.0
    %1850 = vmatprep.subr.mxu0 0.0
    %1851 = vmatpush1.msra.mxu0 0.0
    %1852 = vmatprep.subr.mxu0 0.0
    %1853 = vmatpush1.msra.mxu0 0.0
    %1854 = vmatprep.subr.mxu0 0.0
    %1855 = vmatpush1.msra.mxu0 0.0
    %1856 = vmatprep.subr.mxu0 0.0
    %1857 = vmatpush1.msra.mxu0 0.0
    %1858 = vmatprep.subr.mxu0 0.0
    %1859 = vmatpush1.msra.mxu0 0.0
    %1860 = vmatprep.subr.mxu0 0.0
    %1861 = vmatpush1.msra.mxu0 0.0
    %1862 = vmatprep.subr.mxu0 0.0
    %1863 = vmatpush1.msra.mxu0 0.0
    %1864 = vmatprep.subr.mxu0 0.0
    %1865 = vmatpush1.msra.mxu0 0.0
    %1866 = vmatprep.subr.mxu0 0.0
    %1867 = vmatpush1.msra.mxu0 0.0
    %1868 = vmatprep.subr.mxu0 0.0
    %1869 = vmatpush1.msra.mxu0 0.0
    %1870 = vmatprep.subr.mxu0 0.0
    %1871 = vmatpush1.msra.mxu0 0.0
    %1872 = vmatprep.subr.mxu0 0.0
    %1873 = vmatpush1.msra.mxu0 0.0
    %1874 = vmatprep.subr.mxu0 0.0
    %1875 = vmatpush1.msra.mxu0 0.0
    %1876 = vmatprep.subr.mxu0 0.0
    %1877 = vmatpush1.msra.mxu0 0.0
    %1878 = vmatprep.subr.mxu0 0.0
    %1879 = vmatpush1.msra.mxu0 0.0
    %1880 = vmatprep.subr.mxu0 0.0
    %1881 = vmatpush1.msra.mxu0 0.0
    %1882 = vmatprep.subr.mxu0 0.0
    %1883 = vmatpush1.msra.mxu0 0.0
    %1884 = vmatprep.subr.mxu0 0.0
    %1885 = vmatpush1.msra.mxu0 0.0
    %1886 = vmatprep.subr.mxu0 0.0
    %1887 = vmatpush1.msra.mxu0 0.0
    %1888 = vmatprep.subr.mxu0 0.0
    %1889 = vmatpush1.msra.mxu0 0.0
    %1890 = vmatprep.subr.mxu0 0.0
    %1891 = vmatpush1.msra.mxu0 0.0
    %1892 = vmatprep.subr.mxu0 0.0
    %1893 = vmatpush1.msra.mxu0 0.0
    %1894 = vmatprep.mubr.f32.mxu0 0.0
    %1895 = vmatmul.mubr.f32.gmra.mrb[0].mxu0 %v1825
    %v1896 = vpop.f32.mrb[0].mxu0
    %v1897 = vadd.f32 %v1823, %v1896
    %v1898 = vpop.f32.mrb[0].mxu0
    %1899 = vmatprep.mubr.f32.mxu0 0.0
    %1900 = vmatmul.mubr.f32.gmra.mrb[0].mxu0 %v1828
    %v1901 = vpop.f32.mrb[0].mxu0
    %v1902 = vadd.f32 %v1823, %v1901
    %v1903 = vpop.f32.mrb[0].mxu0
    %1904 = vdwg.mxu0
    %v1905 = vld [vmem:[%s2 + $0x180] sm:$0xff]
    %v1906 = vld [vmem:[%s2 + $0x188] sm:$0xff]
    %v1907 = vld [vmem:[%s2 + $0x190] sm:$0xff]
    %v1908 = vld [vmem:[%s2 + $0x198] sm:$0xff]
    %v1909 = vld [vmem:[%s2 + $0x27f] sm:$0x1]
    %v1910 = vlaneseq
    %v1911 = vshrl.u32 %v1910, 7
    %v1912 = vsub.s32 0, %v1911
    %v1913 = vrot.slane %v1909, %v1912
    %v1915 = vsel %vm30, %v1033, 0
    %v1918 = vsel %vm30, %v1034, 0
    %1920 = vmatprep.subr.mxu0 0.0
    %1921 = vmatpush1.msra.mxu0 %v1905
    %1922 = vmatprep.subr.mxu0 0.0
    %1923 = vmatpush1.msra.mxu0 %v1906
    %1924 = vmatprep.subr.mxu0 0.0
    %1925 = vmatpush1.msra.mxu0 %v1907
    %1926 = vmatprep.subr.mxu0 0.0
    %1927 = vmatpush1.msra.mxu0 %v1908
    %1928 = vmatprep.subr.mxu0 0.0
    %1929 = vmatpush1.msra.mxu0 0.0
    %1930 = vmatprep.subr.mxu0 0.0
    %1931 = vmatpush1.msra.mxu0 0.0
    %1932 = vmatprep.subr.mxu0 0.0
    %1933 = vmatpush1.msra.mxu0 0.0
    %1934 = vmatprep.subr.mxu0 0.0
    %1935 = vmatpush1.msra.mxu0 0.0
    %1936 = vmatprep.subr.mxu0 0.0
    %1937 = vmatpush1.msra.mxu0 0.0
    %1938 = vmatprep.subr.mxu0 0.0
    %1939 = vmatpush1.msra.mxu0 0.0
    %1940 = vmatprep.subr.mxu0 0.0
    %1941 = vmatpush1.msra.mxu0 0.0
    %1942 = vmatprep.subr.mxu0 0.0
    %1943 = vmatpush1.msra.mxu0 0.0
    %1944 = vmatprep.subr.mxu0 0.0
    %1945 = vmatpush1.msra.mxu0 0.0
    %1946 = vmatprep.subr.mxu0 0.0
    %1947 = vmatpush1.msra.mxu0 0.0
    %1948 = vmatprep.subr.mxu0 0.0
    %1949 = vmatpush1.msra.mxu0 0.0
    %1950 = vmatprep.subr.mxu0 0.0
    %1951 = vmatpush1.msra.mxu0 0.0
    %1952 = vmatprep.subr.mxu0 0.0
    %1953 = vmatpush1.msra.mxu0 0.0
    %1954 = vmatprep.subr.mxu0 0.0
    %1955 = vmatpush1.msra.mxu0 0.0
    %1956 = vmatprep.subr.mxu0 0.0
    %1957 = vmatpush1.msra.mxu0 0.0
    %1958 = vmatprep.subr.mxu0 0.0
    %1959 = vmatpush1.msra.mxu0 0.0
    %1960 = vmatprep.subr.mxu0 0.0
    %1961 = vmatpush1.msra.mxu0 0.0
    %1962 = vmatprep.subr.mxu0 0.0
    %1963 = vmatpush1.msra.mxu0 0.0
    %1964 = vmatprep.subr.mxu0 0.0
    %1965 = vmatpush1.msra.mxu0 0.0
    %1966 = vmatprep.subr.mxu0 0.0
    %1967 = vmatpush1.msra.mxu0 0.0
    %1968 = vmatprep.subr.mxu0 0.0
    %1969 = vmatpush1.msra.mxu0 0.0
    %1970 = vmatprep.subr.mxu0 0.0
    %1971 = vmatpush1.msra.mxu0 0.0
    %1972 = vmatprep.subr.mxu0 0.0
    %1973 = vmatpush1.msra.mxu0 0.0
    %1974 = vmatprep.subr.mxu0 0.0
    %1975 = vmatpush1.msra.mxu0 0.0
    %1976 = vmatprep.subr.mxu0 0.0
    %1977 = vmatpush1.msra.mxu0 0.0
    %1978 = vmatprep.subr.mxu0 0.0
    %1979 = vmatpush1.msra.mxu0 0.0
    %1980 = vmatprep.subr.mxu0 0.0
    %1981 = vmatpush1.msra.mxu0 0.0
    %1982 = vmatprep.subr.mxu0 0.0
    %1983 = vmatpush1.msra.mxu0 0.0
    %1984 = vmatprep.mubr.f32.mxu0 0.0
    %1985 = vmatmul.mubr.f32.gmra.mrb[0].mxu0 %v1915
    %v1986 = vpop.f32.mrb[0].mxu0
    %v1987 = vadd.f32 %v1913, %v1986
    %v1988 = vpop.f32.mrb[0].mxu0
    %1989 = vmatprep.mubr.f32.mxu0 0.0
    %1990 = vmatmul.mubr.f32.gmra.mrb[0].mxu0 %v1918
    %v1991 = vpop.f32.mrb[0].mxu0
    %v1992 = vadd.f32 %v1913, %v1991
    %v1993 = vpop.f32.mrb[0].mxu0
    %1994 = vdwg.mxu0
    %v1995 = vld [vmem:[%s2 + $0x1a0] sm:$0xff]
    %v1996 = vld [vmem:[%s2 + $0x1a8] sm:$0xff]
    %v1997 = vld [vmem:[%s2 + $0x1b0] sm:$0xff]
    %v1998 = vld [vmem:[%s2 + $0x1b8] sm:$0xff]
    %v1999 = vld [vmem:[%s2 + $0x280] sm:$0x1]
    %v2000 = vlaneseq
    %v2001 = vshrl.u32 %v2000, 7
    %v2002 = vsub.s32 0, %v2001
    %v2003 = vrot.slane %v1999, %v2002
    %2004 = vmatprep.subr.mxu0 0.0
    %2005 = vmatpush1.msra.mxu0 %v1995
    %2006 = vmatprep.subr.mxu0 0.0
    %2007 = vmatpush1.msra.mxu0 %v1996
    %2008 = vmatprep.subr.mxu0 0.0
    %2009 = vmatpush1.msra.mxu0 %v1997
    %2010 = vmatprep.subr.mxu0 0.0
    %2011 = vmatpush1.msra.mxu0 %v1998
    %2012 = vmatprep.subr.mxu0 0.0
    %2013 = vmatpush1.msra.mxu0 0.0
    %2014 = vmatprep.subr.mxu0 0.0
    %2015 = vmatpush1.msra.mxu0 0.0
    %2016 = vmatprep.subr.mxu0 0.0
    %2017 = vmatpush1.msra.mxu0 0.0
    %2018 = vmatprep.subr.mxu0 0.0
    %2019 = vmatpush1.msra.mxu0 0.0
    %2020 = vmatprep.subr.mxu0 0.0
    %2021 = vmatpush1.msra.mxu0 0.0
    %2022 = vmatprep.subr.mxu0 0.0
    %2023 = vmatpush1.msra.mxu0 0.0
    %2024 = vmatprep.subr.mxu0 0.0
    %2025 = vmatpush1.msra.mxu0 0.0
    %2026 = vmatprep.subr.mxu0 0.0
    %2027 = vmatpush1.msra.mxu0 0.0
    %2028 = vmatprep.subr.mxu0 0.0
    %2029 = vmatpush1.msra.mxu0 0.0
    %2030 = vmatprep.subr.mxu0 0.0
    %2031 = vmatpush1.msra.mxu0 0.0
    %2032 = vmatprep.subr.mxu0 0.0
    %2033 = vmatpush1.msra.mxu0 0.0
    %2034 = vmatprep.subr.mxu0 0.0
    %2035 = vmatpush1.msra.mxu0 0.0
    %2036 = vmatprep.subr.mxu0 0.0
    %2037 = vmatpush1.msra.mxu0 0.0
    %2038 = vmatprep.subr.mxu0 0.0
    %2039 = vmatpush1.msra.mxu0 0.0
    %2040 = vmatprep.subr.mxu0 0.0
    %2041 = vmatpush1.msra.mxu0 0.0
    %2042 = vmatprep.subr.mxu0 0.0
    %2043 = vmatpush1.msra.mxu0 0.0
    %2044 = vmatprep.subr.mxu0 0.0
    %2045 = vmatpush1.msra.mxu0 0.0
    %2046 = vmatprep.subr.mxu0 0.0
    %2047 = vmatpush1.msra.mxu0 0.0
    %2048 = vmatprep.subr.mxu0 0.0
    %2049 = vmatpush1.msra.mxu0 0.0
    %2050 = vmatprep.subr.mxu0 0.0
    %2051 = vmatpush1.msra.mxu0 0.0
    %2052 = vmatprep.subr.mxu0 0.0
    %2053 = vmatpush1.msra.mxu0 0.0
    %2054 = vmatprep.subr.mxu0 0.0
    %2055 = vmatpush1.msra.mxu0 0.0
    %2056 = vmatprep.subr.mxu0 0.0
    %2057 = vmatpush1.msra.mxu0 0.0
    %2058 = vmatprep.subr.mxu0 0.0
    %2059 = vmatpush1.msra.mxu0 0.0
    %2060 = vmatprep.subr.mxu0 0.0
    %2061 = vmatpush1.msra.mxu0 0.0
    %2062 = vmatprep.subr.mxu0 0.0
    %2063 = vmatpush1.msra.mxu0 0.0
    %2064 = vmatprep.subr.mxu0 0.0
    %2065 = vmatpush1.msra.mxu0 0.0
    %2066 = vmatprep.subr.mxu0 0.0
    %2067 = vmatpush1.msra.mxu0 0.0
    %2068 = vmatprep.mubr.f32.mxu0 0.0
    %2069 = vmatmul.mubr.f32.gmra.mrb[0].mxu0 %v1915
    %v2070 = vpop.f32.mrb[0].mxu0
    %v2071 = vadd.f32 %v2003, %v2070
    %v2072 = vpop.f32.mrb[0].mxu0
    %2073 = vmatprep.mubr.f32.mxu0 0.0
    %2074 = vmatmul.mubr.f32.gmra.mrb[0].mxu0 %v1918
    %v2075 = vpop.f32.mrb[0].mxu0
    %v2076 = vadd.f32 %v2003, %v2075
    %v2077 = vpop.f32.mrb[0].mxu0
    %2078 = vdwg.mxu0
    %v2079 = vmul.f32 %v1897, %v283
    %v2080 = vmul.f32 %v1902, %v283
    %v2082 = vsel %vm30, %v2079, 0
    %v2085 = vsel %vm30, %v2080, 0
    %v2088 = vsel %vm30, %v1987, 0
    %v2091 = vsel %vm30, %v1992, 0
    %2093 = vmatprep.subr.mxu0 0.0
    %2094 = vmatpush1.xpose.msra.mxu0 %v2088
    %2095 = vmatprep.subr.mxu0 0.0
    %2096 = vmatpush1.xpose.msra.mxu0 %v2091
    %2097 = vmatprep.subr.mxu0 0.0
    %2098 = vmatpush1.xpose.msra.mxu0 0.0
    %2099 = vmatprep.subr.mxu0 0.0
    %2100 = vmatpush1.xpose.msra.mxu0 0.0
    %2101 = vmatprep.subr.mxu0 0.0
    %2102 = vmatpush1.xpose.msra.mxu0 0.0
    %2103 = vmatprep.subr.mxu0 0.0
    %2104 = vmatpush1.xpose.msra.mxu0 0.0
    %2105 = vmatprep.subr.mxu0 0.0
    %2106 = vmatpush1.xpose.msra.mxu0 0.0
    %2107 = vmatprep.subr.mxu0 0.0
    %2108 = vmatpush1.xpose.msra.mxu0 0.0
    %2109 = vmatprep.subr.mxu0 0.0
    %2110 = vmatpush1.xpose.msra.mxu0 0.0
    %2111 = vmatprep.subr.mxu0 0.0
    %2112 = vmatpush1.xpose.msra.mxu0 0.0
    %2113 = vmatprep.subr.mxu0 0.0
    %2114 = vmatpush1.xpose.msra.mxu0 0.0
    %2115 = vmatprep.subr.mxu0 0.0
    %2116 = vmatpush1.xpose.msra.mxu0 0.0
    %2117 = vmatprep.subr.mxu0 0.0
    %2118 = vmatpush1.xpose.msra.mxu0 0.0
    %2119 = vmatprep.subr.mxu0 0.0
    %2120 = vmatpush1.xpose.msra.mxu0 0.0
    %2121 = vmatprep.subr.mxu0 0.0
    %2122 = vmatpush1.xpose.msra.mxu0 0.0
    %2123 = vmatprep.subr.mxu0 0.0
    %2124 = vmatpush1.xpose.msra.mxu0 0.0
    %2125 = vmatprep.subr.mxu0 0.0
    %2126 = vmatpush1.xpose.msra.mxu0 0.0
    %2127 = vmatprep.subr.mxu0 0.0
    %2128 = vmatpush1.xpose.msra.mxu0 0.0
    %2129 = vmatprep.subr.mxu0 0.0
    %2130 = vmatpush1.xpose.msra.mxu0 0.0
    %2131 = vmatprep.subr.mxu0 0.0
    %2132 = vmatpush1.xpose.msra.mxu0 0.0
    %2133 = vmatprep.subr.mxu0 0.0
    %2134 = vmatpush1.xpose.msra.mxu0 0.0
    %2135 = vmatprep.subr.mxu0 0.0
    %2136 = vmatpush1.xpose.msra.mxu0 0.0
    %2137 = vmatprep.subr.mxu0 0.0
    %2138 = vmatpush1.xpose.msra.mxu0 0.0
    %2139 = vmatprep.subr.mxu0 0.0
    %2140 = vmatpush1.xpose.msra.mxu0 0.0
    %2141 = vmatprep.subr.mxu0 0.0
    %2142 = vmatpush1.xpose.msra.mxu0 0.0
    %2143 = vmatprep.subr.mxu0 0.0
    %2144 = vmatpush1.xpose.msra.mxu0 0.0
    %2145 = vmatprep.subr.mxu0 0.0
    %2146 = vmatpush1.xpose.msra.mxu0 0.0
    %2147 = vmatprep.subr.mxu0 0.0
    %2148 = vmatpush1.xpose.msra.mxu0 0.0
    %2149 = vmatprep.subr.mxu0 0.0
    %2150 = vmatpush1.xpose.msra.mxu0 0.0
    %2151 = vmatprep.subr.mxu0 0.0
    %2152 = vmatpush1.xpose.msra.mxu0 0.0
    %2153 = vmatprep.subr.mxu0 0.0
    %2154 = vmatpush1.xpose.msra.mxu0 0.0
    %2155 = vmatprep.subr.mxu0 0.0
    %2156 = vmatpush1.xpose.msra.mxu0 0.0
    %2157 = vmatprep.mubr.f32.mxu0 0.0
    %2158 = vmatmul.mubr.f32.gmra.mrb[0].mxu0 %v2082
    %v2159 = vpop.f32.mrb[0].mxu0
    %v2160 = vadd.f32 %v1813, %v2159
    %v2161 = vpop.f32.mrb[0].mxu0
    %2162 = vmatprep.mubr.f32.mxu0 0.0
    %2163 = vmatmul.mubr.f32.gmra.mrb[0].mxu0 %v2085
    %v2164 = vpop.f32.mrb[0].mxu0
    %v2165 = vadd.f32 %v1814, %v2164
    %v2166 = vpop.f32.mrb[0].mxu0
    %2167 = vdwg.mxu0
    %v2168 = vsel %vm373, %v2160, -inf
    %2169 = vmax.xlane.f32.xlu0 %v2168
    %v2170 = vpop.xlane.xlu0 %2169
    %v2171 = vsel %vm373, %v2165, -inf
    %2172 = vmax.xlane.f32.xlu0 %v2171
    %v2173 = vpop.xlane.xlu0 %2172
    %v2174 = vsub.f32 %v2160, %v2170
    %v2175 = vsub.f32 %v2165, %v2173
    %v2176 = vmul.f32 %v2174, 1.442695
    %v2177 = vpow.pop %v2176
    %v2178 = vmul.f32 %v2175, 1.442695
    %v2179 = vpow.pop %v2178
    %v2180 = vsel %vm373, %v2177, 0.0
    %2181 = vadd.xlane.f32.xlu0 %v2180
    %v2182 = vpop.xlane.xlu0 %2181
    %v2183 = vsel %vm373, %v2179, 0.0
    %2184 = vadd.xlane.f32.xlu0 %v2183
    %v2185 = vpop.xlane.xlu0 %2184
    %v2186 = vrcp.pop %v2182
    %v2187 = vmul.f32 %v2177, %v2186
    %v2188 = vrcp.pop %v2185
    %v2189 = vmul.f32 %v2179, %v2188
    %v2191 = vsel %vm373, %v2187, 0
    %v2194 = vsel %vm373, %v2189, 0
    %2196 = vmatprep.subr.mxu0 0.0
    %2197 = vmatpush1.msra.mxu0 %v2071
    %2198 = vmatprep.subr.mxu0 0.0
    %2199 = vmatpush1.msra.mxu0 %v2076
    %2200 = vmatprep.subr.mxu0 0.0
    %2201 = vmatpush1.msra.mxu0 0.0
    %2202 = vmatprep.subr.mxu0 0.0
    %2203 = vmatpush1.msra.mxu0 0.0
    %2204 = vmatprep.subr.mxu0 0.0
    %2205 = vmatpush1.msra.mxu0 0.0
    %2206 = vmatprep.subr.mxu0 0.0
    %2207 = vmatpush1.msra.mxu0 0.0
    %2208 = vmatprep.subr.mxu0 0.0
    %2209 = vmatpush1.msra.mxu0 0.0
    %2210 = vmatprep.subr.mxu0 0.0
    %2211 = vmatpush1.msra.mxu0 0.0
    %2212 = vmatprep.subr.mxu0 0.0
    %2213 = vmatpush1.msra.mxu0 0.0
    %2214 = vmatprep.subr.mxu0 0.0
    %2215 = vmatpush1.msra.mxu0 0.0
    %2216 = vmatprep.subr.mxu0 0.0
    %2217 = vmatpush1.msra.mxu0 0.0
    %2218 = vmatprep.subr.mxu0 0.0
    %2219 = vmatpush1.msra.mxu0 0.0
    %2220 = vmatprep.subr.mxu0 0.0
    %2221 = vmatpush1.msra.mxu0 0.0
    %2222 = vmatprep.subr.mxu0 0.0
    %2223 = vmatpush1.msra.mxu0 0.0
    %2224 = vmatprep.subr.mxu0 0.0
    %2225 = vmatpush1.msra.mxu0 0.0
    %2226 = vmatprep.subr.mxu0 0.0
    %2227 = vmatpush1.msra.mxu0 0.0
    %2228 = vmatprep.subr.mxu0 0.0
    %2229 = vmatpush1.msra.mxu0 0.0
    %2230 = vmatprep.subr.mxu0 0.0
    %2231 = vmatpush1.msra.mxu0 0.0
    %2232 = vmatprep.subr.mxu0 0.0
    %2233 = vmatpush1.msra.mxu0 0.0
    %2234 = vmatprep.subr.mxu0 0.0
    %2235 = vmatpush1.msra.mxu0 0.0
    %2236 = vmatprep.subr.mxu0 0.0
    %2237 = vmatpush1.msra.mxu0 0.0
    %2238 = vmatprep.subr.mxu0 0.0
    %2239 = vmatpush1.msra.mxu0 0.0
    %2240 = vmatprep.subr.mxu0 0.0
    %2241 = vmatpush1.msra.mxu0 0.0
    %2242 = vmatprep.subr.mxu0 0.0
    %2243 = vmatpush1.msra.mxu0 0.0
    %2244 = vmatprep.subr.mxu0 0.0
    %2245 = vmatpush1.msra.mxu0 0.0
    %2246 = vmatprep.subr.mxu0 0.0
    %2247 = vmatpush1.msra.mxu0 0.0
    %2248 = vmatprep.subr.mxu0 0.0
    %2249 = vmatpush1.msra.mxu0 0.0
    %2250 = vmatprep.subr.mxu0 0.0
    %2251 = vmatpush1.msra.mxu0 0.0
    %2252 = vmatprep.subr.mxu0 0.0
    %2253 = vmatpush1.msra.mxu0 0.0
    %2254 = vmatprep.subr.mxu0 0.0
    %2255 = vmatpush1.msra.mxu0 0.0
    %2256 = vmatprep.subr.mxu0 0.0
    %2257 = vmatpush1.msra.mxu0 0.0
    %2258 = vmatprep.subr.mxu0 0.0
    %2259 = vmatpush1.msra.mxu0 0.0
    %2260 = vmatprep.mubr.f32.mxu0 0.0
    %2261 = vmatmul.mubr.f32.gmra.mrb[0].mxu0 %v2191
    %v2262 = vpop.f32.mrb[0].mxu0
    %v2263 = vadd.f32 0.0, %v2262
    %v2264 = vpop.f32.mrb[0].mxu0
    %2265 = vmatprep.mubr.f32.mxu0 0.0
    %2266 = vmatmul.mubr.f32.gmra.mrb[0].mxu0 %v2194
    %v2267 = vpop.f32.mrb[0].mxu0
    %v2268 = vadd.f32 0.0, %v2267
    %v2269 = vpop.f32.mrb[0].mxu0
    %2270 = vdwg.mxu0
    %v2271 = vmul.f32 %v2263, %v283
    %v2272 = vmul.f32 %v2268, %v283
    %v2273 = vmul.f32 %v1897, %v482
    %v2274 = vmul.f32 %v1902, %v482
    %v2276 = vsel %vm30, %v2273, 0
    %v2279 = vsel %vm30, %v2274, 0
    %2281 = vmatprep.subr.mxu0 0.0
    %2282 = vmatpush1.xpose.msra.mxu0 %v2088
    %2283 = vmatprep.subr.mxu0 0.0
    %2284 = vmatpush1.xpose.msra.mxu0 %v2091
    %2285 = vmatprep.subr.mxu0 0.0
    %2286 = vmatpush1.xpose.msra.mxu0 0.0
    %2287 = vmatprep.subr.mxu0 0.0
    %2288 = vmatpush1.xpose.msra.mxu0 0.0
    %2289 = vmatprep.subr.mxu0 0.0
    %2290 = vmatpush1.xpose.msra.mxu0 0.0
    %2291 = vmatprep.subr.mxu0 0.0
    %2292 = vmatpush1.xpose.msra.mxu0 0.0
    %2293 = vmatprep.subr.mxu0 0.0
    %2294 = vmatpush1.xpose.msra.mxu0 0.0
    %2295 = vmatprep.subr.mxu0 0.0
    %2296 = vmatpush1.xpose.msra.mxu0 0.0
    %2297 = vmatprep.subr.mxu0 0.0
    %2298 = vmatpush1.xpose.msra.mxu0 0.0
    %2299 = vmatprep.subr.mxu0 0.0
    %2300 = vmatpush1.xpose.msra.mxu0 0.0
    %2301 = vmatprep.subr.mxu0 0.0
    %2302 = vmatpush1.xpose.msra.mxu0 0.0
    %2303 = vmatprep.subr.mxu0 0.0
    %2304 = vmatpush1.xpose.msra.mxu0 0.0
    %2305 = vmatprep.subr.mxu0 0.0
    %2306 = vmatpush1.xpose.msra.mxu0 0.0
    %2307 = vmatprep.subr.mxu0 0.0
    %2308 = vmatpush1.xpose.msra.mxu0 0.0
    %2309 = vmatprep.subr.mxu0 0.0
    %2310 = vmatpush1.xpose.msra.mxu0 0.0
    %2311 = vmatprep.subr.mxu0 0.0
    %2312 = vmatpush1.xpose.msra.mxu0 0.0
    %2313 = vmatprep.subr.mxu0 0.0
    %2314 = vmatpush1.xpose.msra.mxu0 0.0
    %2315 = vmatprep.subr.mxu0 0.0
    %2316 = vmatpush1.xpose.msra.mxu0 0.0
    %2317 = vmatprep.subr.mxu0 0.0
    %2318 = vmatpush1.xpose.msra.mxu0 0.0
    %2319 = vmatprep.subr.mxu0 0.0
    %2320 = vmatpush1.xpose.msra.mxu0 0.0
    %2321 = vmatprep.subr.mxu0 0.0
    %2322 = vmatpush1.xpose.msra.mxu0 0.0
    %2323 = vmatprep.subr.mxu0 0.0
    %2324 = vmatpush1.xpose.msra.mxu0 0.0
    %2325 = vmatprep.subr.mxu0 0.0
    %2326 = vmatpush1.xpose.msra.mxu0 0.0
    %2327 = vmatprep.subr.mxu0 0.0
    %2328 = vmatpush1.xpose.msra.mxu0 0.0
    %2329 = vmatprep.subr.mxu0 0.0
    %2330 = vmatpush1.xpose.msra.mxu0 0.0
    %2331 = vmatprep.subr.mxu0 0.0
    %2332 = vmatpush1.xpose.msra.mxu0 0.0
    %2333 = vmatprep.subr.mxu0 0.0
    %2334 = vmatpush1.xpose.msra.mxu0 0.0
    %2335 = vmatprep.subr.mxu0 0.0
    %2336 = vmatpush1.xpose.msra.mxu0 0.0
    %2337 = vmatprep.subr.mxu0 0.0
    %2338 = vmatpush1.xpose.msra.mxu0 0.0
    %2339 = vmatprep.subr.mxu0 0.0
    %2340 = vmatpush1.xpose.msra.mxu0 0.0
    %2341 = vmatprep.subr.mxu0 0.0
    %2342 = vmatpush1.xpose.msra.mxu0 0.0
    %2343 = vmatprep.subr.mxu0 0.0
    %2344 = vmatpush1.xpose.msra.mxu0 0.0
    %2345 = vmatprep.mubr.f32.mxu0 0.0
    %2346 = vmatmul.mubr.f32.gmra.mrb[0].mxu0 %v2276
    %v2347 = vpop.f32.mrb[0].mxu0
    %v2348 = vadd.f32 %v1813, %v2347
    %v2349 = vpop.f32.mrb[0].mxu0
    %2350 = vmatprep.mubr.f32.mxu0 0.0
    %2351 = vmatmul.mubr.f32.gmra.mrb[0].mxu0 %v2279
    %v2352 = vpop.f32.mrb[0].mxu0
    %v2353 = vadd.f32 %v1814, %v2352
    %v2354 = vpop.f32.mrb[0].mxu0
    %2355 = vdwg.mxu0
    %v2356 = vsel %vm373, %v2348, -inf
    %2357 = vmax.xlane.f32.xlu0 %v2356
    %v2358 = vpop.xlane.xlu0 %2357
    %v2359 = vsel %vm373, %v2353, -inf
    %2360 = vmax.xlane.f32.xlu0 %v2359
    %v2361 = vpop.xlane.xlu0 %2360
    %v2362 = vsub.f32 %v2348, %v2358
    %v2363 = vsub.f32 %v2353, %v2361
    %v2364 = vmul.f32 %v2362, 1.442695
    %v2365 = vpow.pop %v2364
    %v2366 = vmul.f32 %v2363, 1.442695
    %v2367 = vpow.pop %v2366
    %v2368 = vsel %vm373, %v2365, 0.0
    %2369 = vadd.xlane.f32.xlu0 %v2368
    %v2370 = vpop.xlane.xlu0 %2369
    %v2371 = vsel %vm373, %v2367, 0.0
    %2372 = vadd.xlane.f32.xlu0 %v2371
    %v2373 = vpop.xlane.xlu0 %2372
    %v2374 = vrcp.pop %v2370
    %v2375 = vmul.f32 %v2365, %v2374
    %v2376 = vrcp.pop %v2373
    %v2377 = vmul.f32 %v2367, %v2376
    %v2379 = vsel %vm373, %v2375, 0
    %v2382 = vsel %vm373, %v2377, 0
    %2384 = vmatprep.subr.mxu0 0.0
    %2385 = vmatpush1.msra.mxu0 %v2071
    %2386 = vmatprep.subr.mxu0 0.0
    %2387 = vmatpush1.msra.mxu0 %v2076
    %2388 = vmatprep.subr.mxu0 0.0
    %2389 = vmatpush1.msra.mxu0 0.0
    %2390 = vmatprep.subr.mxu0 0.0
    %2391 = vmatpush1.msra.mxu0 0.0
    %2392 = vmatprep.subr.mxu0 0.0
    %2393 = vmatpush1.msra.mxu0 0.0
    %2394 = vmatprep.subr.mxu0 0.0
    %2395 = vmatpush1.msra.mxu0 0.0
    %2396 = vmatprep.subr.mxu0 0.0
    %2397 = vmatpush1.msra.mxu0 0.0
    %2398 = vmatprep.subr.mxu0 0.0
    %2399 = vmatpush1.msra.mxu0 0.0
    %2400 = vmatprep.subr.mxu0 0.0
    %2401 = vmatpush1.msra.mxu0 0.0
    %2402 = vmatprep.subr.mxu0 0.0
    %2403 = vmatpush1.msra.mxu0 0.0
    %2404 = vmatprep.subr.mxu0 0.0
    %2405 = vmatpush1.msra.mxu0 0.0
    %2406 = vmatprep.subr.mxu0 0.0
    %2407 = vmatpush1.msra.mxu0 0.0
    %2408 = vmatprep.subr.mxu0 0.0
    %2409 = vmatpush1.msra.mxu0 0.0
    %2410 = vmatprep.subr.mxu0 0.0
    %2411 = vmatpush1.msra.mxu0 0.0
    %2412 = vmatprep.subr.mxu0 0.0
    %2413 = vmatpush1.msra.mxu0 0.0
    %2414 = vmatprep.subr.mxu0 0.0
    %2415 = vmatpush1.msra.mxu0 0.0
    %2416 = vmatprep.subr.mxu0 0.0
    %2417 = vmatpush1.msra.mxu0 0.0
    %2418 = vmatprep.subr.mxu0 0.0
    %2419 = vmatpush1.msra.mxu0 0.0
    %2420 = vmatprep.subr.mxu0 0.0
    %2421 = vmatpush1.msra.mxu0 0.0
    %2422 = vmatprep.subr.mxu0 0.0
    %2423 = vmatpush1.msra.mxu0 0.0
    %2424 = vmatprep.subr.mxu0 0.0
    %2425 = vmatpush1.msra.mxu0 0.0
    %2426 = vmatprep.subr.mxu0 0.0
    %2427 = vmatpush1.msra.mxu0 0.0
    %2428 = vmatprep.subr.mxu0 0.0
    %2429 = vmatpush1.msra.mxu0 0.0
    %2430 = vmatprep.subr.mxu0 0.0
    %2431 = vmatpush1.msra.mxu0 0.0
    %2432 = vmatprep.subr.mxu0 0.0
    %2433 = vmatpush1.msra.mxu0 0.0
    %2434 = vmatprep.subr.mxu0 0.0
    %2435 = vmatpush1.msra.mxu0 0.0
    %2436 = vmatprep.subr.mxu0 0.0
    %2437 = vmatpush1.msra.mxu0 0.0
    %2438 = vmatprep.subr.mxu0 0.0
    %2439 = vmatpush1.msra.mxu0 0.0
    %2440 = vmatprep.subr.mxu0 0.0
    %2441 = vmatpush1.msra.mxu0 0.0
    %2442 = vmatprep.subr.mxu0 0.0
    %2443 = vmatpush1.msra.mxu0 0.0
    %2444 = vmatprep.subr.mxu0 0.0
    %2445 = vmatpush1.msra.mxu0 0.0
    %2446 = vmatprep.subr.mxu0 0.0
    %2447 = vmatpush1.msra.mxu0 0.0
    %2448 = vmatprep.mubr.f32.mxu0 0.0
    %2449 = vmatmul.mubr.f32.gmra.mrb[0].mxu0 %v2379
    %v2450 = vpop.f32.mrb[0].mxu0
    %v2451 = vadd.f32 0.0, %v2450
    %v2452 = vpop.f32.mrb[0].mxu0
    %2453 = vmatprep.mubr.f32.mxu0 0.0
    %2454 = vmatmul.mubr.f32.gmra.mrb[0].mxu0 %v2382
    %v2455 = vpop.f32.mrb[0].mxu0
    %v2456 = vadd.f32 0.0, %v2455
    %v2457 = vpop.f32.mrb[0].mxu0
    %2458 = vdwg.mxu0
    %v2459 = vmul.f32 %v2451, %v482
    %v2460 = vmul.f32 %v2456, %v482
    %v2461 = vadd.f32 %v2271, %v2459
    %v2462 = vadd.f32 %v2272, %v2460
    %v2463 = vld [vmem:[%s2 + $0x1c0] sm:$0xff]
    %v2464 = vld [vmem:[%s2 + $0x1c8] sm:$0xff]
    %v2465 = vld [vmem:[%s2 + $0x1d0] sm:$0xff]
    %v2466 = vld [vmem:[%s2 + $0x1d8] sm:$0xff]
    %v2467 = vld [vmem:[%s2 + $0x281] sm:$0x1]
    %v2468 = vlaneseq
    %v2469 = vshrl.u32 %v2468, 7
    %v2470 = vsub.s32 0, %v2469
    %v2471 = vrot.slane %v2467, %v2470
    %v2473 = vsel %vm30, %v2461, 0
    %v2476 = vsel %vm30, %v2462, 0
    %2478 = vmatprep.subr.mxu0 0.0
    %2479 = vmatpush1.msra.mxu0 %v2463
    %2480 = vmatprep.subr.mxu0 0.0
    %2481 = vmatpush1.msra.mxu0 %v2464
    %2482 = vmatprep.subr.mxu0 0.0
    %2483 = vmatpush1.msra.mxu0 %v2465
    %2484 = vmatprep.subr.mxu0 0.0
    %2485 = vmatpush1.msra.mxu0 %v2466
    %2486 = vmatprep.subr.mxu0 0.0
    %2487 = vmatpush1.msra.mxu0 0.0
    %2488 = vmatprep.subr.mxu0 0.0
    %2489 = vmatpush1.msra.mxu0 0.0
    %2490 = vmatprep.subr.mxu0 0.0
    %2491 = vmatpush1.msra.mxu0 0.0
    %2492 = vmatprep.subr.mxu0 0.0
    %2493 = vmatpush1.msra.mxu0 0.0
    %2494 = vmatprep.subr.mxu0 0.0
    %2495 = vmatpush1.msra.mxu0 0.0
    %2496 = vmatprep.subr.mxu0 0.0
    %2497 = vmatpush1.msra.mxu0 0.0
    %2498 = vmatprep.subr.mxu0 0.0
    %2499 = vmatpush1.msra.mxu0 0.0
    %2500 = vmatprep.subr.mxu0 0.0
    %2501 = vmatpush1.msra.mxu0 0.0
    %2502 = vmatprep.subr.mxu0 0.0
    %2503 = vmatpush1.msra.mxu0 0.0
    %2504 = vmatprep.subr.mxu0 0.0
    %2505 = vmatpush1.msra.mxu0 0.0
    %2506 = vmatprep.subr.mxu0 0.0
    %2507 = vmatpush1.msra.mxu0 0.0
    %2508 = vmatprep.subr.mxu0 0.0
    %2509 = vmatpush1.msra.mxu0 0.0
    %2510 = vmatprep.subr.mxu0 0.0
    %2511 = vmatpush1.msra.mxu0 0.0
    %2512 = vmatprep.subr.mxu0 0.0
    %2513 = vmatpush1.msra.mxu0 0.0
    %2514 = vmatprep.subr.mxu0 0.0
    %2515 = vmatpush1.msra.mxu0 0.0
    %2516 = vmatprep.subr.mxu0 0.0
    %2517 = vmatpush1.msra.mxu0 0.0
    %2518 = vmatprep.subr.mxu0 0.0
    %2519 = vmatpush1.msra.mxu0 0.0
    %2520 = vmatprep.subr.mxu0 0.0
    %2521 = vmatpush1.msra.mxu0 0.0
    %2522 = vmatprep.subr.mxu0 0.0
    %2523 = vmatpush1.msra.mxu0 0.0
    %2524 = vmatprep.subr.mxu0 0.0
    %2525 = vmatpush1.msra.mxu0 0.0
    %2526 = vmatprep.subr.mxu0 0.0
    %2527 = vmatpush1.msra.mxu0 0.0
    %2528 = vmatprep.subr.mxu0 0.0
    %2529 = vmatpush1.msra.mxu0 0.0
    %2530 = vmatprep.subr.mxu0 0.0
    %2531 = vmatpush1.msra.mxu0 0.0
    %2532 = vmatprep.subr.mxu0 0.0
    %2533 = vmatpush1.msra.mxu0 0.0
    %2534 = vmatprep.subr.mxu0 0.0
    %2535 = vmatpush1.msra.mxu0 0.0
    %2536 = vmatprep.subr.mxu0 0.0
    %2537 = vmatpush1.msra.mxu0 0.0
    %2538 = vmatprep.subr.mxu0 0.0
    %2539 = vmatpush1.msra.mxu0 0.0
    %2540 = vmatprep.subr.mxu0 0.0
    %2541 = vmatpush1.msra.mxu0 0.0
    %2542 = vmatprep.mubr.f32.mxu0 0.0
    %2543 = vmatmul.mubr.f32.gmra.mrb[0].mxu0 %v2473
    %v2544 = vpop.f32.mrb[0].mxu0
    %v2545 = vadd.f32 %v2471, %v2544
    %v2546 = vpop.f32.mrb[0].mxu0
    %2547 = vmatprep.mubr.f32.mxu0 0.0
    %2548 = vmatmul.mubr.f32.gmra.mrb[0].mxu0 %v2476
    %v2549 = vpop.f32.mrb[0].mxu0
    %v2550 = vadd.f32 %v2471, %v2549
    %v2551 = vpop.f32.mrb[0].mxu0
    %2552 = vdwg.mxu0
    %v2553 = vadd.f32 %v1811, %v2545
    %v2554 = vadd.f32 %v1812, %v2550
    %v2555 = vsel %vm30, %v2553, 0.0
    %2556 = vadd.xlane.f32.xlu0 %v2555
    %v2557 = vpop.xlane.xlu0 %2556
    %v2558 = vsel %vm30, %v2554, 0.0
    %2559 = vadd.xlane.f32.xlu0 %v2558
    %v2560 = vpop.xlane.xlu0 %2559
    %v2561 = vmul.f32 %v2557, %v771
    %v2562 = vmul.f32 %v2560, %v771
    %v2563 = vsub.f32 %v2553, %v2561
    %v2564 = vsub.f32 %v2554, %v2562
    %v2565 = vmul.f32 %v2563, %v2563
    %v2566 = vmul.f32 %v2564, %v2564
    %v2567 = vsel %vm30, %v2565, 0.0
    %2568 = vadd.xlane.f32.xlu0 %v2567
    %v2569 = vpop.xlane.xlu0 %2568
    %v2570 = vsel %vm30, %v2566, 0.0
    %2571 = vadd.xlane.f32.xlu0 %v2570
    %v2572 = vpop.xlane.xlu0 %2571
    %v2573 = vmul.f32 %v2569, %v771
    %v2574 = vmul.f32 %v2572, %v771
    %v2575 = vadd.f32 %v2573, 1e-05
    %v2576 = vadd.f32 %v2574, 1e-05
    %v2577 = vrsqrt.pop %v2575
    %v2578 = vrsqrt.pop %v2576
    %v2579 = vmul.f32 %v2563, %v2577
    %v2580 = vmul.f32 %v2564, %v2578
    %v2581 = vld [vmem:[%s2 + $0x286] sm:$0x1]
    %v2582 = vlaneseq
    %v2583 = vshrl.u32 %v2582, 7
    %v2584 = vsub.s32 0, %v2583
    %v2585 = vrot.slane %v2581, %v2584
    %v2586 = vmul.f32 %v2579, %v2585
    %v2587 = vmul.f32 %v2580, %v2585
    %v2588 = vld [vmem:[%s2 + $0x287] sm:$0x1]
    %v2589 = vlaneseq
    %v2590 = vshrl.u32 %v2589, 7
    %v2591 = vsub.s32 0, %v2590
    %v2592 = vrot.slane %v2588, %v2591
    %v2593 = vadd.f32 %v2586, %v2592
    %v2594 = vadd.f32 %v2587, %v2592
    %v2595 = vld [vmem:[%s2 + $0x1e0] sm:$0xff]
    %v2596 = vld [vmem:[%s2 + $0x1e8] sm:$0xff]
    %v2597 = vld [vmem:[%s2 + $0x1f0] sm:$0xff]
    %v2598 = vld [vmem:[%s2 + $0x1f8] sm:$0xff]
    %v2599 = vld [vmem:[%s2 + $0x282] sm:$0x1]
    %v2600 = vlaneseq
    %v2601 = vshrl.u32 %v2600, 7
    %v2602 = vsub.s32 0, %v2601
    %v2603 = vrot.slane %v2599, %v2602
    %v2605 = vsel %vm30, %v2593, 0
    %v2608 = vsel %vm30, %v2594, 0
    %2610 = vmatprep.subr.mxu0 0.0
    %2611 = vmatpush1.msra.mxu0 %v2595
    %2612 = vmatprep.subr.mxu0 0.0
    %2613 = vmatpush1.msra.mxu0 %v2596
    %2614 = vmatprep.subr.mxu0 0.0
    %2615 = vmatpush1.msra.mxu0 %v2597
    %2616 = vmatprep.subr.mxu0 0.0
    %2617 = vmatpush1.msra.mxu0 %v2598
    %2618 = vmatprep.subr.mxu0 0.0
    %2619 = vmatpush1.msra.mxu0 0.0
    %2620 = vmatprep.subr.mxu0 0.0
    %2621 = vmatpush1.msra.mxu0 0.0
    %2622 = vmatprep.subr.mxu0 0.0
    %2623 = vmatpush1.msra.mxu0 0.0
    %2624 = vmatprep.subr.mxu0 0.0
    %2625 = vmatpush1.msra.mxu0 0.0
    %2626 = vmatprep.subr.mxu0 0.0
    %2627 = vmatpush1.msra.mxu0 0.0
    %2628 = vmatprep.subr.mxu0 0.0
    %2629 = vmatpush1.msra.mxu0 0.0
    %2630 = vmatprep.subr.mxu0 0.0
    %2631 = vmatpush1.msra.mxu0 0.0
    %2632 = vmatprep.subr.mxu0 0.0
    %2633 = vmatpush1.msra.mxu0 0.0
    %2634 = vmatprep.subr.mxu0 0.0
    %2635 = vmatpush1.msra.mxu0 0.0
    %2636 = vmatprep.subr.mxu0 0.0
    %2637 = vmatpush1.msra.mxu0 0.0
    %2638 = vmatprep.subr.mxu0 0.0
    %2639 = vmatpush1.msra.mxu0 0.0
    %2640 = vmatprep.subr.mxu0 0.0
    %2641 = vmatpush1.msra.mxu0 0.0
    %2642 = vmatprep.subr.mxu0 0.0
    %2643 = vmatpush1.msra.mxu0 0.0
    %2644 = vmatprep.subr.mxu0 0.0
    %2645 = vmatpush1.msra.mxu0 0.0
    %2646 = vmatprep.subr.mxu0 0.0
    %2647 = vmatpush1.msra.mxu0 0.0
    %2648 = vmatprep.subr.mxu0 0.0
    %2649 = vmatpush1.msra.mxu0 0.0
    %2650 = vmatprep.subr.mxu0 0.0
    %2651 = vmatpush1.msra.mxu0 0.0
    %2652 = vmatprep.subr.mxu0 0.0
    %2653 = vmatpush1.msra.mxu0 0.0
    %2654 = vmatprep.subr.mxu0 0.0
    %2655 = vmatpush1.msra.mxu0 0.0
    %2656 = vmatprep.subr.mxu0 0.0
    %2657 = vmatpush1.msra.mxu0 0.0
    %2658 = vmatprep.subr.mxu0 0.0
    %2659 = vmatpush1.msra.mxu0 0.0
    %2660 = vmatprep.subr.mxu0 0.0
    %2661 = vmatpush1.msra.mxu0 0.0
    %2662 = vmatprep.subr.mxu0 0.0
    %2663 = vmatpush1.msra.mxu0 0.0
    %2664 = vmatprep.subr.mxu0 0.0
    %2665 = vmatpush1.msra.mxu0 0.0
    %2666 = vmatprep.subr.mxu0 0.0
    %2667 = vmatpush1.msra.mxu0 0.0
    %2668 = vmatprep.subr.mxu0 0.0
    %2669 = vmatpush1.msra.mxu0 0.0
    %2670 = vmatprep.subr.mxu0 0.0
    %2671 = vmatpush1.msra.mxu0 0.0
    %2672 = vmatprep.subr.mxu0 0.0
    %2673 = vmatpush1.msra.mxu0 0.0
    %2674 = vmatprep.mubr.f32.mxu0 0.0
    %2675 = vmatmul.mubr.f32.gmra.mrb[0].mxu0 %v2605
    %v2676 = vpop.f32.mrb[0].mxu0
    %v2677 = vadd.f32 %v2603, %v2676
    %v2678 = vpop.f32.mrb[0].mxu0
    %2679 = vmatprep.mubr.f32.mxu0 0.0
    %2680 = vmatmul.mubr.f32.gmra.mrb[0].mxu0 %v2608
    %v2681 = vpop.f32.mrb[0].mxu0
    %v2682 = vadd.f32 %v2603, %v2681
    %v2683 = vpop.f32.mrb[0].mxu0
    %2684 = vdwg.mxu0
    %v2685 = vmax.f32 %v2677, 0.0
    %v2686 = vmax.f32 %v2682, 0.0
    %v2687 = vld [vmem:[%s2 + $0x200] sm:$0xff]
    %v2688 = vld [vmem:[%s2 + $0x208] sm:$0xff]
    %v2689 = vld [vmem:[%s2 + $0x210] sm:$0xff]
    %v2690 = vld [vmem:[%s2 + $0x218] sm:$0xff]
    %v2691 = vld [vmem:[%s2 + $0x220] sm:$0xff]
    %v2692 = vld [vmem:[%s2 + $0x228] sm:$0xff]
    %v2693 = vld [vmem:[%s2 + $0x230] sm:$0xff]
    %v2694 = vld [vmem:[%s2 + $0x238] sm:$0xff]
    %v2695 = vld [vmem:[%s2 + $0x283] sm:$0x1]
    %v2696 = vlaneseq
    %v2697 = vshrl.u32 %v2696, 7
    %v2698 = vsub.s32 0, %v2697
    %v2699 = vrot.slane %v2695, %v2698
    %v2701 = vsel %vm911, %v2685, 0
    %v2704 = vsel %vm911, %v2686, 0
    %2706 = vmatprep.subr.mxu0 0.0
    %2707 = vmatpush1.msra.mxu0 %v2687
    %2708 = vmatprep.subr.mxu0 0.0
    %2709 = vmatpush1.msra.mxu0 %v2688
    %2710 = vmatprep.subr.mxu0 0.0
    %2711 = vmatpush1.msra.mxu0 %v2689
    %2712 = vmatprep.subr.mxu0 0.0
    %2713 = vmatpush1.msra.mxu0 %v2690
    %2714 = vmatprep.subr.mxu0 0.0
    %2715 = vmatpush1.msra.mxu0 %v2691
    %2716 = vmatprep.subr.mxu0 0.0
    %2717 = vmatpush1.msra.mxu0 %v2692
    %2718 = vmatprep.subr.mxu0 0.0
    %2719 = vmatpush1.msra.mxu0 %v2693
    %2720 = vmatprep.subr.mxu0 0.0
    %2721 = vmatpush1.msra.mxu0 %v2694
    %2722 = vmatprep.subr.mxu0 0.0
    %2723 = vmatpush1.msra.mxu0 0.0
    %2724 = vmatprep.subr.mxu0 0.0
    %2725 = vmatpush1.msra.mxu0 0.0
    %2726 = vmatprep.subr.mxu0 0.0
    %2727 = vmatpush1.msra.mxu0 0.0
    %2728 = vmatprep.subr.mxu0 0.0
    %2729 = vmatpush1.msra.mxu0 0.0
    %2730 = vmatprep.subr.mxu0 0.0
    %2731 = vmatpush1.msra.mxu0 0.0
    %2732 = vmatprep.subr.mxu0 0.0
    %2733 = vmatpush1.msra.mxu0 0.0
    %2734 = vmatprep.subr.mxu0 0.0
    %2735 = vmatpush1.msra.mxu0 0.0
    %2736 = vmatprep.subr.mxu0 0.0
    %2737 = vmatpush1.msra.mxu0 0.0
    %2738 = vmatprep.subr.mxu0 0.0
    %2739 = vmatpush1.msra.mxu0 0.0
    %2740 = vmatprep.subr.mxu0 0.0
    %2741 = vmatpush1.msra.mxu0 0.0
    %2742 = vmatprep.subr.mxu0 0.0
    %2743 = vmatpush1.msra.mxu0 0.0
    %2744 = vmatprep.subr.mxu0 0.0
    %2745 = vmatpush1.msra.mxu0 0.0
    %2746 = vmatprep.subr.mxu0 0.0
    %2747 = vmatpush1.msra.mxu0 0.0
    %2748 = vmatprep.subr.mxu0 0.0
    %2749 = vmatpush1.msra.mxu0 0.0
    %2750 = vmatprep.subr.mxu0 0.0
    %2751 = vmatpush1.msra.mxu0 0.0
    %2752 = vmatprep.subr.mxu0 0.0
    %2753 = vmatpush1.msra.mxu0 0.0
    %2754 = vmatprep.subr.mxu0 0.0
    %2755 = vmatpush1.msra.mxu0 0.0
    %2756 = vmatprep.subr.mxu0 0.0
    %2757 = vmatpush1.msra.mxu0 0.0
    %2758 = vmatprep.subr.mxu0 0.0
    %2759 = vmatpush1.msra.mxu0 0.0
    %2760 = vmatprep.subr.mxu0 0.0
    %2761 = vmatpush1.msra.mxu0 0.0
    %2762 = vmatprep.subr.mxu0 0.0
    %2763 = vmatpush1.msra.mxu0 0.0
    %2764 = vmatprep.subr.mxu0 0.0
    %2765 = vmatpush1.msra.mxu0 0.0
    %2766 = vmatprep.subr.mxu0 0.0
    %2767 = vmatpush1.msra.mxu0 0.0
    %2768 = vmatprep.subr.mxu0 0.0
    %2769 = vmatpush1.msra.mxu0 0.0
    %2770 = vmatprep.mubr.f32.mxu0 0.0
    %2771 = vmatmul.mubr.f32.gmra.mrb[0].mxu0 %v2701
    %v2772 = vpop.f32.mrb[0].mxu0
    %v2773 = vadd.f32 %v2699, %v2772
    %v2774 = vpop.f32.mrb[0].mxu0
    %2775 = vmatprep.mubr.f32.mxu0 0.0
    %2776 = vmatmul.mubr.f32.gmra.mrb[0].mxu0 %v2704
    %v2777 = vpop.f32.mrb[0].mxu0
    %v2778 = vadd.f32 %v2699, %v2777
    %v2779 = vpop.f32.mrb[0].mxu0
    %2780 = vdwg.mxu0
    %v2781 = vadd.f32 %v2593, %v2773
    %v2782 = vadd.f32 %v2594, %v2778
    %v2783 = vsel %vm30, %v2781, 0.0
    %2784 = vadd.xlane.f32.xlu0 %v2783
    %v2785 = vpop.xlane.xlu0 %2784
    %v2786 = vsel %vm30, %v2782, 0.0
    %2787 = vadd.xlane.f32.xlu0 %v2786
    %v2788 = vpop.xlane.xlu0 %2787
    %v2789 = vmul.f32 %v2785, %v771
    %v2790 = vmul.f32 %v2788, %v771
    %v2791 = vsub.f32 %v2781, %v2789
    %v2792 = vsub.f32 %v2782, %v2790
    %v2793 = vmul.f32 %v2791, %v2791
    %v2794 = vmul.f32 %v2792, %v2792
    %v2795 = vsel %vm30, %v2793, 0.0
    %2796 = vadd.xlane.f32.xlu0 %v2795
    %v2797 = vpop.xlane.xlu0 %2796
    %v2798 = vsel %vm30, %v2794, 0.0
    %2799 = vadd.xlane.f32.xlu0 %v2798
    %v2800 = vpop.xlane.xlu0 %2799
    %v2801 = vmul.f32 %v2797, %v771
    %v2802 = vmul.f32 %v2800, %v771
    %v2803 = vadd.f32 %v2801, 1e-05
    %v2804 = vadd.f32 %v2802, 1e-05
    %v2805 = vrsqrt.pop %v2803
    %v2806 = vrsqrt.pop %v2804
    %v2807 = vmul.f32 %v2791, %v2805
    %v2808 = vmul.f32 %v2792, %v2806
    %v2809 = vld [vmem:[%s2 + $0x288] sm:$0x1]
    %v2810 = vlaneseq
    %v2811 = vshrl.u32 %v2810, 7
    %v2812 = vsub.s32 0, %v2811
    %v2813 = vrot.slane %v2809, %v2812
    %v2814 = vmul.f32 %v2807, %v2813
    %v2815 = vmul.f32 %v2808, %v2813
    %v2816 = vld [vmem:[%s2 + $0x289] sm:$0x1]
    %v2817 = vlaneseq
    %v2818 = vshrl.u32 %v2817, 7
    %v2819 = vsub.s32 0, %v2818
    %v2820 = vrot.slane %v2816, %v2819
    %v2821 = vadd.f32 %v2814, %v2820
    %v2822 = vadd.f32 %v2815, %v2820
    %2823 = vst.msk [vmem:[#allocation2] sm:$0xff] %vm30, %v2821
    %2824 = vst.msk [vmem:[#allocation2 + $0x8] sm:$0xff] %vm30, %v2822
    // Predicated region
    $region14: #{transformer_forward.1} parent=1 // pred_check
      _
    $region15: #{transformer_forward.1} parent=1 // pred_check_branch
      %2826 = sbr.rel (0) target = $region17
    $region16: #{transformer_forward.1} parent=1 // pred_region
      %s2828 = ssub.s32 256, 256
      %2829 = vsyncadd [#allocation3], %s2828
      %s2830 = sshll.u32 [#allocation2], 4
      %s2831 = int_to_ptr.vmem [resolvable:$true] %s2830
      %2836 = dma.vmem_to_hbm [thread:$0]  %s2831, 256, %s3, [#allocation3], 128, 128, 8
    $region17: #{transformer_forward.1} parent=1 // pred_fallthru
      _
    // Predicated region
    $region18: #{transformer_forward.1} parent=1 // pred_check
      _
    $region19: #{transformer_forward.1} parent=1 // pred_check_branch
      %2838 = sbr.rel (0) target = $region21
    $region20: #{transformer_forward.1} parent=1 // pred_region
      %2839 = dma.done [#allocation3], 256
    $region21: #{transformer_forward.1} parent=1 // pred_fallthru
      _
    %2840 = vsyncpa [#allocation3], 1

</llo_original>
